<compile_context>
chip_gen: v7x
topology: tpu7x:2x2x1
jax: 0.10.0
libtpu: 0.0.40
codegen_flags: <defaults>
</compile_context>

<pallas_src>
import jax
import jax.numpy as jnp
from jax.experimental import pallas as pl
from jax.experimental.pallas import tpu as pltpu

# ---- small synthetic config (BART-encoder-like) -----------------------------
B, S, D = 2, 8, 32          # batch, seq, hidden
H, HD = 4, 8                # heads, head_dim (H * HD == D)
F = 64                      # FFN inner dim
NLAYERS = 2
VOCAB = 100
MAXPOS = 64
POS_OFFSET = 2              # BartLearnedPositionalEmbedding offset
LN_EPS = 1e-5
N = B * S                   # flattened token count
BH = B * H                  # batched-head count (rows ordered h*B + b)
NEG = -1e9


# ----------------------------- fused Pallas kernel ----------------------------
def _layer_norm(v, g, b):
    """f32 layer norm over the last axis; v: (N, D), g/b: (1, D)."""
    mu = jnp.mean(v, axis=-1, keepdims=True)
    var = jnp.mean((v - mu) ** 2, axis=-1, keepdims=True)
    return (v - mu) * jax.lax.rsqrt(var + LN_EPS) * g + b


def fused_encoder_kernel(x_ref, mask_ref, addmask_ref, lne_ref,
                         wqkv_ref, bqkv_ref, wo_ref,
                         vecd_ref, w1_ref, b1_ref, w2_ref,
                         out_ref):
    """Embedding LN -> NLAYERS post-LN BART encoder layers -> masked mean pool.

    Packed weight layouts (leading-axis indexed with static ints):
      wqkv_ref: (L, D, 3D) bf16   columns = [q | k | v], each head-major (HD chunks)
      bqkv_ref: (L, 1, 3D) f32
      wo_ref  : (L, D, D)  bf16
      vecd_ref: (L*6, 1, D) f32   [bo, ln1g, ln1b, b2, ln2g, ln2b] per layer
      w1_ref  : (L, D, F) bf16, b1_ref: (L, 1, F) f32, w2_ref: (L, F, D) bf16
      lne_ref : (2, 1, D) f32     [emb LN gamma, beta]
      addmask_ref: (H*B, 1, S) f32 additive key mask (0 keep / -1e9 pad)
    """
    x = x_ref[...]                  # (N, D) f32, tok+pos embeddings (pre-flattened)
    mask = mask_ref[...]            # (B, S) f32, 1.0 = keep
    neg_mask = addmask_ref[...]     # (H*B, 1, S) f32, broadcast at the add

    # ---- embedding layer norm ----
    x = _layer_norm(x, lne_ref[0], lne_ref[1])

    for l in range(NLAYERS):        # static unroll (NLAYERS = 2)
        x_bf = x.astype(jnp.bfloat16)

        # ---- fused QKV projection: one (N,D)@(D,3D) MXU matmul ----
        qkv = jnp.dot(x_bf, wqkv_ref[l],
                      preferred_element_type=jnp.float32) + bqkv_ref[l]   # (N, 3D) f32

        # split heads -> (H*B, S, HD); row index = h*B + b (matches addmask packing)
        def heads(base):
            return jnp.concatenate(
                [qkv[:, base + h * HD: base + (h + 1) * HD].reshape(B, S, HD)
                 for h in range(H)], axis=0).astype(jnp.bfloat16)

        qh = heads(0)          # (HB, S, HD) bf16 (scale folded into weights)
        kh = heads(D)
        vh = heads(2 * D)

        # ---- all heads in ONE batched score / softmax / context pass ----
        sc = jnp.einsum('bqe,bke->bqk', qh, kh,
                        preferred_element_type=jnp.float32)               # (HB, S, S)
        sc = sc + neg_mask                                                # mask padded keys
        sc = sc - jnp.max(sc, axis=-1, keepdims=True)
        p = jnp.exp(sc)
        p = p * pl.reciprocal(jnp.sum(p, axis=-1, keepdims=True), approx=True)
        ctx = jnp.einsum('bqk,bke->bqe', p.astype(jnp.bfloat16), vh,
                         preferred_element_type=jnp.float32)              # (HB, S, HD)

        # ---- lane-concat head contexts -> (N, D); one K=D output projection ----
        ctx_cat = jnp.concatenate(
            [ctx[h * B:(h + 1) * B].reshape(N, HD) for h in range(H)],
            axis=1).astype(jnp.bfloat16)                                  # (N, D)
        attn = jnp.dot(ctx_cat, wo_ref[l],
                       preferred_element_type=jnp.float32)                # (N, D) f32

        bo = vecd_ref[l * 6 + 0]
        ln1g = vecd_ref[l * 6 + 1]
        ln1b = vecd_ref[l * 6 + 2]
        b2 = vecd_ref[l * 6 + 3]
        ln2g = vecd_ref[l * 6 + 4]
        ln2b = vecd_ref[l * 6 + 5]
        x = _layer_norm(x + attn + bo, ln1g, ln1b)

        # ---- feed-forward ----
        hdn = jnp.dot(x.astype(jnp.bfloat16), w1_ref[l],
                      preferred_element_type=jnp.float32) + b1_ref[l]
        # TODO(synk): HF BART/KoBART uses exact erf GELU; tanh approximation used
        # here to stay on guaranteed Mosaic lowerings (EUP tanh).
        hdn = jax.nn.gelu(hdn)
        hdn = jnp.dot(hdn.astype(jnp.bfloat16), w2_ref[l],
                      preferred_element_type=jnp.float32) + b2
        x = _layer_norm(x + hdn, ln2g, ln2b)

    # ---- masked mean pooling over the sequence axis (fused epilogue, f32) ----
    xb = x.reshape(B, S, D)
    num = jnp.sum(xb * mask[:, :, None], axis=1)                   # (B, D)
    den = jnp.maximum(jnp.sum(mask, axis=1, keepdims=True), 1e-9)  # (B, 1)
    out_ref[...] = num / den


# ----------------------------- wrapper ----------------------------------------
def _full_spec(shape):
    nd = len(shape)
    return pl.BlockSpec(shape, lambda i, _nd=nd: (0,) * _nd)


def _cost_estimate(args):
    per_layer = (2 * N * D * 3 * D            # fused qkv projection
                 + 2 * BH * S * S * HD * 2    # scores + context
                 + 2 * N * D * D              # output projection
                 + 2 * N * D * F              # fc1
                 + 2 * N * F * D)             # fc2
    flops = NLAYERS * per_layer + 10 * N * D
    transcendentals = NLAYERS * (BH * S * S + N * F) + (2 * NLAYERS + 1) * N
    bytes_accessed = sum(int(a.size) * a.dtype.itemsize for a in args) + B * D * 4
    return pl.CostEstimate(flops=int(flops),
                           transcendentals=int(transcendentals),
                           bytes_accessed=int(bytes_accessed))


def kobart_forward_pallas(x_flat, mask_f, addmask, packed):
    args = (x_flat, mask_f, addmask, packed["lne"], packed["wqkv"], packed["bqkv"],
            packed["wo"], packed["vecd"], packed["w1"], packed["b1"],
            packed["w2"])
    # Single grid step: whole (tiny) forward with activations + weights VMEM-
    # resident.  See TODO(synk) in the header for the production-size plan
    # (layer-streaming grid axis, 'parallel' axis for v7x, Buffered(1) weights).
    return pl.pallas_call(
        fused_encoder_kernel,
        out_shape=jax.ShapeDtypeStruct((B, D), jnp.float32),
        grid=(1,),
        in_specs=[_full_spec(a.shape) for a in args],
        out_specs=pl.BlockSpec((B, D), lambda i: (0, 0)),
        compiler_params=pltpu.CompilerParams(
            dimension_semantics=("arbitrary",),
            vmem_limit_bytes=32 * 1024 * 1024),
        cost_estimate=_cost_estimate(args),
    )(*args)


# ----------------------------- parameter init / packing -----------------------
def init_params(key):
    def nrm(k, shape):
        return (0.02 * jax.random.normal(k, shape)).astype(jnp.float32)

    keys = iter(jax.random.split(key, 2 + NLAYERS * 6))
    params = {
        "embed_tokens": nrm(next(keys), (VOCAB, D)),
        "embed_positions": nrm(next(keys), (MAXPOS, D)),
        "ln_emb_g": jnp.ones((D,), jnp.float32),
        "ln_emb_b": jnp.zeros((D,), jnp.float32),
        "layers": [],
    }
    for _ in range(NLAYERS):
        layer = {
            "wq": nrm(next(keys), (D, D)), "bq": jnp.zeros((D,), jnp.float32),
            "wk": nrm(next(keys), (D, D)), "bk": jnp.zeros((D,), jnp.float32),
            "wv": nrm(next(keys), (D, D)), "bv": jnp.zeros((D,), jnp.float32),
            "wo": nrm(next(keys), (D, D)), "bo": jnp.zeros((D,), jnp.float32),
            "ln1g": jnp.ones((D,), jnp.float32), "ln1b": jnp.zeros((D,), jnp.float32),
            "w1": nrm(next(keys), (D, F)), "b1": jnp.zeros((F,), jnp.float32),
            "w2": nrm(next(keys), (F, D)), "b2": jnp.zeros((D,), jnp.float32),
            "ln2g": jnp.ones((D,), jnp.float32), "ln2b": jnp.zeros((D,), jnp.float32),
        }
        params["layers"].append(layer)
    return params


def pack_params(params):
    """Stack per-layer weights into fused kernel tensors (done once).

    QKV weights/biases are fused along the output dim as [q | k | v]; the
    1/sqrt(HD) attention scale is folded into the q weights/bias; matmul
    weights are cast to bf16 (f32 accumulation in-kernel); biases/LN stay f32.
    """
    scale = 1.0 / (HD ** 0.5)
    wqkv, bqkv, wo, vecd, w1s, b1s, w2s = [], [], [], [], [], [], []
    for lp in params["layers"]:
        wqkv.append(jnp.concatenate([lp["wq"] * scale, lp["wk"], lp["wv"]],
                                    axis=1))                              # (D, 3D)
        bqkv.append(jnp.concatenate([lp["bq"] * scale, lp["bk"], lp["bv"]])[None, :])
        wo.append(lp["wo"])                                               # (D, D)
        vecd.append(jnp.stack([lp["bo"], lp["ln1g"], lp["ln1b"],
                               lp["b2"], lp["ln2g"], lp["ln2b"]])[:, None, :])
        w1s.append(lp["w1"])
        b1s.append(lp["b1"][None, :])
        w2s.append(lp["w2"])
    return {
        "lne": jnp.stack([params["ln_emb_g"], params["ln_emb_b"]])[:, None, :],
        "wqkv": jnp.stack(wqkv).astype(jnp.bfloat16),                     # (L, D, 3D)
        "bqkv": jnp.stack(bqkv),                                          # (L, 1, 3D)
        "wo": jnp.stack(wo).astype(jnp.bfloat16),                         # (L, D, D)
        "vecd": jnp.concatenate(vecd, axis=0),                            # (L*6, 1, D)
        "w1": jnp.stack(w1s).astype(jnp.bfloat16),                        # (L, D, F)
        "b1": jnp.stack(b1s),                                             # (L, 1, F)
        "w2": jnp.stack(w2s).astype(jnp.bfloat16),                        # (L, F, D)
    }


# ----------------------------- full forward ------------------------------------
@jax.jit
def kobart_encode_text(token_ids, attention_mask, embed_tokens, embed_positions,
                       packed):
    # TODO(synk): tokenizer + pretrained-checkpoint loading are outside kernel
    # scope; the embedding gathers stay in plain JAX (dynamic gather).
    tok = jnp.take(embed_tokens, token_ids, axis=0)                  # (B, S, D)
    pos = jnp.take(embed_positions,
                   jnp.arange(S, dtype=jnp.int32) + POS_OFFSET, axis=0)
    x_flat = (tok + pos[None, :, :]).reshape(N, D)                   # wrapper-side flatten
    mask_f = attention_mask.astype(jnp.float32)                      # (B, S)
    # additive key mask, head-stacked to (H*B, 1, S); row index = h*B + b
    addmask = jnp.tile(((1.0 - mask_f) * NEG)[:, None, :], (H, 1, 1))
    return kobart_forward_pallas(x_flat, mask_f, addmask, packed)    # (B, D)


if __name__ == "__main__":
    key = jax.random.PRNGKey(0)
    k_tok, k_par = jax.random.split(key)

    token_ids = jax.random.randint(k_tok, (B, S), 0, VOCAB, dtype=jnp.int32)
    # row 0: no padding; row 1: last 3 positions padded
    attention_mask = jnp.array(
        [[1, 1, 1, 1, 1, 1, 1, 1],
         [1, 1, 1, 1, 1, 0, 0, 0]], dtype=jnp.int32)

    params = init_params(k_par)
    packed = pack_params(params)

    out = kobart_encode_text(token_ids, attention_mask,
                             params["embed_tokens"], params["embed_positions"],
                             packed)
    out = jax.block_until_ready(out)
    assert out.shape == (B, D) and out.dtype == jnp.float32
    assert bool(jnp.all(jnp.isfinite(out)))
    print("KERNEL_OK")
</pallas_src>

<mosaic_0001>
module attributes {stable_mosaic.version = 11 : i64} {
  func.func @fused_encoder_kernel(%arg0: i32, %arg1: memref<16x32xf32, #tpu.memory_space<vmem>>, %arg2: memref<2x8xf32, #tpu.memory_space<vmem>>, %arg3: memref<8x1x8xf32, #tpu.memory_space<vmem>>, %arg4: memref<2x1x32xf32, #tpu.memory_space<vmem>>, %arg5: memref<2x32x96xbf16, #tpu.memory_space<vmem>>, %arg6: memref<2x1x96xf32, #tpu.memory_space<vmem>>, %arg7: memref<2x32x32xbf16, #tpu.memory_space<vmem>>, %arg8: memref<12x1x32xf32, #tpu.memory_space<vmem>>, %arg9: memref<2x32x64xbf16, #tpu.memory_space<vmem>>, %arg10: memref<2x1x64xf32, #tpu.memory_space<vmem>>, %arg11: memref<2x64x32xbf16, #tpu.memory_space<vmem>>, %arg12: memref<2x32xf32, #tpu.memory_space<vmem>>) attributes {dimension_semantics = [#tpu.dimension_semantics<arbitrary>], iteration_bounds = array<i64: 1>, scalar_prefetch = 0 : i64, scratch_operands = 0 : i64, tpu.core_type = #tpu.core_type<tc>, window_params = [{pipeline_mode = #tpu.pipeline_mode<synchronous>, transform_indices = @transform_0, window_bounds = array<i64: 16, 32>}, {pipeline_mode = #tpu.pipeline_mode<synchronous>, transform_indices = @transform_1, window_bounds = array<i64: 2, 8>}, {pipeline_mode = #tpu.pipeline_mode<synchronous>, transform_indices = @transform_2, window_bounds = array<i64: 8, 1, 8>}, {pipeline_mode = #tpu.pipeline_mode<synchronous>, transform_indices = @transform_3, window_bounds = array<i64: 2, 1, 32>}, {pipeline_mode = #tpu.pipeline_mode<synchronous>, transform_indices = @transform_4, window_bounds = array<i64: 2, 32, 96>}, {pipeline_mode = #tpu.pipeline_mode<synchronous>, transform_indices = @transform_5, window_bounds = array<i64: 2, 1, 96>}, {pipeline_mode = #tpu.pipeline_mode<synchronous>, transform_indices = @transform_6, window_bounds = array<i64: 2, 32, 32>}, {pipeline_mode = #tpu.pipeline_mode<synchronous>, transform_indices = @transform_7, window_bounds = array<i64: 12, 1, 32>}, {pipeline_mode = #tpu.pipeline_mode<synchronous>, transform_indices = @transform_8, window_bounds = array<i64: 2, 32, 64>}, {pipeline_mode = #tpu.pipeline_mode<synchronous>, transform_indices = @transform_9, window_bounds = array<i64: 2, 1, 64>}, {pipeline_mode = #tpu.pipeline_mode<synchronous>, transform_indices = @transform_10, window_bounds = array<i64: 2, 64, 32>}, {pipeline_mode = #tpu.pipeline_mode<synchronous>, transform_indices = @transform_11, window_bounds = array<i64: 2, 32>}]} {
    %c0 = arith.constant 0 : index
    %c0_0 = arith.constant 0 : index
    %0 = vector.load %arg1[%c0, %c0_0] : memref<16x32xf32, #tpu.memory_space<vmem>>, vector<16x32xf32>
    %c0_1 = arith.constant 0 : index
    %c0_2 = arith.constant 0 : index
    %1 = vector.load %arg2[%c0_1, %c0_2] : memref<2x8xf32, #tpu.memory_space<vmem>>, vector<2x8xf32>
    %c0_3 = arith.constant 0 : index
    %c0_4 = arith.constant 0 : index
    %c0_5 = arith.constant 0 : index
    %2 = vector.load %arg3[%c0_3, %c0_4, %c0_5] : memref<8x1x8xf32, #tpu.memory_space<vmem>>, vector<8x1x8xf32>
    %c0_6 = arith.constant 0 : index
    %c0_7 = arith.constant 0 : index
    %c0_8 = arith.constant 0 : index
    %3 = vector.load %arg4[%c0_6, %c0_7, %c0_8] : memref<2x1x32xf32, #tpu.memory_space<vmem>>, vector<1x1x32xf32>
    %4 = vector.shape_cast %3 : vector<1x1x32xf32> to vector<1x32xf32>
    %c1 = arith.constant 1 : index
    %c0_9 = arith.constant 0 : index
    %c0_10 = arith.constant 0 : index
    %5 = vector.load %arg4[%c1, %c0_9, %c0_10] : memref<2x1x32xf32, #tpu.memory_space<vmem>>, vector<1x1x32xf32>
    %6 = vector.shape_cast %5 : vector<1x1x32xf32> to vector<1x32xf32>
    %cst = arith.constant dense<0.000000e+00> : vector<16xf32>
    %7 = vector.multi_reduction <add>, %0, %cst [1] : vector<16x32xf32> to vector<16xf32>
    %8 = vector.shape_cast %7 : vector<16xf32> to vector<16x1xf32>
    %cst_11 = arith.constant 3.200000e+01 : f32
    %9 = vector.broadcast %cst_11 : f32 to vector<16x1xf32>
    %10 = arith.divf %8, %9 : vector<16x1xf32>
    %11 = vector.broadcast %10 : vector<16x1xf32> to vector<16x32xf32>
    %12 = arith.subf %0, %11 : vector<16x32xf32>
    %13 = arith.mulf %12, %12 : vector<16x32xf32>
    %cst_12 = arith.constant dense<0.000000e+00> : vector<16xf32>
    %14 = vector.multi_reduction <add>, %13, %cst_12 [1] : vector<16x32xf32> to vector<16xf32>
    %15 = vector.shape_cast %14 : vector<16xf32> to vector<16x1xf32>
    %cst_13 = arith.constant 3.200000e+01 : f32
    %16 = vector.broadcast %cst_13 : f32 to vector<16x1xf32>
    %17 = arith.divf %15, %16 : vector<16x1xf32>
    %18 = vector.broadcast %10 : vector<16x1xf32> to vector<16x32xf32>
    %19 = arith.subf %0, %18 : vector<16x32xf32>
    %cst_14 = arith.constant 9.99999974E-6 : f32
    %20 = vector.broadcast %cst_14 : f32 to vector<16x1xf32>
    %21 = arith.addf %17, %20 : vector<16x1xf32>
    %22 = math.rsqrt %21 : vector<16x1xf32>
    %23 = vector.broadcast %22 : vector<16x1xf32> to vector<16x32xf32>
    %24 = arith.mulf %19, %23 : vector<16x32xf32>
    %25 = vector.broadcast %4 : vector<1x32xf32> to vector<16x32xf32>
    %26 = arith.mulf %24, %25 : vector<16x32xf32>
    %27 = vector.broadcast %6 : vector<1x32xf32> to vector<16x32xf32>
    %28 = arith.addf %26, %27 : vector<16x32xf32>
    %29 = arith.truncf %28 : vector<16x32xf32> to vector<16x32xbf16>
    %c0_15 = arith.constant 0 : index
    %c0_16 = arith.constant 0 : index
    %c0_17 = arith.constant 0 : index
    %30 = vector.load %arg5[%c0_15, %c0_16, %c0_17] : memref<2x32x96xbf16, #tpu.memory_space<vmem>>, vector<1x32x96xbf16>
    %31 = vector.shape_cast %30 : vector<1x32x96xbf16> to vector<32x96xbf16>
    %cst_18 = arith.constant dense<0.000000e+00> : vector<16x96xf32>
    %32 = tpu.matmul %29, %31, %cst_18 {dimension_numbers = #tpu.dot_dimension_numbers<[1], [0], [0], [1], [0, 0, 1, 1], [], []>} : vector<16x32xbf16>, vector<32x96xbf16>, vector<16x96xf32> -> vector<16x96xf32>
    %c0_19 = arith.constant 0 : index
    %c0_20 = arith.constant 0 : index
    %c0_21 = arith.constant 0 : index
    %33 = vector.load %arg6[%c0_19, %c0_20, %c0_21] : memref<2x1x96xf32, #tpu.memory_space<vmem>>, vector<1x1x96xf32>
    %34 = vector.shape_cast %33 : vector<1x1x96xf32> to vector<1x96xf32>
    %35 = vector.broadcast %34 : vector<1x96xf32> to vector<16x96xf32>
    %36 = arith.addf %32, %35 : vector<16x96xf32>
    %37 = vector.extract_strided_slice %36 {offsets = [0, 0], sizes = [16, 8], strides = [1, 1]} : vector<16x96xf32> to vector<16x8xf32>
    %38 = vector.shape_cast %37 : vector<16x8xf32> to vector<2x8x8xf32>
    %39 = vector.extract_strided_slice %36 {offsets = [0, 8], sizes = [16, 8], strides = [1, 1]} : vector<16x96xf32> to vector<16x8xf32>
    %40 = vector.shape_cast %39 : vector<16x8xf32> to vector<2x8x8xf32>
    %41 = vector.extract_strided_slice %36 {offsets = [0, 16], sizes = [16, 8], strides = [1, 1]} : vector<16x96xf32> to vector<16x8xf32>
    %42 = vector.shape_cast %41 : vector<16x8xf32> to vector<2x8x8xf32>
    %43 = vector.extract_strided_slice %36 {offsets = [0, 24], sizes = [16, 8], strides = [1, 1]} : vector<16x96xf32> to vector<16x8xf32>
    %44 = vector.shape_cast %43 : vector<16x8xf32> to vector<2x8x8xf32>
    %45 = tpu.concatenate %38, %40, %42, %44 in 0 : vector<2x8x8xf32>, vector<2x8x8xf32>, vector<2x8x8xf32>, vector<2x8x8xf32> -> vector<8x8x8xf32>
    %46 = arith.truncf %45 : vector<8x8x8xf32> to vector<8x8x8xbf16>
    %47 = vector.extract_strided_slice %36 {offsets = [0, 32], sizes = [16, 8], strides = [1, 1]} : vector<16x96xf32> to vector<16x8xf32>
    %48 = vector.shape_cast %47 : vector<16x8xf32> to vector<2x8x8xf32>
    %49 = vector.extract_strided_slice %36 {offsets = [0, 40], sizes = [16, 8], strides = [1, 1]} : vector<16x96xf32> to vector<16x8xf32>
    %50 = vector.shape_cast %49 : vector<16x8xf32> to vector<2x8x8xf32>
    %51 = vector.extract_strided_slice %36 {offsets = [0, 48], sizes = [16, 8], strides = [1, 1]} : vector<16x96xf32> to vector<16x8xf32>
    %52 = vector.shape_cast %51 : vector<16x8xf32> to vector<2x8x8xf32>
    %53 = vector.extract_strided_slice %36 {offsets = [0, 56], sizes = [16, 8], strides = [1, 1]} : vector<16x96xf32> to vector<16x8xf32>
    %54 = vector.shape_cast %53 : vector<16x8xf32> to vector<2x8x8xf32>
    %55 = tpu.concatenate %48, %50, %52, %54 in 0 : vector<2x8x8xf32>, vector<2x8x8xf32>, vector<2x8x8xf32>, vector<2x8x8xf32> -> vector<8x8x8xf32>
    %56 = arith.truncf %55 : vector<8x8x8xf32> to vector<8x8x8xbf16>
    %57 = vector.extract_strided_slice %36 {offsets = [0, 64], sizes = [16, 8], strides = [1, 1]} : vector<16x96xf32> to vector<16x8xf32>
    %58 = vector.shape_cast %57 : vector<16x8xf32> to vector<2x8x8xf32>
    %59 = vector.extract_strided_slice %36 {offsets = [0, 72], sizes = [16, 8], strides = [1, 1]} : vector<16x96xf32> to vector<16x8xf32>
    %60 = vector.shape_cast %59 : vector<16x8xf32> to vector<2x8x8xf32>
    %61 = vector.extract_strided_slice %36 {offsets = [0, 80], sizes = [16, 8], strides = [1, 1]} : vector<16x96xf32> to vector<16x8xf32>
    %62 = vector.shape_cast %61 : vector<16x8xf32> to vector<2x8x8xf32>
    %63 = vector.extract_strided_slice %36 {offsets = [0, 88], sizes = [16, 8], strides = [1, 1]} : vector<16x96xf32> to vector<16x8xf32>
    %64 = vector.shape_cast %63 : vector<16x8xf32> to vector<2x8x8xf32>
    %65 = tpu.concatenate %58, %60, %62, %64 in 0 : vector<2x8x8xf32>, vector<2x8x8xf32>, vector<2x8x8xf32>, vector<2x8x8xf32> -> vector<8x8x8xf32>
    %66 = arith.truncf %65 : vector<8x8x8xf32> to vector<8x8x8xbf16>
    "tpu.trace_start"() <{level = 10 : i32, message = "bqe,bke->bqk"}> : () -> ()
    %cst_22 = arith.constant dense<0.000000e+00> : vector<8x8x8xf32>
    %67 = tpu.matmul %46, %56, %cst_22 {dimension_numbers = #tpu.dot_dimension_numbers<[2], [2], [1], [1], [0, 0, 0, 1, 1, 1], [0], [0]>} : vector<8x8x8xbf16>, vector<8x8x8xbf16>, vector<8x8x8xf32> -> vector<8x8x8xf32>
    "tpu.trace_stop"() : () -> ()
    %68 = vector.broadcast %2 : vector<8x1x8xf32> to vector<8x8x8xf32>
    %69 = arith.addf %67, %68 : vector<8x8x8xf32>
    %cst_23 = arith.constant dense<0xFF800000> : vector<8x8xf32>
    %70 = vector.multi_reduction <maximumf>, %69, %cst_23 [2] : vector<8x8x8xf32> to vector<8x8xf32>
    %71 = vector.shape_cast %70 : vector<8x8xf32> to vector<8x8x1xf32>
    %72 = vector.broadcast %71 : vector<8x8x1xf32> to vector<8x8x8xf32>
    %73 = arith.subf %69, %72 : vector<8x8x8xf32>
    %74 = math.exp %73 : vector<8x8x8xf32>
    %cst_24 = arith.constant dense<0.000000e+00> : vector<8x8xf32>
    %75 = vector.multi_reduction <add>, %74, %cst_24 [2] : vector<8x8x8xf32> to vector<8x8xf32>
    %76 = vector.shape_cast %75 : vector<8x8xf32> to vector<8x8x1xf32>
    %77 = tpu.reciprocal %76 {approx = true} : vector<8x8x1xf32> -> vector<8x8x1xf32>
    %78 = vector.broadcast %77 : vector<8x8x1xf32> to vector<8x8x8xf32>
    %79 = arith.mulf %74, %78 : vector<8x8x8xf32>
    %80 = arith.truncf %79 : vector<8x8x8xf32> to vector<8x8x8xbf16>
    "tpu.trace_start"() <{level = 10 : i32, message = "bqk,bke->bqe"}> : () -> ()
    %cst_25 = arith.constant dense<0.000000e+00> : vector<8x8x8xf32>
    %81 = tpu.matmul %80, %66, %cst_25 {dimension_numbers = #tpu.dot_dimension_numbers<[2], [1], [1], [2], [0, 0, 0, 1, 1, 2], [0], [0]>} : vector<8x8x8xbf16>, vector<8x8x8xbf16>, vector<8x8x8xf32> -> vector<8x8x8xf32>
    "tpu.trace_stop"() : () -> ()
    %82 = vector.extract_strided_slice %81 {offsets = [0, 0, 0], sizes = [2, 8, 8], strides = [1, 1, 1]} : vector<8x8x8xf32> to vector<2x8x8xf32>
    %83 = vector.shape_cast %82 : vector<2x8x8xf32> to vector<16x8xf32>
    %84 = vector.extract_strided_slice %81 {offsets = [2, 0, 0], sizes = [2, 8, 8], strides = [1, 1, 1]} : vector<8x8x8xf32> to vector<2x8x8xf32>
    %85 = vector.shape_cast %84 : vector<2x8x8xf32> to vector<16x8xf32>
    %86 = vector.extract_strided_slice %81 {offsets = [4, 0, 0], sizes = [2, 8, 8], strides = [1, 1, 1]} : vector<8x8x8xf32> to vector<2x8x8xf32>
    %87 = vector.shape_cast %86 : vector<2x8x8xf32> to vector<16x8xf32>
    %88 = vector.extract_strided_slice %81 {offsets = [6, 0, 0], sizes = [2, 8, 8], strides = [1, 1, 1]} : vector<8x8x8xf32> to vector<2x8x8xf32>
    %89 = vector.shape_cast %88 : vector<2x8x8xf32> to vector<16x8xf32>
    %90 = tpu.concatenate %83, %85, %87, %89 in 1 : vector<16x8xf32>, vector<16x8xf32>, vector<16x8xf32>, vector<16x8xf32> -> vector<16x32xf32>
    %91 = arith.truncf %90 : vector<16x32xf32> to vector<16x32xbf16>
    %c0_26 = arith.constant 0 : index
    %c0_27 = arith.constant 0 : index
    %c0_28 = arith.constant 0 : index
    %92 = vector.load %arg7[%c0_26, %c0_27, %c0_28] : memref<2x32x32xbf16, #tpu.memory_space<vmem>>, vector<1x32x32xbf16>
    %93 = vector.shape_cast %92 : vector<1x32x32xbf16> to vector<32x32xbf16>
    %cst_29 = arith.constant dense<0.000000e+00> : vector<16x32xf32>
    %94 = tpu.matmul %91, %93, %cst_29 {dimension_numbers = #tpu.dot_dimension_numbers<[1], [0], [0], [1], [0, 0, 1, 1], [], []>} : vector<16x32xbf16>, vector<32x32xbf16>, vector<16x32xf32> -> vector<16x32xf32>
    %c0_30 = arith.constant 0 : index
    %c0_31 = arith.constant 0 : index
    %c0_32 = arith.constant 0 : index
    %95 = vector.load %arg8[%c0_30, %c0_31, %c0_32] : memref<12x1x32xf32, #tpu.memory_space<vmem>>, vector<1x1x32xf32>
    %96 = vector.shape_cast %95 : vector<1x1x32xf32> to vector<1x32xf32>
    %c1_33 = arith.constant 1 : index
    %c0_34 = arith.constant 0 : index
    %c0_35 = arith.constant 0 : index
    %97 = vector.load %arg8[%c1_33, %c0_34, %c0_35] : memref<12x1x32xf32, #tpu.memory_space<vmem>>, vector<1x1x32xf32>
    %98 = vector.shape_cast %97 : vector<1x1x32xf32> to vector<1x32xf32>
    %c2 = arith.constant 2 : index
    %c0_36 = arith.constant 0 : index
    %c0_37 = arith.constant 0 : index
    %99 = vector.load %arg8[%c2, %c0_36, %c0_37] : memref<12x1x32xf32, #tpu.memory_space<vmem>>, vector<1x1x32xf32>
    %100 = vector.shape_cast %99 : vector<1x1x32xf32> to vector<1x32xf32>
    %c3 = arith.constant 3 : index
    %c0_38 = arith.constant 0 : index
    %c0_39 = arith.constant 0 : index
    %101 = vector.load %arg8[%c3, %c0_38, %c0_39] : memref<12x1x32xf32, #tpu.memory_space<vmem>>, vector<1x1x32xf32>
    %102 = vector.shape_cast %101 : vector<1x1x32xf32> to vector<1x32xf32>
    %c4 = arith.constant 4 : index
    %c0_40 = arith.constant 0 : index
    %c0_41 = arith.constant 0 : index
    %103 = vector.load %arg8[%c4, %c0_40, %c0_41] : memref<12x1x32xf32, #tpu.memory_space<vmem>>, vector<1x1x32xf32>
    %104 = vector.shape_cast %103 : vector<1x1x32xf32> to vector<1x32xf32>
    %c5 = arith.constant 5 : index
    %c0_42 = arith.constant 0 : index
    %c0_43 = arith.constant 0 : index
    %105 = vector.load %arg8[%c5, %c0_42, %c0_43] : memref<12x1x32xf32, #tpu.memory_space<vmem>>, vector<1x1x32xf32>
    %106 = vector.shape_cast %105 : vector<1x1x32xf32> to vector<1x32xf32>
    %107 = arith.addf %28, %94 : vector<16x32xf32>
    %108 = vector.broadcast %96 : vector<1x32xf32> to vector<16x32xf32>
    %109 = arith.addf %107, %108 : vector<16x32xf32>
    %cst_44 = arith.constant dense<0.000000e+00> : vector<16xf32>
    %110 = vector.multi_reduction <add>, %109, %cst_44 [1] : vector<16x32xf32> to vector<16xf32>
    %111 = vector.shape_cast %110 : vector<16xf32> to vector<16x1xf32>
    %cst_45 = arith.constant 3.200000e+01 : f32
    %112 = vector.broadcast %cst_45 : f32 to vector<16x1xf32>
    %113 = arith.divf %111, %112 : vector<16x1xf32>
    %114 = vector.broadcast %113 : vector<16x1xf32> to vector<16x32xf32>
    %115 = arith.subf %109, %114 : vector<16x32xf32>
    %116 = arith.mulf %115, %115 : vector<16x32xf32>
    %cst_46 = arith.constant dense<0.000000e+00> : vector<16xf32>
    %117 = vector.multi_reduction <add>, %116, %cst_46 [1] : vector<16x32xf32> to vector<16xf32>
    %118 = vector.shape_cast %117 : vector<16xf32> to vector<16x1xf32>
    %cst_47 = arith.constant 3.200000e+01 : f32
    %119 = vector.broadcast %cst_47 : f32 to vector<16x1xf32>
    %120 = arith.divf %118, %119 : vector<16x1xf32>
    %121 = vector.broadcast %113 : vector<16x1xf32> to vector<16x32xf32>
    %122 = arith.subf %109, %121 : vector<16x32xf32>
    %cst_48 = arith.constant 9.99999974E-6 : f32
    %123 = vector.broadcast %cst_48 : f32 to vector<16x1xf32>
    %124 = arith.addf %120, %123 : vector<16x1xf32>
    %125 = math.rsqrt %124 : vector<16x1xf32>
    %126 = vector.broadcast %125 : vector<16x1xf32> to vector<16x32xf32>
    %127 = arith.mulf %122, %126 : vector<16x32xf32>
    %128 = vector.broadcast %98 : vector<1x32xf32> to vector<16x32xf32>
    %129 = arith.mulf %127, %128 : vector<16x32xf32>
    %130 = vector.broadcast %100 : vector<1x32xf32> to vector<16x32xf32>
    %131 = arith.addf %129, %130 : vector<16x32xf32>
    %132 = arith.truncf %131 : vector<16x32xf32> to vector<16x32xbf16>
    %c0_49 = arith.constant 0 : index
    %c0_50 = arith.constant 0 : index
    %c0_51 = arith.constant 0 : index
    %133 = vector.load %arg9[%c0_49, %c0_50, %c0_51] : memref<2x32x64xbf16, #tpu.memory_space<vmem>>, vector<1x32x64xbf16>
    %134 = vector.shape_cast %133 : vector<1x32x64xbf16> to vector<32x64xbf16>
    %cst_52 = arith.constant dense<0.000000e+00> : vector<16x64xf32>
    %135 = tpu.matmul %132, %134, %cst_52 {dimension_numbers = #tpu.dot_dimension_numbers<[1], [0], [0], [1], [0, 0, 1, 1], [], []>} : vector<16x32xbf16>, vector<32x64xbf16>, vector<16x64xf32> -> vector<16x64xf32>
    %c0_53 = arith.constant 0 : index
    %c0_54 = arith.constant 0 : index
    %c0_55 = arith.constant 0 : index
    %136 = vector.load %arg10[%c0_53, %c0_54, %c0_55] : memref<2x1x64xf32, #tpu.memory_space<vmem>>, vector<1x1x64xf32>
    %137 = vector.shape_cast %136 : vector<1x1x64xf32> to vector<1x64xf32>
    %138 = vector.broadcast %137 : vector<1x64xf32> to vector<16x64xf32>
    %139 = arith.addf %135, %138 : vector<16x64xf32>
    %140 = arith.mulf %139, %139 : vector<16x64xf32>
    %141 = arith.mulf %139, %140 : vector<16x64xf32>
    %cst_56 = arith.constant 4.471500e-02 : f32
    %142 = vector.broadcast %cst_56 : f32 to vector<16x64xf32>
    %143 = arith.mulf %142, %141 : vector<16x64xf32>
    %144 = arith.addf %139, %143 : vector<16x64xf32>
    %cst_57 = arith.constant 0.797884583 : f32
    %145 = vector.broadcast %cst_57 : f32 to vector<16x64xf32>
    %146 = arith.mulf %145, %144 : vector<16x64xf32>
    %147 = math.tanh %146 : vector<16x64xf32>
    %cst_58 = arith.constant 1.000000e+00 : f32
    %148 = vector.broadcast %cst_58 : f32 to vector<16x64xf32>
    %149 = arith.addf %148, %147 : vector<16x64xf32>
    %cst_59 = arith.constant 5.000000e-01 : f32
    %150 = vector.broadcast %cst_59 : f32 to vector<16x64xf32>
    %151 = arith.mulf %150, %149 : vector<16x64xf32>
    %152 = arith.mulf %139, %151 : vector<16x64xf32>
    %153 = arith.truncf %152 : vector<16x64xf32> to vector<16x64xbf16>
    %c0_60 = arith.constant 0 : index
    %c0_61 = arith.constant 0 : index
    %c0_62 = arith.constant 0 : index
    %154 = vector.load %arg11[%c0_60, %c0_61, %c0_62] : memref<2x64x32xbf16, #tpu.memory_space<vmem>>, vector<1x64x32xbf16>
    %155 = vector.shape_cast %154 : vector<1x64x32xbf16> to vector<64x32xbf16>
    %cst_63 = arith.constant dense<0.000000e+00> : vector<16x32xf32>
    %156 = tpu.matmul %153, %155, %cst_63 {dimension_numbers = #tpu.dot_dimension_numbers<[1], [0], [0], [1], [0, 0, 1, 1], [], []>} : vector<16x64xbf16>, vector<64x32xbf16>, vector<16x32xf32> -> vector<16x32xf32>
    %157 = vector.broadcast %102 : vector<1x32xf32> to vector<16x32xf32>
    %158 = arith.addf %156, %157 : vector<16x32xf32>
    %159 = arith.addf %131, %158 : vector<16x32xf32>
    %cst_64 = arith.constant dense<0.000000e+00> : vector<16xf32>
    %160 = vector.multi_reduction <add>, %159, %cst_64 [1] : vector<16x32xf32> to vector<16xf32>
    %161 = vector.shape_cast %160 : vector<16xf32> to vector<16x1xf32>
    %cst_65 = arith.constant 3.200000e+01 : f32
    %162 = vector.broadcast %cst_65 : f32 to vector<16x1xf32>
    %163 = arith.divf %161, %162 : vector<16x1xf32>
    %164 = vector.broadcast %163 : vector<16x1xf32> to vector<16x32xf32>
    %165 = arith.subf %159, %164 : vector<16x32xf32>
    %166 = arith.mulf %165, %165 : vector<16x32xf32>
    %cst_66 = arith.constant dense<0.000000e+00> : vector<16xf32>
    %167 = vector.multi_reduction <add>, %166, %cst_66 [1] : vector<16x32xf32> to vector<16xf32>
    %168 = vector.shape_cast %167 : vector<16xf32> to vector<16x1xf32>
    %cst_67 = arith.constant 3.200000e+01 : f32
    %169 = vector.broadcast %cst_67 : f32 to vector<16x1xf32>
    %170 = arith.divf %168, %169 : vector<16x1xf32>
    %171 = vector.broadcast %163 : vector<16x1xf32> to vector<16x32xf32>
    %172 = arith.subf %159, %171 : vector<16x32xf32>
    %cst_68 = arith.constant 9.99999974E-6 : f32
    %173 = vector.broadcast %cst_68 : f32 to vector<16x1xf32>
    %174 = arith.addf %170, %173 : vector<16x1xf32>
    %175 = math.rsqrt %174 : vector<16x1xf32>
    %176 = vector.broadcast %175 : vector<16x1xf32> to vector<16x32xf32>
    %177 = arith.mulf %172, %176 : vector<16x32xf32>
    %178 = vector.broadcast %104 : vector<1x32xf32> to vector<16x32xf32>
    %179 = arith.mulf %177, %178 : vector<16x32xf32>
    %180 = vector.broadcast %106 : vector<1x32xf32> to vector<16x32xf32>
    %181 = arith.addf %179, %180 : vector<16x32xf32>
    %182 = arith.truncf %181 : vector<16x32xf32> to vector<16x32xbf16>
    %c1_69 = arith.constant 1 : index
    %c0_70 = arith.constant 0 : index
    %c0_71 = arith.constant 0 : index
    %183 = vector.load %arg5[%c1_69, %c0_70, %c0_71] : memref<2x32x96xbf16, #tpu.memory_space<vmem>>, vector<1x32x96xbf16>
    %184 = vector.shape_cast %183 : vector<1x32x96xbf16> to vector<32x96xbf16>
    %cst_72 = arith.constant dense<0.000000e+00> : vector<16x96xf32>
    %185 = tpu.matmul %182, %184, %cst_72 {dimension_numbers = #tpu.dot_dimension_numbers<[1], [0], [0], [1], [0, 0, 1, 1], [], []>} : vector<16x32xbf16>, vector<32x96xbf16>, vector<16x96xf32> -> vector<16x96xf32>
    %c1_73 = arith.constant 1 : index
    %c0_74 = arith.constant 0 : index
    %c0_75 = arith.constant 0 : index
    %186 = vector.load %arg6[%c1_73, %c0_74, %c0_75] : memref<2x1x96xf32, #tpu.memory_space<vmem>>, vector<1x1x96xf32>
    %187 = vector.shape_cast %186 : vector<1x1x96xf32> to vector<1x96xf32>
    %188 = vector.broadcast %187 : vector<1x96xf32> to vector<16x96xf32>
    %189 = arith.addf %185, %188 : vector<16x96xf32>
    %190 = vector.extract_strided_slice %189 {offsets = [0, 0], sizes = [16, 8], strides = [1, 1]} : vector<16x96xf32> to vector<16x8xf32>
    %191 = vector.shape_cast %190 : vector<16x8xf32> to vector<2x8x8xf32>
    %192 = vector.extract_strided_slice %189 {offsets = [0, 8], sizes = [16, 8], strides = [1, 1]} : vector<16x96xf32> to vector<16x8xf32>
    %193 = vector.shape_cast %192 : vector<16x8xf32> to vector<2x8x8xf32>
    %194 = vector.extract_strided_slice %189 {offsets = [0, 16], sizes = [16, 8], strides = [1, 1]} : vector<16x96xf32> to vector<16x8xf32>
    %195 = vector.shape_cast %194 : vector<16x8xf32> to vector<2x8x8xf32>
    %196 = vector.extract_strided_slice %189 {offsets = [0, 24], sizes = [16, 8], strides = [1, 1]} : vector<16x96xf32> to vector<16x8xf32>
    %197 = vector.shape_cast %196 : vector<16x8xf32> to vector<2x8x8xf32>
    %198 = tpu.concatenate %191, %193, %195, %197 in 0 : vector<2x8x8xf32>, vector<2x8x8xf32>, vector<2x8x8xf32>, vector<2x8x8xf32> -> vector<8x8x8xf32>
    %199 = arith.truncf %198 : vector<8x8x8xf32> to vector<8x8x8xbf16>
    %200 = vector.extract_strided_slice %189 {offsets = [0, 32], sizes = [16, 8], strides = [1, 1]} : vector<16x96xf32> to vector<16x8xf32>
    %201 = vector.shape_cast %200 : vector<16x8xf32> to vector<2x8x8xf32>
    %202 = vector.extract_strided_slice %189 {offsets = [0, 40], sizes = [16, 8], strides = [1, 1]} : vector<16x96xf32> to vector<16x8xf32>
    %203 = vector.shape_cast %202 : vector<16x8xf32> to vector<2x8x8xf32>
    %204 = vector.extract_strided_slice %189 {offsets = [0, 48], sizes = [16, 8], strides = [1, 1]} : vector<16x96xf32> to vector<16x8xf32>
    %205 = vector.shape_cast %204 : vector<16x8xf32> to vector<2x8x8xf32>
    %206 = vector.extract_strided_slice %189 {offsets = [0, 56], sizes = [16, 8], strides = [1, 1]} : vector<16x96xf32> to vector<16x8xf32>
    %207 = vector.shape_cast %206 : vector<16x8xf32> to vector<2x8x8xf32>
    %208 = tpu.concatenate %201, %203, %205, %207 in 0 : vector<2x8x8xf32>, vector<2x8x8xf32>, vector<2x8x8xf32>, vector<2x8x8xf32> -> vector<8x8x8xf32>
    %209 = arith.truncf %208 : vector<8x8x8xf32> to vector<8x8x8xbf16>
    %210 = vector.extract_strided_slice %189 {offsets = [0, 64], sizes = [16, 8], strides = [1, 1]} : vector<16x96xf32> to vector<16x8xf32>
    %211 = vector.shape_cast %210 : vector<16x8xf32> to vector<2x8x8xf32>
    %212 = vector.extract_strided_slice %189 {offsets = [0, 72], sizes = [16, 8], strides = [1, 1]} : vector<16x96xf32> to vector<16x8xf32>
    %213 = vector.shape_cast %212 : vector<16x8xf32> to vector<2x8x8xf32>
    %214 = vector.extract_strided_slice %189 {offsets = [0, 80], sizes = [16, 8], strides = [1, 1]} : vector<16x96xf32> to vector<16x8xf32>
    %215 = vector.shape_cast %214 : vector<16x8xf32> to vector<2x8x8xf32>
    %216 = vector.extract_strided_slice %189 {offsets = [0, 88], sizes = [16, 8], strides = [1, 1]} : vector<16x96xf32> to vector<16x8xf32>
    %217 = vector.shape_cast %216 : vector<16x8xf32> to vector<2x8x8xf32>
    %218 = tpu.concatenate %211, %213, %215, %217 in 0 : vector<2x8x8xf32>, vector<2x8x8xf32>, vector<2x8x8xf32>, vector<2x8x8xf32> -> vector<8x8x8xf32>
    %219 = arith.truncf %218 : vector<8x8x8xf32> to vector<8x8x8xbf16>
    "tpu.trace_start"() <{level = 10 : i32, message = "bqe,bke->bqk"}> : () -> ()
    %cst_76 = arith.constant dense<0.000000e+00> : vector<8x8x8xf32>
    %220 = tpu.matmul %199, %209, %cst_76 {dimension_numbers = #tpu.dot_dimension_numbers<[2], [2], [1], [1], [0, 0, 0, 1, 1, 1], [0], [0]>} : vector<8x8x8xbf16>, vector<8x8x8xbf16>, vector<8x8x8xf32> -> vector<8x8x8xf32>
    "tpu.trace_stop"() : () -> ()
    %221 = vector.broadcast %2 : vector<8x1x8xf32> to vector<8x8x8xf32>
    %222 = arith.addf %220, %221 : vector<8x8x8xf32>
    %cst_77 = arith.constant dense<0xFF800000> : vector<8x8xf32>
    %223 = vector.multi_reduction <maximumf>, %222, %cst_77 [2] : vector<8x8x8xf32> to vector<8x8xf32>
    %224 = vector.shape_cast %223 : vector<8x8xf32> to vector<8x8x1xf32>
    %225 = vector.broadcast %224 : vector<8x8x1xf32> to vector<8x8x8xf32>
    %226 = arith.subf %222, %225 : vector<8x8x8xf32>
    %227 = math.exp %226 : vector<8x8x8xf32>
    %cst_78 = arith.constant dense<0.000000e+00> : vector<8x8xf32>
    %228 = vector.multi_reduction <add>, %227, %cst_78 [2] : vector<8x8x8xf32> to vector<8x8xf32>
    %229 = vector.shape_cast %228 : vector<8x8xf32> to vector<8x8x1xf32>
    %230 = tpu.reciprocal %229 {approx = true} : vector<8x8x1xf32> -> vector<8x8x1xf32>
    %231 = vector.broadcast %230 : vector<8x8x1xf32> to vector<8x8x8xf32>
    %232 = arith.mulf %227, %231 : vector<8x8x8xf32>
    %233 = arith.truncf %232 : vector<8x8x8xf32> to vector<8x8x8xbf16>
    "tpu.trace_start"() <{level = 10 : i32, message = "bqk,bke->bqe"}> : () -> ()
    %cst_79 = arith.constant dense<0.000000e+00> : vector<8x8x8xf32>
    %234 = tpu.matmul %233, %219, %cst_79 {dimension_numbers = #tpu.dot_dimension_numbers<[2], [1], [1], [2], [0, 0, 0, 1, 1, 2], [0], [0]>} : vector<8x8x8xbf16>, vector<8x8x8xbf16>, vector<8x8x8xf32> -> vector<8x8x8xf32>
    "tpu.trace_stop"() : () -> ()
    %235 = vector.extract_strided_slice %234 {offsets = [0, 0, 0], sizes = [2, 8, 8], strides = [1, 1, 1]} : vector<8x8x8xf32> to vector<2x8x8xf32>
    %236 = vector.shape_cast %235 : vector<2x8x8xf32> to vector<16x8xf32>
    %237 = vector.extract_strided_slice %234 {offsets = [2, 0, 0], sizes = [2, 8, 8], strides = [1, 1, 1]} : vector<8x8x8xf32> to vector<2x8x8xf32>
    %238 = vector.shape_cast %237 : vector<2x8x8xf32> to vector<16x8xf32>
    %239 = vector.extract_strided_slice %234 {offsets = [4, 0, 0], sizes = [2, 8, 8], strides = [1, 1, 1]} : vector<8x8x8xf32> to vector<2x8x8xf32>
    %240 = vector.shape_cast %239 : vector<2x8x8xf32> to vector<16x8xf32>
    %241 = vector.extract_strided_slice %234 {offsets = [6, 0, 0], sizes = [2, 8, 8], strides = [1, 1, 1]} : vector<8x8x8xf32> to vector<2x8x8xf32>
    %242 = vector.shape_cast %241 : vector<2x8x8xf32> to vector<16x8xf32>
    %243 = tpu.concatenate %236, %238, %240, %242 in 1 : vector<16x8xf32>, vector<16x8xf32>, vector<16x8xf32>, vector<16x8xf32> -> vector<16x32xf32>
    %244 = arith.truncf %243 : vector<16x32xf32> to vector<16x32xbf16>
    %c1_80 = arith.constant 1 : index
    %c0_81 = arith.constant 0 : index
    %c0_82 = arith.constant 0 : index
    %245 = vector.load %arg7[%c1_80, %c0_81, %c0_82] : memref<2x32x32xbf16, #tpu.memory_space<vmem>>, vector<1x32x32xbf16>
    %246 = vector.shape_cast %245 : vector<1x32x32xbf16> to vector<32x32xbf16>
    %cst_83 = arith.constant dense<0.000000e+00> : vector<16x32xf32>
    %247 = tpu.matmul %244, %246, %cst_83 {dimension_numbers = #tpu.dot_dimension_numbers<[1], [0], [0], [1], [0, 0, 1, 1], [], []>} : vector<16x32xbf16>, vector<32x32xbf16>, vector<16x32xf32> -> vector<16x32xf32>
    %c6 = arith.constant 6 : index
    %c0_84 = arith.constant 0 : index
    %c0_85 = arith.constant 0 : index
    %248 = vector.load %arg8[%c6, %c0_84, %c0_85] : memref<12x1x32xf32, #tpu.memory_space<vmem>>, vector<1x1x32xf32>
    %249 = vector.shape_cast %248 : vector<1x1x32xf32> to vector<1x32xf32>
    %c7 = arith.constant 7 : index
    %c0_86 = arith.constant 0 : index
    %c0_87 = arith.constant 0 : index
    %250 = vector.load %arg8[%c7, %c0_86, %c0_87] : memref<12x1x32xf32, #tpu.memory_space<vmem>>, vector<1x1x32xf32>
    %251 = vector.shape_cast %250 : vector<1x1x32xf32> to vector<1x32xf32>
    %c8 = arith.constant 8 : index
    %c0_88 = arith.constant 0 : index
    %c0_89 = arith.constant 0 : index
    %252 = vector.load %arg8[%c8, %c0_88, %c0_89] : memref<12x1x32xf32, #tpu.memory_space<vmem>>, vector<1x1x32xf32>
    %253 = vector.shape_cast %252 : vector<1x1x32xf32> to vector<1x32xf32>
    %c9 = arith.constant 9 : index
    %c0_90 = arith.constant 0 : index
    %c0_91 = arith.constant 0 : index
    %254 = vector.load %arg8[%c9, %c0_90, %c0_91] : memref<12x1x32xf32, #tpu.memory_space<vmem>>, vector<1x1x32xf32>
    %255 = vector.shape_cast %254 : vector<1x1x32xf32> to vector<1x32xf32>
    %c10 = arith.constant 10 : index
    %c0_92 = arith.constant 0 : index
    %c0_93 = arith.constant 0 : index
    %256 = vector.load %arg8[%c10, %c0_92, %c0_93] : memref<12x1x32xf32, #tpu.memory_space<vmem>>, vector<1x1x32xf32>
    %257 = vector.shape_cast %256 : vector<1x1x32xf32> to vector<1x32xf32>
    %c11 = arith.constant 11 : index
    %c0_94 = arith.constant 0 : index
    %c0_95 = arith.constant 0 : index
    %258 = vector.load %arg8[%c11, %c0_94, %c0_95] : memref<12x1x32xf32, #tpu.memory_space<vmem>>, vector<1x1x32xf32>
    %259 = vector.shape_cast %258 : vector<1x1x32xf32> to vector<1x32xf32>
    %260 = arith.addf %181, %247 : vector<16x32xf32>
    %261 = vector.broadcast %249 : vector<1x32xf32> to vector<16x32xf32>
    %262 = arith.addf %260, %261 : vector<16x32xf32>
    %cst_96 = arith.constant dense<0.000000e+00> : vector<16xf32>
    %263 = vector.multi_reduction <add>, %262, %cst_96 [1] : vector<16x32xf32> to vector<16xf32>
    %264 = vector.shape_cast %263 : vector<16xf32> to vector<16x1xf32>
    %cst_97 = arith.constant 3.200000e+01 : f32
    %265 = vector.broadcast %cst_97 : f32 to vector<16x1xf32>
    %266 = arith.divf %264, %265 : vector<16x1xf32>
    %267 = vector.broadcast %266 : vector<16x1xf32> to vector<16x32xf32>
    %268 = arith.subf %262, %267 : vector<16x32xf32>
    %269 = arith.mulf %268, %268 : vector<16x32xf32>
    %cst_98 = arith.constant dense<0.000000e+00> : vector<16xf32>
    %270 = vector.multi_reduction <add>, %269, %cst_98 [1] : vector<16x32xf32> to vector<16xf32>
    %271 = vector.shape_cast %270 : vector<16xf32> to vector<16x1xf32>
    %cst_99 = arith.constant 3.200000e+01 : f32
    %272 = vector.broadcast %cst_99 : f32 to vector<16x1xf32>
    %273 = arith.divf %271, %272 : vector<16x1xf32>
    %274 = vector.broadcast %266 : vector<16x1xf32> to vector<16x32xf32>
    %275 = arith.subf %262, %274 : vector<16x32xf32>
    %cst_100 = arith.constant 9.99999974E-6 : f32
    %276 = vector.broadcast %cst_100 : f32 to vector<16x1xf32>
    %277 = arith.addf %273, %276 : vector<16x1xf32>
    %278 = math.rsqrt %277 : vector<16x1xf32>
    %279 = vector.broadcast %278 : vector<16x1xf32> to vector<16x32xf32>
    %280 = arith.mulf %275, %279 : vector<16x32xf32>
    %281 = vector.broadcast %251 : vector<1x32xf32> to vector<16x32xf32>
    %282 = arith.mulf %280, %281 : vector<16x32xf32>
    %283 = vector.broadcast %253 : vector<1x32xf32> to vector<16x32xf32>
    %284 = arith.addf %282, %283 : vector<16x32xf32>
    %285 = arith.truncf %284 : vector<16x32xf32> to vector<16x32xbf16>
    %c1_101 = arith.constant 1 : index
    %c0_102 = arith.constant 0 : index
    %c0_103 = arith.constant 0 : index
    %286 = vector.load %arg9[%c1_101, %c0_102, %c0_103] : memref<2x32x64xbf16, #tpu.memory_space<vmem>>, vector<1x32x64xbf16>
    %287 = vector.shape_cast %286 : vector<1x32x64xbf16> to vector<32x64xbf16>
    %cst_104 = arith.constant dense<0.000000e+00> : vector<16x64xf32>
    %288 = tpu.matmul %285, %287, %cst_104 {dimension_numbers = #tpu.dot_dimension_numbers<[1], [0], [0], [1], [0, 0, 1, 1], [], []>} : vector<16x32xbf16>, vector<32x64xbf16>, vector<16x64xf32> -> vector<16x64xf32>
    %c1_105 = arith.constant 1 : index
    %c0_106 = arith.constant 0 : index
    %c0_107 = arith.constant 0 : index
    %289 = vector.load %arg10[%c1_105, %c0_106, %c0_107] : memref<2x1x64xf32, #tpu.memory_space<vmem>>, vector<1x1x64xf32>
    %290 = vector.shape_cast %289 : vector<1x1x64xf32> to vector<1x64xf32>
    %291 = vector.broadcast %290 : vector<1x64xf32> to vector<16x64xf32>
    %292 = arith.addf %288, %291 : vector<16x64xf32>
    %293 = arith.mulf %292, %292 : vector<16x64xf32>
    %294 = arith.mulf %292, %293 : vector<16x64xf32>
    %cst_108 = arith.constant 4.471500e-02 : f32
    %295 = vector.broadcast %cst_108 : f32 to vector<16x64xf32>
    %296 = arith.mulf %295, %294 : vector<16x64xf32>
    %297 = arith.addf %292, %296 : vector<16x64xf32>
    %cst_109 = arith.constant 0.797884583 : f32
    %298 = vector.broadcast %cst_109 : f32 to vector<16x64xf32>
    %299 = arith.mulf %298, %297 : vector<16x64xf32>
    %300 = math.tanh %299 : vector<16x64xf32>
    %cst_110 = arith.constant 1.000000e+00 : f32
    %301 = vector.broadcast %cst_110 : f32 to vector<16x64xf32>
    %302 = arith.addf %301, %300 : vector<16x64xf32>
    %cst_111 = arith.constant 5.000000e-01 : f32
    %303 = vector.broadcast %cst_111 : f32 to vector<16x64xf32>
    %304 = arith.mulf %303, %302 : vector<16x64xf32>
    %305 = arith.mulf %292, %304 : vector<16x64xf32>
    %306 = arith.truncf %305 : vector<16x64xf32> to vector<16x64xbf16>
    %c1_112 = arith.constant 1 : index
    %c0_113 = arith.constant 0 : index
    %c0_114 = arith.constant 0 : index
    %307 = vector.load %arg11[%c1_112, %c0_113, %c0_114] : memref<2x64x32xbf16, #tpu.memory_space<vmem>>, vector<1x64x32xbf16>
    %308 = vector.shape_cast %307 : vector<1x64x32xbf16> to vector<64x32xbf16>
    %cst_115 = arith.constant dense<0.000000e+00> : vector<16x32xf32>
    %309 = tpu.matmul %306, %308, %cst_115 {dimension_numbers = #tpu.dot_dimension_numbers<[1], [0], [0], [1], [0, 0, 1, 1], [], []>} : vector<16x64xbf16>, vector<64x32xbf16>, vector<16x32xf32> -> vector<16x32xf32>
    %310 = vector.broadcast %255 : vector<1x32xf32> to vector<16x32xf32>
    %311 = arith.addf %309, %310 : vector<16x32xf32>
    %312 = arith.addf %284, %311 : vector<16x32xf32>
    %cst_116 = arith.constant dense<0.000000e+00> : vector<16xf32>
    %313 = vector.multi_reduction <add>, %312, %cst_116 [1] : vector<16x32xf32> to vector<16xf32>
    %314 = vector.shape_cast %313 : vector<16xf32> to vector<16x1xf32>
    %cst_117 = arith.constant 3.200000e+01 : f32
    %315 = vector.broadcast %cst_117 : f32 to vector<16x1xf32>
    %316 = arith.divf %314, %315 : vector<16x1xf32>
    %317 = vector.broadcast %316 : vector<16x1xf32> to vector<16x32xf32>
    %318 = arith.subf %312, %317 : vector<16x32xf32>
    %319 = arith.mulf %318, %318 : vector<16x32xf32>
    %cst_118 = arith.constant dense<0.000000e+00> : vector<16xf32>
    %320 = vector.multi_reduction <add>, %319, %cst_118 [1] : vector<16x32xf32> to vector<16xf32>
    %321 = vector.shape_cast %320 : vector<16xf32> to vector<16x1xf32>
    %cst_119 = arith.constant 3.200000e+01 : f32
    %322 = vector.broadcast %cst_119 : f32 to vector<16x1xf32>
    %323 = arith.divf %321, %322 : vector<16x1xf32>
    %324 = vector.broadcast %316 : vector<16x1xf32> to vector<16x32xf32>
    %325 = arith.subf %312, %324 : vector<16x32xf32>
    %cst_120 = arith.constant 9.99999974E-6 : f32
    %326 = vector.broadcast %cst_120 : f32 to vector<16x1xf32>
    %327 = arith.addf %323, %326 : vector<16x1xf32>
    %328 = math.rsqrt %327 : vector<16x1xf32>
    %329 = vector.broadcast %328 : vector<16x1xf32> to vector<16x32xf32>
    %330 = arith.mulf %325, %329 : vector<16x32xf32>
    %331 = vector.broadcast %257 : vector<1x32xf32> to vector<16x32xf32>
    %332 = arith.mulf %330, %331 : vector<16x32xf32>
    %333 = vector.broadcast %259 : vector<1x32xf32> to vector<16x32xf32>
    %334 = arith.addf %332, %333 : vector<16x32xf32>
    %335 = vector.shape_cast %334 : vector<16x32xf32> to vector<2x8x32xf32>
    %336 = vector.shape_cast %1 : vector<2x8xf32> to vector<2x8x1xf32>
    %337 = vector.broadcast %336 : vector<2x8x1xf32> to vector<2x8x32xf32>
    %338 = arith.mulf %335, %337 : vector<2x8x32xf32>
    %cst_121 = arith.constant dense<0.000000e+00> : vector<2x32xf32>
    %339 = vector.multi_reduction <add>, %338, %cst_121 [1] : vector<2x8x32xf32> to vector<2x32xf32>
    %cst_122 = arith.constant dense<0.000000e+00> : vector<2xf32>
    %340 = vector.multi_reduction <add>, %1, %cst_122 [1] : vector<2x8xf32> to vector<2xf32>
    %341 = vector.shape_cast %340 : vector<2xf32> to vector<2x1xf32>
    %cst_123 = arith.constant 9.99999971E-10 : f32
    %342 = vector.broadcast %cst_123 : f32 to vector<2x1xf32>
    %343 = arith.maximumf %341, %342 : vector<2x1xf32>
    %344 = vector.broadcast %343 : vector<2x1xf32> to vector<2x32xf32>
    %345 = arith.divf %339, %344 : vector<2x32xf32>
    %c0_124 = arith.constant 0 : index
    %c0_125 = arith.constant 0 : index
    %346 = vector.load %arg12[%c0_124, %c0_125] : memref<2x32xf32, #tpu.memory_space<vmem>>, vector<2x32xf32>
    tpu.vector_store %arg12[%c0_124, %c0_125], %345 {strides = array<i32>} : memref<2x32xf32, #tpu.memory_space<vmem>>, vector<2x32xf32>,
    return
  }
  func.func @transform_0(%arg0: i32) -> (i32, i32) {
    %c0_i32 = arith.constant 0 : i32
    %c0_i32_0 = arith.constant 0 : i32
    %c0_i32_1 = arith.constant 0 : i32
    return %c0_i32, %c0_i32_0 : i32, i32
  }
  func.func @transform_1(%arg0: i32) -> (i32, i32) {
    %c0_i32 = arith.constant 0 : i32
    %c0_i32_0 = arith.constant 0 : i32
    %c0_i32_1 = arith.constant 0 : i32
    return %c0_i32, %c0_i32_0 : i32, i32
  }
  func.func @transform_2(%arg0: i32) -> (i32, i32, i32) {
    %c0_i32 = arith.constant 0 : i32
    %c0_i32_0 = arith.constant 0 : i32
    %c0_i32_1 = arith.constant 0 : i32
    %c0_i32_2 = arith.constant 0 : i32
    return %c0_i32, %c0_i32_0, %c0_i32_1 : i32, i32, i32
  }
  func.func @transform_3(%arg0: i32) -> (i32, i32, i32) {
    %c0_i32 = arith.constant 0 : i32
    %c0_i32_0 = arith.constant 0 : i32
    %c0_i32_1 = arith.constant 0 : i32
    %c0_i32_2 = arith.constant 0 : i32
    return %c0_i32, %c0_i32_0, %c0_i32_1 : i32, i32, i32
  }
  func.func @transform_4(%arg0: i32) -> (i32, i32, i32) {
    %c0_i32 = arith.constant 0 : i32
    %c0_i32_0 = arith.constant 0 : i32
    %c0_i32_1 = arith.constant 0 : i32
    %c0_i32_2 = arith.constant 0 : i32
    return %c0_i32, %c0_i32_0, %c0_i32_1 : i32, i32, i32
  }
  func.func @transform_5(%arg0: i32) -> (i32, i32, i32) {
    %c0_i32 = arith.constant 0 : i32
    %c0_i32_0 = arith.constant 0 : i32
    %c0_i32_1 = arith.constant 0 : i32
    %c0_i32_2 = arith.constant 0 : i32
    return %c0_i32, %c0_i32_0, %c0_i32_1 : i32, i32, i32
  }
  func.func @transform_6(%arg0: i32) -> (i32, i32, i32) {
    %c0_i32 = arith.constant 0 : i32
    %c0_i32_0 = arith.constant 0 : i32
    %c0_i32_1 = arith.constant 0 : i32
    %c0_i32_2 = arith.constant 0 : i32
    return %c0_i32, %c0_i32_0, %c0_i32_1 : i32, i32, i32
  }
  func.func @transform_7(%arg0: i32) -> (i32, i32, i32) {
    %c0_i32 = arith.constant 0 : i32
    %c0_i32_0 = arith.constant 0 : i32
    %c0_i32_1 = arith.constant 0 : i32
    %c0_i32_2 = arith.constant 0 : i32
    return %c0_i32, %c0_i32_0, %c0_i32_1 : i32, i32, i32
  }
  func.func @transform_8(%arg0: i32) -> (i32, i32, i32) {
    %c0_i32 = arith.constant 0 : i32
    %c0_i32_0 = arith.constant 0 : i32
    %c0_i32_1 = arith.constant 0 : i32
    %c0_i32_2 = arith.constant 0 : i32
    return %c0_i32, %c0_i32_0, %c0_i32_1 : i32, i32, i32
  }
  func.func @transform_9(%arg0: i32) -> (i32, i32, i32) {
    %c0_i32 = arith.constant 0 : i32
    %c0_i32_0 = arith.constant 0 : i32
    %c0_i32_1 = arith.constant 0 : i32
    %c0_i32_2 = arith.constant 0 : i32
    return %c0_i32, %c0_i32_0, %c0_i32_1 : i32, i32, i32
  }
  func.func @transform_10(%arg0: i32) -> (i32, i32, i32) {
    %c0_i32 = arith.constant 0 : i32
    %c0_i32_0 = arith.constant 0 : i32
    %c0_i32_1 = arith.constant 0 : i32
    %c0_i32_2 = arith.constant 0 : i32
    return %c0_i32, %c0_i32_0, %c0_i32_1 : i32, i32, i32
  }
  func.func @transform_11(%arg0: i32) -> (i32, i32) {
    %c0_i32 = arith.constant 0 : i32
    %c0_i32_0 = arith.constant 0 : i32
    %c0_i32_1 = arith.constant 0 : i32
    return %c0_i32, %c0_i32_0 : i32, i32
  }
}

</mosaic_0001>

<llo_original>
// kernel: kobart_encode_text.1
$region0: #{kobart_encode_text.1}
  #allocation0 [shape = 'u32[]', space=smem, size = 0x4, offset = 0x4, fixed_abs, tag = 'smem constant byte address 0x4 - core index']
  #allocation1 [shape = 'u32[144,128]{1,0:T(1,128)}', space=vmem, size = 0x12000, scoped, tag = 'internal scratch']
  %s0 = inlined_call_operand.vmem [shape: f32[16,32], index: 0, kind: input, shape index: {}]
  %s1 = inlined_call_operand.vmem [shape: f32[2,8], index: 1, kind: input, shape index: {}]
  %s2 = inlined_call_operand.vmem [shape: f32[8,1,8], index: 2, kind: input, shape index: {}]
  %s3 = inlined_call_operand.vmem [shape: f32[2,1,32], index: 3, kind: input, shape index: {}]
  %s4 = inlined_call_operand.vmem [shape: bf16[2,32,96], index: 4, kind: input, shape index: {}]
  %s5 = inlined_call_operand.vmem [shape: f32[2,1,96], index: 5, kind: input, shape index: {}]
  %s6 = inlined_call_operand.vmem [shape: bf16[2,32,32], index: 6, kind: input, shape index: {}]
  %s7 = inlined_call_operand.vmem [shape: f32[12,1,32], index: 7, kind: input, shape index: {}]
  %s8 = inlined_call_operand.vmem [shape: bf16[2,32,64], index: 8, kind: input, shape index: {}]
  %s9 = inlined_call_operand.vmem [shape: f32[2,1,64], index: 9, kind: input, shape index: {}]
  %s10 = inlined_call_operand.vmem [shape: bf16[2,64,32], index: 10, kind: input, shape index: {}]
  %s11 = inlined_call_operand.hbm [shape: f32[2,32], index: 11, kind: output, shape index: {}]
  %s12 = sld [smem:[#allocation0]]
  $region54: #{kobart_encode_text.1} parent=0
    _
  %s14 = ssub.s32 1, %s12
  %s15 = scalar_select 0, %s14, %s12
  $region1: #{kobart_encode_text.1} parent=0
    #allocation2 [shape = 'u8[1024]{0}', space=vmem, size = 0x400, scoped, tag = 'output window, operand 0, single buffered']
    #allocation3 [shape = 's32[1]{0}', space=sflag, size = 0x4, scoped, tag = 'scoped memory for kobart_encode_text.1']
    %16 = vsyncpa [#allocation3], 0
    // Predicated region
    $region2: #{kobart_encode_text.1} parent=1 // pred_check
      _
    $region3: #{kobart_encode_text.1} parent=1 // pred_check_branch
      %18 = sbr.rel (0) target = $region5
    $region4: #{kobart_encode_text.1} parent=1 // pred_region
      _
    $region5: #{kobart_encode_text.1} parent=1 // pred_fallthru
      _
    // Predicated region
    $region6: #{kobart_encode_text.1} parent=1 // pred_check
      _
    $region7: #{kobart_encode_text.1} parent=1 // pred_check_branch
      %20 = sbr.rel (0) target = $region9
    $region8: #{kobart_encode_text.1} parent=1 // pred_region
      _
    $region9: #{kobart_encode_text.1} parent=1 // pred_fallthru
      _
    // Predicated region
    $region10: #{kobart_encode_text.1} parent=1 // pred_check
      _
    $region11: #{kobart_encode_text.1} parent=1 // pred_check_branch
      %22 = sbr.rel (0) target = $region13
    $region12: #{kobart_encode_text.1} parent=1 // pred_region
      _
    $region13: #{kobart_encode_text.1} parent=1 // pred_fallthru
      _
    // Predicated region
    $region14: #{kobart_encode_text.1} parent=1 // pred_check
      _
    $region15: #{kobart_encode_text.1} parent=1 // pred_check_branch
      %24 = sbr.rel (0) target = $region17
    $region16: #{kobart_encode_text.1} parent=1 // pred_region
      _
    $region17: #{kobart_encode_text.1} parent=1 // pred_fallthru
      _
    // Predicated region
    $region18: #{kobart_encode_text.1} parent=1 // pred_check
      _
    $region19: #{kobart_encode_text.1} parent=1 // pred_check_branch
      %26 = sbr.rel (0) target = $region21
    $region20: #{kobart_encode_text.1} parent=1 // pred_region
      _
    $region21: #{kobart_encode_text.1} parent=1 // pred_fallthru
      _
    // Predicated region
    $region22: #{kobart_encode_text.1} parent=1 // pred_check
      _
    $region23: #{kobart_encode_text.1} parent=1 // pred_check_branch
      %28 = sbr.rel (0) target = $region25
    $region24: #{kobart_encode_text.1} parent=1 // pred_region
      _
    $region25: #{kobart_encode_text.1} parent=1 // pred_fallthru
      _
    // Predicated region
    $region26: #{kobart_encode_text.1} parent=1 // pred_check
      _
    $region27: #{kobart_encode_text.1} parent=1 // pred_check_branch
      %30 = sbr.rel (0) target = $region29
    $region28: #{kobart_encode_text.1} parent=1 // pred_region
      _
    $region29: #{kobart_encode_text.1} parent=1 // pred_fallthru
      _
    // Predicated region
    $region30: #{kobart_encode_text.1} parent=1 // pred_check
      _
    $region31: #{kobart_encode_text.1} parent=1 // pred_check_branch
      %32 = sbr.rel (0) target = $region33
    $region32: #{kobart_encode_text.1} parent=1 // pred_region
      _
    $region33: #{kobart_encode_text.1} parent=1 // pred_fallthru
      _
    // Predicated region
    $region34: #{kobart_encode_text.1} parent=1 // pred_check
      _
    $region35: #{kobart_encode_text.1} parent=1 // pred_check_branch
      %34 = sbr.rel (0) target = $region37
    $region36: #{kobart_encode_text.1} parent=1 // pred_region
      _
    $region37: #{kobart_encode_text.1} parent=1 // pred_fallthru
      _
    // Predicated region
    $region38: #{kobart_encode_text.1} parent=1 // pred_check
      _
    $region39: #{kobart_encode_text.1} parent=1 // pred_check_branch
      %36 = sbr.rel (0) target = $region41
    $region40: #{kobart_encode_text.1} parent=1 // pred_region
      _
    $region41: #{kobart_encode_text.1} parent=1 // pred_fallthru
      _
    // Predicated region
    $region42: #{kobart_encode_text.1} parent=1 // pred_check
      _
    $region43: #{kobart_encode_text.1} parent=1 // pred_check_branch
      %38 = sbr.rel (0) target = $region45
    $region44: #{kobart_encode_text.1} parent=1 // pred_region
      _
    $region45: #{kobart_encode_text.1} parent=1 // pred_fallthru
      _
    %v40 = vld [vmem:[%s0] sm:$0xff]
    %v41 = vld [vmem:[%s0 + $0x8] sm:$0xff]
    %v42 = vld [vmem:[%s1] sm:$0x3]
    %v43 = vld [vmem:[%s2] sm:$0x1]
    %v44 = vld [vmem:[%s2 + $0x1] sm:$0x1]
    %v45 = vld [vmem:[%s2 + $0x2] sm:$0x1]
    %v46 = vld [vmem:[%s2 + $0x3] sm:$0x1]
    %v47 = vld [vmem:[%s2 + $0x4] sm:$0x1]
    %v48 = vld [vmem:[%s2 + $0x5] sm:$0x1]
    %v49 = vld [vmem:[%s2 + $0x6] sm:$0x1]
    %v50 = vld [vmem:[%s2 + $0x7] sm:$0x1]
    %v51 = vld [vmem:[%s3] sm:$0x1]
    %s52 = scalar_lea.vmem %s3, 1
    %v53 = vld [vmem:[%s52] sm:$0x1]
    %vm54 = vcmask 261120
    %v55 = vsel %vm54, %v40, 0.0
    %56 = vadd.xlane.f32.xlu0 %v55
    %v57 = vpop.xlane.xlu0 %56
    %v58 = vsel %vm54, %v41, 0.0
    %59 = vadd.xlane.f32.xlu0 %v58
    %v60 = vpop.xlane.xlu0 %59
    %v61 = vrcp.pop 32.0
    %v62 = vmul.f32 %v57, %v61
    %v63 = vmul.f32 %v60, %v61
    %v64 = vsub.f32 %v40, %v62
    %v65 = vsub.f32 %v41, %v63
    %v66 = vmul.f32 %v64, %v64
    %v67 = vmul.f32 %v65, %v65
    %v68 = vsel %vm54, %v66, 0.0
    %69 = vadd.xlane.f32.xlu0 %v68
    %v70 = vpop.xlane.xlu0 %69
    %v71 = vsel %vm54, %v67, 0.0
    %72 = vadd.xlane.f32.xlu0 %v71
    %v73 = vpop.xlane.xlu0 %72
    %v74 = vmul.f32 %v70, %v61
    %v75 = vmul.f32 %v73, %v61
    %v76 = vadd.f32 %v74, 1e-05
    %v77 = vadd.f32 %v75, 1e-05
    %v78 = vrsqrt.pop %v76
    %v79 = vrsqrt.pop %v77
    %v80 = vmul.f32 %v64, %v78
    %v81 = vmul.f32 %v65, %v79
    %v83 = vlaneseq
    %v84 = vshrl.u32 %v83, 7
    %v85 = vsub.s32 0, %v84
    %v86 = vrot.slane %v51, %v85
    %v88 = vmul.f32 %v80, %v86
    %v89 = vmul.f32 %v81, %v86
    %v91 = vlaneseq
    %v92 = vshrl.u32 %v91, 7
    %v93 = vsub.s32 0, %v92
    %v94 = vrot.slane %v53, %v93
    %v96 = vadd.f32 %v88, %v94
    %v97 = vadd.f32 %v89, %v94
    %v98 = vpack.c.bf16 %v97, %v96
    %v99 = vld [vmem:[%s4] sm:$0xf]
    %v100 = vld [vmem:[%s4 + $0x4] sm:$0xf]
    %v101 = vld [vmem:[%s4 + $0x8] sm:$0xf]
    %v102 = vld [vmem:[%s4 + $0xc] sm:$0xf]
    %v103 = vld [vmem:[%s5] sm:$0x1]
    %v105 = vlaneseq
    %v106 = vshrl.u32 %v105, 7
    %v107 = vsub.s32 0, %v106
    %v108 = vrot.slane %v103, %v107
    %v114 = vunpack.c.l.b16 %v99
    %v115 = vunpack.c.l.b16 %v100
    %v116 = vunpack.c.l.b16 %v101
    %v117 = vunpack.c.l.b16 %v102
    %v118 = vpack.c.b16 %v115, %v114
    %v119 = vpack.c.b16 %v117, %v116
    %v123 = vsel %vm54, %v98, 0
    %125 = vmatprep.subr.bf16.mxu0 0
    %126 = vmatpush1.bf16.msra.mxu0 %v118
    %127 = vmatprep.subr.bf16.mxu0 0
    %128 = vmatpush1.bf16.msra.mxu0 %v119
    %129 = vmatprep.subr.bf16.mxu0 0
    %130 = vmatpush1.bf16.msra.mxu0 0
    %131 = vmatprep.subr.bf16.mxu0 0
    %132 = vmatpush1.bf16.msra.mxu0 0
    %133 = vmatprep.subr.bf16.mxu0 0
    %134 = vmatpush1.bf16.msra.mxu0 0
    %135 = vmatprep.subr.bf16.mxu0 0
    %136 = vmatpush1.bf16.msra.mxu0 0
    %137 = vmatprep.subr.bf16.mxu0 0
    %138 = vmatpush1.bf16.msra.mxu0 0
    %139 = vmatprep.subr.bf16.mxu0 0
    %140 = vmatpush1.bf16.msra.mxu0 0
    %141 = vmatprep.subr.bf16.mxu0 0
    %142 = vmatpush1.bf16.msra.mxu0 0
    %143 = vmatprep.subr.bf16.mxu0 0
    %144 = vmatpush1.bf16.msra.mxu0 0
    %145 = vmatprep.subr.bf16.mxu0 0
    %146 = vmatpush1.bf16.msra.mxu0 0
    %147 = vmatprep.subr.bf16.mxu0 0
    %148 = vmatpush1.bf16.msra.mxu0 0
    %149 = vmatprep.subr.bf16.mxu0 0
    %150 = vmatpush1.bf16.msra.mxu0 0
    %151 = vmatprep.subr.bf16.mxu0 0
    %152 = vmatpush1.bf16.msra.mxu0 0
    %153 = vmatprep.subr.bf16.mxu0 0
    %154 = vmatpush1.bf16.msra.mxu0 0
    %155 = vmatprep.subr.bf16.mxu0 0
    %156 = vmatpush1.bf16.msra.mxu0 0
    %157 = vmatprep.mubr.bf16.mxu0 0
    %158 = vmatmul.mubr.bf16.gmra.mrb[0].mxu0 %v123
    %v159 = vpop.f32.mrb[0].mxu0
    %v160 = vadd.f32 %v108, %v159
    %v161 = vpop.f32.mrb[0].mxu0
    %v162 = vpop.f32.mrb[0].mxu0
    %v163 = vadd.f32 %v108, %v162
    %v164 = vpop.f32.mrb[0].mxu0
    %165 = vdwg.mxu0
    %168 = vrot.lane.b32.xlu0 %v160, 120
    %v169 = vpop.permute.xlu0 %168
    %170 = vrot.lane.b32.xlu0 %v163, 120
    %v171 = vpop.permute.xlu0 %170
    %174 = vrot.lane.b32.xlu0 %v160, 112
    %v175 = vpop.permute.xlu0 %174
    %176 = vrot.lane.b32.xlu0 %v163, 112
    %v177 = vpop.permute.xlu0 %176
    %180 = vrot.lane.b32.xlu0 %v160, 104
    %v181 = vpop.permute.xlu0 %180
    %182 = vrot.lane.b32.xlu0 %v163, 104
    %v183 = vpop.permute.xlu0 %182
    %v186 = vpack.c.bf16 %v160, %v160
    %v187 = vpack.c.bf16 %v163, %v163
    %v188 = vpack.c.bf16 %v169, %v169
    %v189 = vpack.c.bf16 %v171, %v171
    %v190 = vpack.c.bf16 %v175, %v175
    %v191 = vpack.c.bf16 %v177, %v177
    %v192 = vpack.c.bf16 %v181, %v181
    %v193 = vpack.c.bf16 %v183, %v183
    %v202 = vlaneseq
    %v203 = vshrl.u32 %v202, 7
    %v204 = vsub.s32 0, %v203
    %v205 = vrot.slane %v43, %v204
    %v206 = vlaneseq
    %v207 = vshrl.u32 %v206, 7
    %v208 = vsub.s32 0, %v207
    %v209 = vrot.slane %v44, %v208
    %v210 = vlaneseq
    %v211 = vshrl.u32 %v210, 7
    %v212 = vsub.s32 0, %v211
    %v213 = vrot.slane %v45, %v212
    %v214 = vlaneseq
    %v215 = vshrl.u32 %v214, 7
    %v216 = vsub.s32 0, %v215
    %v217 = vrot.slane %v46, %v216
    %v218 = vlaneseq
    %v219 = vshrl.u32 %v218, 7
    %v220 = vsub.s32 0, %v219
    %v221 = vrot.slane %v47, %v220
    %v222 = vlaneseq
    %v223 = vshrl.u32 %v222, 7
    %v224 = vsub.s32 0, %v223
    %v225 = vrot.slane %v48, %v224
    %v226 = vlaneseq
    %v227 = vshrl.u32 %v226, 7
    %v228 = vsub.s32 0, %v227
    %v229 = vrot.slane %v49, %v228
    %v230 = vlaneseq
    %v231 = vshrl.u32 %v230, 7
    %v232 = vsub.s32 0, %v231
    %v233 = vrot.slane %v50, %v232
    %243 = vrot.lane.b32.xlu0 %v186, 96
    %v244 = vpop.permute.xlu0 %243
    %vm245 = vcmask 64512
    %v247 = vsel %vm245, %v186, 0
    %v250 = vsel %vm245, %v244, 0
    %252 = vmatprep.subr.bf16.mxu0 0
    %253 = vmatpush1.bf16.xpose.msra.mxu0 %v250
    %254 = vmatprep.subr.bf16.mxu0 0
    %255 = vmatpush1.bf16.xpose.msra.mxu0 0
    %256 = vmatprep.subr.bf16.mxu0 0
    %257 = vmatpush1.bf16.xpose.msra.mxu0 0
    %258 = vmatprep.subr.bf16.mxu0 0
    %259 = vmatpush1.bf16.xpose.msra.mxu0 0
    %260 = vmatprep.subr.bf16.mxu0 0
    %261 = vmatpush1.bf16.xpose.msra.mxu0 0
    %262 = vmatprep.subr.bf16.mxu0 0
    %263 = vmatpush1.bf16.xpose.msra.mxu0 0
    %264 = vmatprep.subr.bf16.mxu0 0
    %265 = vmatpush1.bf16.xpose.msra.mxu0 0
    %266 = vmatprep.subr.bf16.mxu0 0
    %267 = vmatpush1.bf16.xpose.msra.mxu0 0
    %268 = vmatprep.subr.bf16.mxu0 0
    %269 = vmatpush1.bf16.xpose.msra.mxu0 0
    %270 = vmatprep.subr.bf16.mxu0 0
    %271 = vmatpush1.bf16.xpose.msra.mxu0 0
    %272 = vmatprep.subr.bf16.mxu0 0
    %273 = vmatpush1.bf16.xpose.msra.mxu0 0
    %274 = vmatprep.subr.bf16.mxu0 0
    %275 = vmatpush1.bf16.xpose.msra.mxu0 0
    %276 = vmatprep.subr.bf16.mxu0 0
    %277 = vmatpush1.bf16.xpose.msra.mxu0 0
    %278 = vmatprep.subr.bf16.mxu0 0
    %279 = vmatpush1.bf16.xpose.msra.mxu0 0
    %280 = vmatprep.subr.bf16.mxu0 0
    %281 = vmatpush1.bf16.xpose.msra.mxu0 0
    %282 = vmatprep.subr.bf16.mxu0 0
    %283 = vmatpush1.bf16.xpose.msra.mxu0 0
    %284 = vmatprep.mubr.bf16.mxu0 0
    %285 = vmatmul.mubr.bf16.gmra.mrb[0].mxu0 %v247
    %v286 = vpop.f32.mrb[0].mxu0
    %v287 = vadd.f32 %v205, %v286
    %v288 = vpop.f32.mrb[0].mxu0
    %v289 = vpop.f32.mrb[0].mxu0
    %v290 = vpop.f32.mrb[0].mxu0
    %291 = vdwg.mxu0
    %293 = vrot.lane.b32.xlu0 %v187, 96
    %v294 = vpop.permute.xlu0 %293
    %v296 = vsel %vm245, %v187, 0
    %v299 = vsel %vm245, %v294, 0
    %301 = vmatprep.subr.bf16.mxu0 0
    %302 = vmatpush1.bf16.xpose.msra.mxu0 %v299
    %303 = vmatprep.subr.bf16.mxu0 0
    %304 = vmatpush1.bf16.xpose.msra.mxu0 0
    %305 = vmatprep.subr.bf16.mxu0 0
    %306 = vmatpush1.bf16.xpose.msra.mxu0 0
    %307 = vmatprep.subr.bf16.mxu0 0
    %308 = vmatpush1.bf16.xpose.msra.mxu0 0
    %309 = vmatprep.subr.bf16.mxu0 0
    %310 = vmatpush1.bf16.xpose.msra.mxu0 0
    %311 = vmatprep.subr.bf16.mxu0 0
    %312 = vmatpush1.bf16.xpose.msra.mxu0 0
    %313 = vmatprep.subr.bf16.mxu0 0
    %314 = vmatpush1.bf16.xpose.msra.mxu0 0
    %315 = vmatprep.subr.bf16.mxu0 0
    %316 = vmatpush1.bf16.xpose.msra.mxu0 0
    %317 = vmatprep.subr.bf16.mxu0 0
    %318 = vmatpush1.bf16.xpose.msra.mxu0 0
    %319 = vmatprep.subr.bf16.mxu0 0
    %320 = vmatpush1.bf16.xpose.msra.mxu0 0
    %321 = vmatprep.subr.bf16.mxu0 0
    %322 = vmatpush1.bf16.xpose.msra.mxu0 0
    %323 = vmatprep.subr.bf16.mxu0 0
    %324 = vmatpush1.bf16.xpose.msra.mxu0 0
    %325 = vmatprep.subr.bf16.mxu0 0
    %326 = vmatpush1.bf16.xpose.msra.mxu0 0
    %327 = vmatprep.subr.bf16.mxu0 0
    %328 = vmatpush1.bf16.xpose.msra.mxu0 0
    %329 = vmatprep.subr.bf16.mxu0 0
    %330 = vmatpush1.bf16.xpose.msra.mxu0 0
    %331 = vmatprep.subr.bf16.mxu0 0
    %332 = vmatpush1.bf16.xpose.msra.mxu0 0
    %333 = vmatprep.mubr.bf16.mxu0 0
    %334 = vmatmul.mubr.bf16.gmra.mrb[0].mxu0 %v296
    %v335 = vpop.f32.mrb[0].mxu0
    %v336 = vadd.f32 %v209, %v335
    %v337 = vpop.f32.mrb[0].mxu0
    %v338 = vpop.f32.mrb[0].mxu0
    %v339 = vpop.f32.mrb[0].mxu0
    %340 = vdwg.mxu0
    %342 = vrot.lane.b32.xlu0 %v188, 96
    %v343 = vpop.permute.xlu0 %342
    %v345 = vsel %vm245, %v188, 0
    %v348 = vsel %vm245, %v343, 0
    %350 = vmatprep.subr.bf16.mxu0 0
    %351 = vmatpush1.bf16.xpose.msra.mxu0 %v348
    %352 = vmatprep.subr.bf16.mxu0 0
    %353 = vmatpush1.bf16.xpose.msra.mxu0 0
    %354 = vmatprep.subr.bf16.mxu0 0
    %355 = vmatpush1.bf16.xpose.msra.mxu0 0
    %356 = vmatprep.subr.bf16.mxu0 0
    %357 = vmatpush1.bf16.xpose.msra.mxu0 0
    %358 = vmatprep.subr.bf16.mxu0 0
    %359 = vmatpush1.bf16.xpose.msra.mxu0 0
    %360 = vmatprep.subr.bf16.mxu0 0
    %361 = vmatpush1.bf16.xpose.msra.mxu0 0
    %362 = vmatprep.subr.bf16.mxu0 0
    %363 = vmatpush1.bf16.xpose.msra.mxu0 0
    %364 = vmatprep.subr.bf16.mxu0 0
    %365 = vmatpush1.bf16.xpose.msra.mxu0 0
    %366 = vmatprep.subr.bf16.mxu0 0
    %367 = vmatpush1.bf16.xpose.msra.mxu0 0
    %368 = vmatprep.subr.bf16.mxu0 0
    %369 = vmatpush1.bf16.xpose.msra.mxu0 0
    %370 = vmatprep.subr.bf16.mxu0 0
    %371 = vmatpush1.bf16.xpose.msra.mxu0 0
    %372 = vmatprep.subr.bf16.mxu0 0
    %373 = vmatpush1.bf16.xpose.msra.mxu0 0
    %374 = vmatprep.subr.bf16.mxu0 0
    %375 = vmatpush1.bf16.xpose.msra.mxu0 0
    %376 = vmatprep.subr.bf16.mxu0 0
    %377 = vmatpush1.bf16.xpose.msra.mxu0 0
    %378 = vmatprep.subr.bf16.mxu0 0
    %379 = vmatpush1.bf16.xpose.msra.mxu0 0
    %380 = vmatprep.subr.bf16.mxu0 0
    %381 = vmatpush1.bf16.xpose.msra.mxu0 0
    %382 = vmatprep.mubr.bf16.mxu0 0
    %383 = vmatmul.mubr.bf16.gmra.mrb[0].mxu0 %v345
    %v384 = vpop.f32.mrb[0].mxu0
    %v385 = vadd.f32 %v213, %v384
    %v386 = vpop.f32.mrb[0].mxu0
    %v387 = vpop.f32.mrb[0].mxu0
    %v388 = vpop.f32.mrb[0].mxu0
    %389 = vdwg.mxu0
    %391 = vrot.lane.b32.xlu0 %v189, 96
    %v392 = vpop.permute.xlu0 %391
    %v394 = vsel %vm245, %v189, 0
    %v397 = vsel %vm245, %v392, 0
    %399 = vmatprep.subr.bf16.mxu0 0
    %400 = vmatpush1.bf16.xpose.msra.mxu0 %v397
    %401 = vmatprep.subr.bf16.mxu0 0
    %402 = vmatpush1.bf16.xpose.msra.mxu0 0
    %403 = vmatprep.subr.bf16.mxu0 0
    %404 = vmatpush1.bf16.xpose.msra.mxu0 0
    %405 = vmatprep.subr.bf16.mxu0 0
    %406 = vmatpush1.bf16.xpose.msra.mxu0 0
    %407 = vmatprep.subr.bf16.mxu0 0
    %408 = vmatpush1.bf16.xpose.msra.mxu0 0
    %409 = vmatprep.subr.bf16.mxu0 0
    %410 = vmatpush1.bf16.xpose.msra.mxu0 0
    %411 = vmatprep.subr.bf16.mxu0 0
    %412 = vmatpush1.bf16.xpose.msra.mxu0 0
    %413 = vmatprep.subr.bf16.mxu0 0
    %414 = vmatpush1.bf16.xpose.msra.mxu0 0
    %415 = vmatprep.subr.bf16.mxu0 0
    %416 = vmatpush1.bf16.xpose.msra.mxu0 0
    %417 = vmatprep.subr.bf16.mxu0 0
    %418 = vmatpush1.bf16.xpose.msra.mxu0 0
    %419 = vmatprep.subr.bf16.mxu0 0
    %420 = vmatpush1.bf16.xpose.msra.mxu0 0
    %421 = vmatprep.subr.bf16.mxu0 0
    %422 = vmatpush1.bf16.xpose.msra.mxu0 0
    %423 = vmatprep.subr.bf16.mxu0 0
    %424 = vmatpush1.bf16.xpose.msra.mxu0 0
    %425 = vmatprep.subr.bf16.mxu0 0
    %426 = vmatpush1.bf16.xpose.msra.mxu0 0
    %427 = vmatprep.subr.bf16.mxu0 0
    %428 = vmatpush1.bf16.xpose.msra.mxu0 0
    %429 = vmatprep.subr.bf16.mxu0 0
    %430 = vmatpush1.bf16.xpose.msra.mxu0 0
    %431 = vmatprep.mubr.bf16.mxu0 0
    %432 = vmatmul.mubr.bf16.gmra.mrb[0].mxu0 %v394
    %v433 = vpop.f32.mrb[0].mxu0
    %v434 = vadd.f32 %v217, %v433
    %v435 = vpop.f32.mrb[0].mxu0
    %v436 = vpop.f32.mrb[0].mxu0
    %v437 = vpop.f32.mrb[0].mxu0
    %438 = vdwg.mxu0
    %440 = vrot.lane.b32.xlu0 %v190, 96
    %v441 = vpop.permute.xlu0 %440
    %v443 = vsel %vm245, %v190, 0
    %v446 = vsel %vm245, %v441, 0
    %448 = vmatprep.subr.bf16.mxu0 0
    %449 = vmatpush1.bf16.xpose.msra.mxu0 %v446
    %450 = vmatprep.subr.bf16.mxu0 0
    %451 = vmatpush1.bf16.xpose.msra.mxu0 0
    %452 = vmatprep.subr.bf16.mxu0 0
    %453 = vmatpush1.bf16.xpose.msra.mxu0 0
    %454 = vmatprep.subr.bf16.mxu0 0
    %455 = vmatpush1.bf16.xpose.msra.mxu0 0
    %456 = vmatprep.subr.bf16.mxu0 0
    %457 = vmatpush1.bf16.xpose.msra.mxu0 0
    %458 = vmatprep.subr.bf16.mxu0 0
    %459 = vmatpush1.bf16.xpose.msra.mxu0 0
    %460 = vmatprep.subr.bf16.mxu0 0
    %461 = vmatpush1.bf16.xpose.msra.mxu0 0
    %462 = vmatprep.subr.bf16.mxu0 0
    %463 = vmatpush1.bf16.xpose.msra.mxu0 0
    %464 = vmatprep.subr.bf16.mxu0 0
    %465 = vmatpush1.bf16.xpose.msra.mxu0 0
    %466 = vmatprep.subr.bf16.mxu0 0
    %467 = vmatpush1.bf16.xpose.msra.mxu0 0
    %468 = vmatprep.subr.bf16.mxu0 0
    %469 = vmatpush1.bf16.xpose.msra.mxu0 0
    %470 = vmatprep.subr.bf16.mxu0 0
    %471 = vmatpush1.bf16.xpose.msra.mxu0 0
    %472 = vmatprep.subr.bf16.mxu0 0
    %473 = vmatpush1.bf16.xpose.msra.mxu0 0
    %474 = vmatprep.subr.bf16.mxu0 0
    %475 = vmatpush1.bf16.xpose.msra.mxu0 0
    %476 = vmatprep.subr.bf16.mxu0 0
    %477 = vmatpush1.bf16.xpose.msra.mxu0 0
    %478 = vmatprep.subr.bf16.mxu0 0
    %479 = vmatpush1.bf16.xpose.msra.mxu0 0
    %480 = vmatprep.mubr.bf16.mxu0 0
    %481 = vmatmul.mubr.bf16.gmra.mrb[0].mxu0 %v443
    %v482 = vpop.f32.mrb[0].mxu0
    %v483 = vadd.f32 %v221, %v482
    %v484 = vpop.f32.mrb[0].mxu0
    %v485 = vpop.f32.mrb[0].mxu0
    %v486 = vpop.f32.mrb[0].mxu0
    %487 = vdwg.mxu0
    %489 = vrot.lane.b32.xlu0 %v191, 96
    %v490 = vpop.permute.xlu0 %489
    %v492 = vsel %vm245, %v191, 0
    %v495 = vsel %vm245, %v490, 0
    %497 = vmatprep.subr.bf16.mxu0 0
    %498 = vmatpush1.bf16.xpose.msra.mxu0 %v495
    %499 = vmatprep.subr.bf16.mxu0 0
    %500 = vmatpush1.bf16.xpose.msra.mxu0 0
    %501 = vmatprep.subr.bf16.mxu0 0
    %502 = vmatpush1.bf16.xpose.msra.mxu0 0
    %503 = vmatprep.subr.bf16.mxu0 0
    %504 = vmatpush1.bf16.xpose.msra.mxu0 0
    %505 = vmatprep.subr.bf16.mxu0 0
    %506 = vmatpush1.bf16.xpose.msra.mxu0 0
    %507 = vmatprep.subr.bf16.mxu0 0
    %508 = vmatpush1.bf16.xpose.msra.mxu0 0
    %509 = vmatprep.subr.bf16.mxu0 0
    %510 = vmatpush1.bf16.xpose.msra.mxu0 0
    %511 = vmatprep.subr.bf16.mxu0 0
    %512 = vmatpush1.bf16.xpose.msra.mxu0 0
    %513 = vmatprep.subr.bf16.mxu0 0
    %514 = vmatpush1.bf16.xpose.msra.mxu0 0
    %515 = vmatprep.subr.bf16.mxu0 0
    %516 = vmatpush1.bf16.xpose.msra.mxu0 0
    %517 = vmatprep.subr.bf16.mxu0 0
    %518 = vmatpush1.bf16.xpose.msra.mxu0 0
    %519 = vmatprep.subr.bf16.mxu0 0
    %520 = vmatpush1.bf16.xpose.msra.mxu0 0
    %521 = vmatprep.subr.bf16.mxu0 0
    %522 = vmatpush1.bf16.xpose.msra.mxu0 0
    %523 = vmatprep.subr.bf16.mxu0 0
    %524 = vmatpush1.bf16.xpose.msra.mxu0 0
    %525 = vmatprep.subr.bf16.mxu0 0
    %526 = vmatpush1.bf16.xpose.msra.mxu0 0
    %527 = vmatprep.subr.bf16.mxu0 0
    %528 = vmatpush1.bf16.xpose.msra.mxu0 0
    %529 = vmatprep.mubr.bf16.mxu0 0
    %530 = vmatmul.mubr.bf16.gmra.mrb[0].mxu0 %v492
    %v531 = vpop.f32.mrb[0].mxu0
    %v532 = vadd.f32 %v225, %v531
    %v533 = vpop.f32.mrb[0].mxu0
    %v534 = vpop.f32.mrb[0].mxu0
    %v535 = vpop.f32.mrb[0].mxu0
    %536 = vdwg.mxu0
    %538 = vrot.lane.b32.xlu0 %v192, 96
    %v539 = vpop.permute.xlu0 %538
    %v541 = vsel %vm245, %v192, 0
    %v544 = vsel %vm245, %v539, 0
    %546 = vmatprep.subr.bf16.mxu0 0
    %547 = vmatpush1.bf16.xpose.msra.mxu0 %v544
    %548 = vmatprep.subr.bf16.mxu0 0
    %549 = vmatpush1.bf16.xpose.msra.mxu0 0
    %550 = vmatprep.subr.bf16.mxu0 0
    %551 = vmatpush1.bf16.xpose.msra.mxu0 0
    %552 = vmatprep.subr.bf16.mxu0 0
    %553 = vmatpush1.bf16.xpose.msra.mxu0 0
    %554 = vmatprep.subr.bf16.mxu0 0
    %555 = vmatpush1.bf16.xpose.msra.mxu0 0
    %556 = vmatprep.subr.bf16.mxu0 0
    %557 = vmatpush1.bf16.xpose.msra.mxu0 0
    %558 = vmatprep.subr.bf16.mxu0 0
    %559 = vmatpush1.bf16.xpose.msra.mxu0 0
    %560 = vmatprep.subr.bf16.mxu0 0
    %561 = vmatpush1.bf16.xpose.msra.mxu0 0
    %562 = vmatprep.subr.bf16.mxu0 0
    %563 = vmatpush1.bf16.xpose.msra.mxu0 0
    %564 = vmatprep.subr.bf16.mxu0 0
    %565 = vmatpush1.bf16.xpose.msra.mxu0 0
    %566 = vmatprep.subr.bf16.mxu0 0
    %567 = vmatpush1.bf16.xpose.msra.mxu0 0
    %568 = vmatprep.subr.bf16.mxu0 0
    %569 = vmatpush1.bf16.xpose.msra.mxu0 0
    %570 = vmatprep.subr.bf16.mxu0 0
    %571 = vmatpush1.bf16.xpose.msra.mxu0 0
    %572 = vmatprep.subr.bf16.mxu0 0
    %573 = vmatpush1.bf16.xpose.msra.mxu0 0
    %574 = vmatprep.subr.bf16.mxu0 0
    %575 = vmatpush1.bf16.xpose.msra.mxu0 0
    %576 = vmatprep.subr.bf16.mxu0 0
    %577 = vmatpush1.bf16.xpose.msra.mxu0 0
    %578 = vmatprep.mubr.bf16.mxu0 0
    %579 = vmatmul.mubr.bf16.gmra.mrb[0].mxu0 %v541
    %v580 = vpop.f32.mrb[0].mxu0
    %v581 = vadd.f32 %v229, %v580
    %v582 = vpop.f32.mrb[0].mxu0
    %v583 = vpop.f32.mrb[0].mxu0
    %v584 = vpop.f32.mrb[0].mxu0
    %585 = vdwg.mxu0
    %587 = vrot.lane.b32.xlu0 %v193, 96
    %v588 = vpop.permute.xlu0 %587
    %v590 = vsel %vm245, %v193, 0
    %v593 = vsel %vm245, %v588, 0
    %595 = vmatprep.subr.bf16.mxu0 0
    %596 = vmatpush1.bf16.xpose.msra.mxu0 %v593
    %597 = vmatprep.subr.bf16.mxu0 0
    %598 = vmatpush1.bf16.xpose.msra.mxu0 0
    %599 = vmatprep.subr.bf16.mxu0 0
    %600 = vmatpush1.bf16.xpose.msra.mxu0 0
    %601 = vmatprep.subr.bf16.mxu0 0
    %602 = vmatpush1.bf16.xpose.msra.mxu0 0
    %603 = vmatprep.subr.bf16.mxu0 0
    %604 = vmatpush1.bf16.xpose.msra.mxu0 0
    %605 = vmatprep.subr.bf16.mxu0 0
    %606 = vmatpush1.bf16.xpose.msra.mxu0 0
    %607 = vmatprep.subr.bf16.mxu0 0
    %608 = vmatpush1.bf16.xpose.msra.mxu0 0
    %609 = vmatprep.subr.bf16.mxu0 0
    %610 = vmatpush1.bf16.xpose.msra.mxu0 0
    %611 = vmatprep.subr.bf16.mxu0 0
    %612 = vmatpush1.bf16.xpose.msra.mxu0 0
    %613 = vmatprep.subr.bf16.mxu0 0
    %614 = vmatpush1.bf16.xpose.msra.mxu0 0
    %615 = vmatprep.subr.bf16.mxu0 0
    %616 = vmatpush1.bf16.xpose.msra.mxu0 0
    %617 = vmatprep.subr.bf16.mxu0 0
    %618 = vmatpush1.bf16.xpose.msra.mxu0 0
    %619 = vmatprep.subr.bf16.mxu0 0
    %620 = vmatpush1.bf16.xpose.msra.mxu0 0
    %621 = vmatprep.subr.bf16.mxu0 0
    %622 = vmatpush1.bf16.xpose.msra.mxu0 0
    %623 = vmatprep.subr.bf16.mxu0 0
    %624 = vmatpush1.bf16.xpose.msra.mxu0 0
    %625 = vmatprep.subr.bf16.mxu0 0
    %626 = vmatpush1.bf16.xpose.msra.mxu0 0
    %627 = vmatprep.mubr.bf16.mxu0 0
    %628 = vmatmul.mubr.bf16.gmra.mrb[0].mxu0 %v590
    %v629 = vpop.f32.mrb[0].mxu0
    %v630 = vadd.f32 %v233, %v629
    %v631 = vpop.f32.mrb[0].mxu0
    %v632 = vpop.f32.mrb[0].mxu0
    %v633 = vpop.f32.mrb[0].mxu0
    %634 = vdwg.mxu0
    %v635 = vsel %vm245, %v287, -inf
    %636 = vmax.xlane.f32.xlu0 %v635
    %v637 = vpop.xlane.xlu0 %636
    %v638 = vsel %vm245, %v336, -inf
    %639 = vmax.xlane.f32.xlu0 %v638
    %v640 = vpop.xlane.xlu0 %639
    %v641 = vsel %vm245, %v385, -inf
    %642 = vmax.xlane.f32.xlu0 %v641
    %v643 = vpop.xlane.xlu0 %642
    %v644 = vsel %vm245, %v434, -inf
    %645 = vmax.xlane.f32.xlu0 %v644
    %v646 = vpop.xlane.xlu0 %645
    %v647 = vsel %vm245, %v483, -inf
    %648 = vmax.xlane.f32.xlu0 %v647
    %v649 = vpop.xlane.xlu0 %648
    %v650 = vsel %vm245, %v532, -inf
    %651 = vmax.xlane.f32.xlu0 %v650
    %v652 = vpop.xlane.xlu0 %651
    %v653 = vsel %vm245, %v581, -inf
    %654 = vmax.xlane.f32.xlu0 %v653
    %v655 = vpop.xlane.xlu0 %654
    %v656 = vsel %vm245, %v630, -inf
    %657 = vmax.xlane.f32.xlu0 %v656
    %v658 = vpop.xlane.xlu0 %657
    %v659 = vsub.f32 %v287, %v637
    %v660 = vsub.f32 %v336, %v640
    %v661 = vsub.f32 %v385, %v643
    %v662 = vsub.f32 %v434, %v646
    %v663 = vsub.f32 %v483, %v649
    %v664 = vsub.f32 %v532, %v652
    %v665 = vsub.f32 %v581, %v655
    %v666 = vsub.f32 %v630, %v658
    %v667 = vmul.f32 %v659, 1.442695
    %v668 = vpow.pop %v667
    %v669 = vmul.f32 %v660, 1.442695
    %v670 = vpow.pop %v669
    %v671 = vmul.f32 %v661, 1.442695
    %v672 = vpow.pop %v671
    %v673 = vmul.f32 %v662, 1.442695
    %v674 = vpow.pop %v673
    %v675 = vmul.f32 %v663, 1.442695
    %v676 = vpow.pop %v675
    %v677 = vmul.f32 %v664, 1.442695
    %v678 = vpow.pop %v677
    %v679 = vmul.f32 %v665, 1.442695
    %v680 = vpow.pop %v679
    %v681 = vmul.f32 %v666, 1.442695
    %v682 = vpow.pop %v681
    %v683 = vsel %vm245, %v668, 0.0
    %684 = vadd.xlane.f32.xlu0 %v683
    %v685 = vpop.xlane.xlu0 %684
    %v686 = vsel %vm245, %v670, 0.0
    %687 = vadd.xlane.f32.xlu0 %v686
    %v688 = vpop.xlane.xlu0 %687
    %v689 = vsel %vm245, %v672, 0.0
    %690 = vadd.xlane.f32.xlu0 %v689
    %v691 = vpop.xlane.xlu0 %690
    %v692 = vsel %vm245, %v674, 0.0
    %693 = vadd.xlane.f32.xlu0 %v692
    %v694 = vpop.xlane.xlu0 %693
    %v695 = vsel %vm245, %v676, 0.0
    %696 = vadd.xlane.f32.xlu0 %v695
    %v697 = vpop.xlane.xlu0 %696
    %v698 = vsel %vm245, %v678, 0.0
    %699 = vadd.xlane.f32.xlu0 %v698
    %v700 = vpop.xlane.xlu0 %699
    %v701 = vsel %vm245, %v680, 0.0
    %702 = vadd.xlane.f32.xlu0 %v701
    %v703 = vpop.xlane.xlu0 %702
    %v704 = vsel %vm245, %v682, 0.0
    %705 = vadd.xlane.f32.xlu0 %v704
    %v706 = vpop.xlane.xlu0 %705
    %v707 = vrcp.pop %v685
    %v708 = vrcp.pop %v688
    %v709 = vrcp.pop %v691
    %v710 = vrcp.pop %v694
    %v711 = vrcp.pop %v697
    %v712 = vrcp.pop %v700
    %v713 = vrcp.pop %v703
    %v714 = vrcp.pop %v706
    %v715 = vmul.f32 %v668, %v707
    %v716 = vmul.f32 %v670, %v708
    %v717 = vmul.f32 %v672, %v709
    %v718 = vmul.f32 %v674, %v710
    %v719 = vmul.f32 %v676, %v711
    %v720 = vmul.f32 %v678, %v712
    %v721 = vmul.f32 %v680, %v713
    %v722 = vmul.f32 %v682, %v714
    %v723 = vpack.c.bf16 %v715, %v715
    %v724 = vpack.c.bf16 %v716, %v716
    %v725 = vpack.c.bf16 %v717, %v717
    %v726 = vpack.c.bf16 %v718, %v718
    %v727 = vpack.c.bf16 %v719, %v719
    %v728 = vpack.c.bf16 %v720, %v720
    %v729 = vpack.c.bf16 %v721, %v721
    %v730 = vpack.c.bf16 %v722, %v722
    %731 = vrot.lane.b32.xlu0 %v186, 64
    %v732 = vpop.permute.xlu0 %731
    %v734 = vsel %vm245, %v723, 0
    %vm736 = vcmask 1043456
    %v738 = vsel %vm736, %v732, 0
    %740 = vmatprep.subr.bf16.mxu0 0
    %741 = vmatpush1.bf16.msra.mxu0 %v738
    %742 = vmatprep.subr.bf16.mxu0 0
    %743 = vmatpush1.bf16.msra.mxu0 0
    %744 = vmatprep.subr.bf16.mxu0 0
    %745 = vmatpush1.bf16.msra.mxu0 0
    %746 = vmatprep.subr.bf16.mxu0 0
    %747 = vmatpush1.bf16.msra.mxu0 0
    %748 = vmatprep.subr.bf16.mxu0 0
    %749 = vmatpush1.bf16.msra.mxu0 0
    %750 = vmatprep.subr.bf16.mxu0 0
    %751 = vmatpush1.bf16.msra.mxu0 0
    %752 = vmatprep.subr.bf16.mxu0 0
    %753 = vmatpush1.bf16.msra.mxu0 0
    %754 = vmatprep.subr.bf16.mxu0 0
    %755 = vmatpush1.bf16.msra.mxu0 0
    %756 = vmatprep.subr.bf16.mxu0 0
    %757 = vmatpush1.bf16.msra.mxu0 0
    %758 = vmatprep.subr.bf16.mxu0 0
    %759 = vmatpush1.bf16.msra.mxu0 0
    %760 = vmatprep.subr.bf16.mxu0 0
    %761 = vmatpush1.bf16.msra.mxu0 0
    %762 = vmatprep.subr.bf16.mxu0 0
    %763 = vmatpush1.bf16.msra.mxu0 0
    %764 = vmatprep.subr.bf16.mxu0 0
    %765 = vmatpush1.bf16.msra.mxu0 0
    %766 = vmatprep.subr.bf16.mxu0 0
    %767 = vmatpush1.bf16.msra.mxu0 0
    %768 = vmatprep.subr.bf16.mxu0 0
    %769 = vmatpush1.bf16.msra.mxu0 0
    %770 = vmatprep.subr.bf16.mxu0 0
    %771 = vmatpush1.bf16.msra.mxu0 0
    %772 = vmatprep.mubr.bf16.mxu0 0
    %773 = vmatmul.mubr.bf16.gmra.mrb[0].mxu0 %v734
    %v774 = vpop.f32.mrb[0].mxu0
    %v775 = vadd.f32 0.0, %v774
    %v776 = vpop.f32.mrb[0].mxu0
    %v777 = vpop.f32.mrb[0].mxu0
    %v778 = vpop.f32.mrb[0].mxu0
    %779 = vdwg.mxu0
    %780 = vrot.lane.b32.xlu0 %v187, 64
    %v781 = vpop.permute.xlu0 %780
    %v783 = vsel %vm245, %v724, 0
    %v786 = vsel %vm736, %v781, 0
    %788 = vmatprep.subr.bf16.mxu0 0
    %789 = vmatpush1.bf16.msra.mxu0 %v786
    %790 = vmatprep.subr.bf16.mxu0 0
    %791 = vmatpush1.bf16.msra.mxu0 0
    %792 = vmatprep.subr.bf16.mxu0 0
    %793 = vmatpush1.bf16.msra.mxu0 0
    %794 = vmatprep.subr.bf16.mxu0 0
    %795 = vmatpush1.bf16.msra.mxu0 0
    %796 = vmatprep.subr.bf16.mxu0 0
    %797 = vmatpush1.bf16.msra.mxu0 0
    %798 = vmatprep.subr.bf16.mxu0 0
    %799 = vmatpush1.bf16.msra.mxu0 0
    %800 = vmatprep.subr.bf16.mxu0 0
    %801 = vmatpush1.bf16.msra.mxu0 0
    %802 = vmatprep.subr.bf16.mxu0 0
    %803 = vmatpush1.bf16.msra.mxu0 0
    %804 = vmatprep.subr.bf16.mxu0 0
    %805 = vmatpush1.bf16.msra.mxu0 0
    %806 = vmatprep.subr.bf16.mxu0 0
    %807 = vmatpush1.bf16.msra.mxu0 0
    %808 = vmatprep.subr.bf16.mxu0 0
    %809 = vmatpush1.bf16.msra.mxu0 0
    %810 = vmatprep.subr.bf16.mxu0 0
    %811 = vmatpush1.bf16.msra.mxu0 0
    %812 = vmatprep.subr.bf16.mxu0 0
    %813 = vmatpush1.bf16.msra.mxu0 0
    %814 = vmatprep.subr.bf16.mxu0 0
    %815 = vmatpush1.bf16.msra.mxu0 0
    %816 = vmatprep.subr.bf16.mxu0 0
    %817 = vmatpush1.bf16.msra.mxu0 0
    %818 = vmatprep.subr.bf16.mxu0 0
    %819 = vmatpush1.bf16.msra.mxu0 0
    %820 = vmatprep.mubr.bf16.mxu0 0
    %821 = vmatmul.mubr.bf16.gmra.mrb[0].mxu0 %v783
    %v822 = vpop.f32.mrb[0].mxu0
    %v823 = vadd.f32 0.0, %v822
    %v824 = vpop.f32.mrb[0].mxu0
    %v825 = vpop.f32.mrb[0].mxu0
    %v826 = vpop.f32.mrb[0].mxu0
    %827 = vdwg.mxu0
    %828 = vrot.lane.b32.xlu0 %v188, 64
    %v829 = vpop.permute.xlu0 %828
    %v831 = vsel %vm245, %v725, 0
    %v834 = vsel %vm736, %v829, 0
    %836 = vmatprep.subr.bf16.mxu0 0
    %837 = vmatpush1.bf16.msra.mxu0 %v834
    %838 = vmatprep.subr.bf16.mxu0 0
    %839 = vmatpush1.bf16.msra.mxu0 0
    %840 = vmatprep.subr.bf16.mxu0 0
    %841 = vmatpush1.bf16.msra.mxu0 0
    %842 = vmatprep.subr.bf16.mxu0 0
    %843 = vmatpush1.bf16.msra.mxu0 0
    %844 = vmatprep.subr.bf16.mxu0 0
    %845 = vmatpush1.bf16.msra.mxu0 0
    %846 = vmatprep.subr.bf16.mxu0 0
    %847 = vmatpush1.bf16.msra.mxu0 0
    %848 = vmatprep.subr.bf16.mxu0 0
    %849 = vmatpush1.bf16.msra.mxu0 0
    %850 = vmatprep.subr.bf16.mxu0 0
    %851 = vmatpush1.bf16.msra.mxu0 0
    %852 = vmatprep.subr.bf16.mxu0 0
    %853 = vmatpush1.bf16.msra.mxu0 0
    %854 = vmatprep.subr.bf16.mxu0 0
    %855 = vmatpush1.bf16.msra.mxu0 0
    %856 = vmatprep.subr.bf16.mxu0 0
    %857 = vmatpush1.bf16.msra.mxu0 0
    %858 = vmatprep.subr.bf16.mxu0 0
    %859 = vmatpush1.bf16.msra.mxu0 0
    %860 = vmatprep.subr.bf16.mxu0 0
    %861 = vmatpush1.bf16.msra.mxu0 0
    %862 = vmatprep.subr.bf16.mxu0 0
    %863 = vmatpush1.bf16.msra.mxu0 0
    %864 = vmatprep.subr.bf16.mxu0 0
    %865 = vmatpush1.bf16.msra.mxu0 0
    %866 = vmatprep.subr.bf16.mxu0 0
    %867 = vmatpush1.bf16.msra.mxu0 0
    %868 = vmatprep.mubr.bf16.mxu0 0
    %869 = vmatmul.mubr.bf16.gmra.mrb[0].mxu0 %v831
    %v870 = vpop.f32.mrb[0].mxu0
    %v871 = vadd.f32 0.0, %v870
    %v872 = vpop.f32.mrb[0].mxu0
    %v873 = vpop.f32.mrb[0].mxu0
    %v874 = vpop.f32.mrb[0].mxu0
    %875 = vdwg.mxu0
    %876 = vrot.lane.b32.xlu0 %v189, 64
    %v877 = vpop.permute.xlu0 %876
    %v879 = vsel %vm245, %v726, 0
    %v882 = vsel %vm736, %v877, 0
    %884 = vmatprep.subr.bf16.mxu0 0
    %885 = vmatpush1.bf16.msra.mxu0 %v882
    %886 = vmatprep.subr.bf16.mxu0 0
    %887 = vmatpush1.bf16.msra.mxu0 0
    %888 = vmatprep.subr.bf16.mxu0 0
    %889 = vmatpush1.bf16.msra.mxu0 0
    %890 = vmatprep.subr.bf16.mxu0 0
    %891 = vmatpush1.bf16.msra.mxu0 0
    %892 = vmatprep.subr.bf16.mxu0 0
    %893 = vmatpush1.bf16.msra.mxu0 0
    %894 = vmatprep.subr.bf16.mxu0 0
    %895 = vmatpush1.bf16.msra.mxu0 0
    %896 = vmatprep.subr.bf16.mxu0 0
    %897 = vmatpush1.bf16.msra.mxu0 0
    %898 = vmatprep.subr.bf16.mxu0 0
    %899 = vmatpush1.bf16.msra.mxu0 0
    %900 = vmatprep.subr.bf16.mxu0 0
    %901 = vmatpush1.bf16.msra.mxu0 0
    %902 = vmatprep.subr.bf16.mxu0 0
    %903 = vmatpush1.bf16.msra.mxu0 0
    %904 = vmatprep.subr.bf16.mxu0 0
    %905 = vmatpush1.bf16.msra.mxu0 0
    %906 = vmatprep.subr.bf16.mxu0 0
    %907 = vmatpush1.bf16.msra.mxu0 0
    %908 = vmatprep.subr.bf16.mxu0 0
    %909 = vmatpush1.bf16.msra.mxu0 0
    %910 = vmatprep.subr.bf16.mxu0 0
    %911 = vmatpush1.bf16.msra.mxu0 0
    %912 = vmatprep.subr.bf16.mxu0 0
    %913 = vmatpush1.bf16.msra.mxu0 0
    %914 = vmatprep.subr.bf16.mxu0 0
    %915 = vmatpush1.bf16.msra.mxu0 0
    %916 = vmatprep.mubr.bf16.mxu0 0
    %917 = vmatmul.mubr.bf16.gmra.mrb[0].mxu0 %v879
    %v918 = vpop.f32.mrb[0].mxu0
    %v919 = vadd.f32 0.0, %v918
    %v920 = vpop.f32.mrb[0].mxu0
    %v921 = vpop.f32.mrb[0].mxu0
    %v922 = vpop.f32.mrb[0].mxu0
    %923 = vdwg.mxu0
    %924 = vrot.lane.b32.xlu0 %v190, 64
    %v925 = vpop.permute.xlu0 %924
    %v927 = vsel %vm245, %v727, 0
    %v930 = vsel %vm736, %v925, 0
    %932 = vmatprep.subr.bf16.mxu0 0
    %933 = vmatpush1.bf16.msra.mxu0 %v930
    %934 = vmatprep.subr.bf16.mxu0 0
    %935 = vmatpush1.bf16.msra.mxu0 0
    %936 = vmatprep.subr.bf16.mxu0 0
    %937 = vmatpush1.bf16.msra.mxu0 0
    %938 = vmatprep.subr.bf16.mxu0 0
    %939 = vmatpush1.bf16.msra.mxu0 0
    %940 = vmatprep.subr.bf16.mxu0 0
    %941 = vmatpush1.bf16.msra.mxu0 0
    %942 = vmatprep.subr.bf16.mxu0 0
    %943 = vmatpush1.bf16.msra.mxu0 0
    %944 = vmatprep.subr.bf16.mxu0 0
    %945 = vmatpush1.bf16.msra.mxu0 0
    %946 = vmatprep.subr.bf16.mxu0 0
    %947 = vmatpush1.bf16.msra.mxu0 0
    %948 = vmatprep.subr.bf16.mxu0 0
    %949 = vmatpush1.bf16.msra.mxu0 0
    %950 = vmatprep.subr.bf16.mxu0 0
    %951 = vmatpush1.bf16.msra.mxu0 0
    %952 = vmatprep.subr.bf16.mxu0 0
    %953 = vmatpush1.bf16.msra.mxu0 0
    %954 = vmatprep.subr.bf16.mxu0 0
    %955 = vmatpush1.bf16.msra.mxu0 0
    %956 = vmatprep.subr.bf16.mxu0 0
    %957 = vmatpush1.bf16.msra.mxu0 0
    %958 = vmatprep.subr.bf16.mxu0 0
    %959 = vmatpush1.bf16.msra.mxu0 0
    %960 = vmatprep.subr.bf16.mxu0 0
    %961 = vmatpush1.bf16.msra.mxu0 0
    %962 = vmatprep.subr.bf16.mxu0 0
    %963 = vmatpush1.bf16.msra.mxu0 0
    %964 = vmatprep.mubr.bf16.mxu0 0
    %965 = vmatmul.mubr.bf16.gmra.mrb[0].mxu0 %v927
    %v966 = vpop.f32.mrb[0].mxu0
    %v967 = vadd.f32 0.0, %v966
    %v968 = vpop.f32.mrb[0].mxu0
    %v969 = vpop.f32.mrb[0].mxu0
    %v970 = vpop.f32.mrb[0].mxu0
    %971 = vdwg.mxu0
    %972 = vrot.lane.b32.xlu0 %v191, 64
    %v973 = vpop.permute.xlu0 %972
    %v975 = vsel %vm245, %v728, 0
    %v978 = vsel %vm736, %v973, 0
    %980 = vmatprep.subr.bf16.mxu0 0
    %981 = vmatpush1.bf16.msra.mxu0 %v978
    %982 = vmatprep.subr.bf16.mxu0 0
    %983 = vmatpush1.bf16.msra.mxu0 0
    %984 = vmatprep.subr.bf16.mxu0 0
    %985 = vmatpush1.bf16.msra.mxu0 0
    %986 = vmatprep.subr.bf16.mxu0 0
    %987 = vmatpush1.bf16.msra.mxu0 0
    %988 = vmatprep.subr.bf16.mxu0 0
    %989 = vmatpush1.bf16.msra.mxu0 0
    %990 = vmatprep.subr.bf16.mxu0 0
    %991 = vmatpush1.bf16.msra.mxu0 0
    %992 = vmatprep.subr.bf16.mxu0 0
    %993 = vmatpush1.bf16.msra.mxu0 0
    %994 = vmatprep.subr.bf16.mxu0 0
    %995 = vmatpush1.bf16.msra.mxu0 0
    %996 = vmatprep.subr.bf16.mxu0 0
    %997 = vmatpush1.bf16.msra.mxu0 0
    %998 = vmatprep.subr.bf16.mxu0 0
    %999 = vmatpush1.bf16.msra.mxu0 0
    %1000 = vmatprep.subr.bf16.mxu0 0
    %1001 = vmatpush1.bf16.msra.mxu0 0
    %1002 = vmatprep.subr.bf16.mxu0 0
    %1003 = vmatpush1.bf16.msra.mxu0 0
    %1004 = vmatprep.subr.bf16.mxu0 0
    %1005 = vmatpush1.bf16.msra.mxu0 0
    %1006 = vmatprep.subr.bf16.mxu0 0
    %1007 = vmatpush1.bf16.msra.mxu0 0
    %1008 = vmatprep.subr.bf16.mxu0 0
    %1009 = vmatpush1.bf16.msra.mxu0 0
    %1010 = vmatprep.subr.bf16.mxu0 0
    %1011 = vmatpush1.bf16.msra.mxu0 0
    %1012 = vmatprep.mubr.bf16.mxu0 0
    %1013 = vmatmul.mubr.bf16.gmra.mrb[0].mxu0 %v975
    %v1014 = vpop.f32.mrb[0].mxu0
    %v1015 = vadd.f32 0.0, %v1014
    %v1016 = vpop.f32.mrb[0].mxu0
    %v1017 = vpop.f32.mrb[0].mxu0
    %v1018 = vpop.f32.mrb[0].mxu0
    %1019 = vdwg.mxu0
    %1020 = vrot.lane.b32.xlu0 %v192, 64
    %v1021 = vpop.permute.xlu0 %1020
    %v1023 = vsel %vm245, %v729, 0
    %v1026 = vsel %vm736, %v1021, 0
    %1028 = vmatprep.subr.bf16.mxu0 0
    %1029 = vmatpush1.bf16.msra.mxu0 %v1026
    %1030 = vmatprep.subr.bf16.mxu0 0
    %1031 = vmatpush1.bf16.msra.mxu0 0
    %1032 = vmatprep.subr.bf16.mxu0 0
    %1033 = vmatpush1.bf16.msra.mxu0 0
    %1034 = vmatprep.subr.bf16.mxu0 0
    %1035 = vmatpush1.bf16.msra.mxu0 0
    %1036 = vmatprep.subr.bf16.mxu0 0
    %1037 = vmatpush1.bf16.msra.mxu0 0
    %1038 = vmatprep.subr.bf16.mxu0 0
    %1039 = vmatpush1.bf16.msra.mxu0 0
    %1040 = vmatprep.subr.bf16.mxu0 0
    %1041 = vmatpush1.bf16.msra.mxu0 0
    %1042 = vmatprep.subr.bf16.mxu0 0
    %1043 = vmatpush1.bf16.msra.mxu0 0
    %1044 = vmatprep.subr.bf16.mxu0 0
    %1045 = vmatpush1.bf16.msra.mxu0 0
    %1046 = vmatprep.subr.bf16.mxu0 0
    %1047 = vmatpush1.bf16.msra.mxu0 0
    %1048 = vmatprep.subr.bf16.mxu0 0
    %1049 = vmatpush1.bf16.msra.mxu0 0
    %1050 = vmatprep.subr.bf16.mxu0 0
    %1051 = vmatpush1.bf16.msra.mxu0 0
    %1052 = vmatprep.subr.bf16.mxu0 0
    %1053 = vmatpush1.bf16.msra.mxu0 0
    %1054 = vmatprep.subr.bf16.mxu0 0
    %1055 = vmatpush1.bf16.msra.mxu0 0
    %1056 = vmatprep.subr.bf16.mxu0 0
    %1057 = vmatpush1.bf16.msra.mxu0 0
    %1058 = vmatprep.subr.bf16.mxu0 0
    %1059 = vmatpush1.bf16.msra.mxu0 0
    %1060 = vmatprep.mubr.bf16.mxu0 0
    %1061 = vmatmul.mubr.bf16.gmra.mrb[0].mxu0 %v1023
    %v1062 = vpop.f32.mrb[0].mxu0
    %v1063 = vadd.f32 0.0, %v1062
    %v1064 = vpop.f32.mrb[0].mxu0
    %v1065 = vpop.f32.mrb[0].mxu0
    %v1066 = vpop.f32.mrb[0].mxu0
    %1067 = vdwg.mxu0
    %1068 = vrot.lane.b32.xlu0 %v193, 64
    %v1069 = vpop.permute.xlu0 %1068
    %v1071 = vsel %vm245, %v730, 0
    %v1074 = vsel %vm736, %v1069, 0
    %1076 = vmatprep.subr.bf16.mxu0 0
    %1077 = vmatpush1.bf16.msra.mxu0 %v1074
    %1078 = vmatprep.subr.bf16.mxu0 0
    %1079 = vmatpush1.bf16.msra.mxu0 0
    %1080 = vmatprep.subr.bf16.mxu0 0
    %1081 = vmatpush1.bf16.msra.mxu0 0
    %1082 = vmatprep.subr.bf16.mxu0 0
    %1083 = vmatpush1.bf16.msra.mxu0 0
    %1084 = vmatprep.subr.bf16.mxu0 0
    %1085 = vmatpush1.bf16.msra.mxu0 0
    %1086 = vmatprep.subr.bf16.mxu0 0
    %1087 = vmatpush1.bf16.msra.mxu0 0
    %1088 = vmatprep.subr.bf16.mxu0 0
    %1089 = vmatpush1.bf16.msra.mxu0 0
    %1090 = vmatprep.subr.bf16.mxu0 0
    %1091 = vmatpush1.bf16.msra.mxu0 0
    %1092 = vmatprep.subr.bf16.mxu0 0
    %1093 = vmatpush1.bf16.msra.mxu0 0
    %1094 = vmatprep.subr.bf16.mxu0 0
    %1095 = vmatpush1.bf16.msra.mxu0 0
    %1096 = vmatprep.subr.bf16.mxu0 0
    %1097 = vmatpush1.bf16.msra.mxu0 0
    %1098 = vmatprep.subr.bf16.mxu0 0
    %1099 = vmatpush1.bf16.msra.mxu0 0
    %1100 = vmatprep.subr.bf16.mxu0 0
    %1101 = vmatpush1.bf16.msra.mxu0 0
    %1102 = vmatprep.subr.bf16.mxu0 0
    %1103 = vmatpush1.bf16.msra.mxu0 0
    %1104 = vmatprep.subr.bf16.mxu0 0
    %1105 = vmatpush1.bf16.msra.mxu0 0
    %1106 = vmatprep.subr.bf16.mxu0 0
    %1107 = vmatpush1.bf16.msra.mxu0 0
    %1108 = vmatprep.mubr.bf16.mxu0 0
    %1109 = vmatmul.mubr.bf16.gmra.mrb[0].mxu0 %v1071
    %v1110 = vpop.f32.mrb[0].mxu0
    %v1111 = vadd.f32 0.0, %v1110
    %v1112 = vpop.f32.mrb[0].mxu0
    %v1113 = vpop.f32.mrb[0].mxu0
    %v1114 = vpop.f32.mrb[0].mxu0
    %1115 = vdwg.mxu0
    %1118 = vrot.lane.b32.xlu0 %v871, 8
    %v1119 = vpop.permute.xlu0 %1118
    %1120 = vrot.lane.b32.xlu0 %v919, 8
    %v1121 = vpop.permute.xlu0 %1120
    %1126 = vrot.lane.b32.xlu0 %v967, 16
    %v1127 = vpop.permute.xlu0 %1126
    %1128 = vrot.lane.b32.xlu0 %v1015, 16
    %v1129 = vpop.permute.xlu0 %1128
    %1134 = vrot.lane.b32.xlu0 %v1063, 24
    %v1135 = vpop.permute.xlu0 %1134
    %1136 = vrot.lane.b32.xlu0 %v1111, 24
    %v1137 = vpop.permute.xlu0 %1136
    %v1140 = vsel %vm245, %v775, %v1119
    %v1141 = vsel %vm245, %v823, %v1121
    %vm1142 = vcmask 130048
    %v1143 = vsel %vm1142, %v1140, %v1127
    %v1144 = vsel %vm1142, %v1141, %v1129
    %vm1145 = vcmask 195584
    %v1146 = vsel %vm1145, %v1143, %v1135
    %v1147 = vsel %vm1145, %v1144, %v1137
    %v1148 = vpack.c.bf16 %v1147, %v1146
    %v1149 = vld [vmem:[%s6] sm:$0xf]
    %v1150 = vld [vmem:[%s6 + $0x4] sm:$0xf]
    %v1151 = vld [vmem:[%s6 + $0x8] sm:$0xf]
    %v1152 = vld [vmem:[%s6 + $0xc] sm:$0xf]
    %v1157 = vunpack.c.l.b16 %v1149
    %v1158 = vunpack.c.l.b16 %v1150
    %v1159 = vunpack.c.l.b16 %v1151
    %v1160 = vunpack.c.l.b16 %v1152
    %v1161 = vpack.c.b16 %v1158, %v1157
    %v1162 = vpack.c.b16 %v1160, %v1159
    %v1166 = vsel %vm54, %v1148, 0
    %1168 = vmatprep.subr.bf16.mxu0 0
    %1169 = vmatpush1.bf16.msra.mxu0 %v1161
    %1170 = vmatprep.subr.bf16.mxu0 0
    %1171 = vmatpush1.bf16.msra.mxu0 %v1162
    %1172 = vmatprep.subr.bf16.mxu0 0
    %1173 = vmatpush1.bf16.msra.mxu0 0
    %1174 = vmatprep.subr.bf16.mxu0 0
    %1175 = vmatpush1.bf16.msra.mxu0 0
    %1176 = vmatprep.subr.bf16.mxu0 0
    %1177 = vmatpush1.bf16.msra.mxu0 0
    %1178 = vmatprep.subr.bf16.mxu0 0
    %1179 = vmatpush1.bf16.msra.mxu0 0
    %1180 = vmatprep.subr.bf16.mxu0 0
    %1181 = vmatpush1.bf16.msra.mxu0 0
    %1182 = vmatprep.subr.bf16.mxu0 0
    %1183 = vmatpush1.bf16.msra.mxu0 0
    %1184 = vmatprep.subr.bf16.mxu0 0
    %1185 = vmatpush1.bf16.msra.mxu0 0
    %1186 = vmatprep.subr.bf16.mxu0 0
    %1187 = vmatpush1.bf16.msra.mxu0 0
    %1188 = vmatprep.subr.bf16.mxu0 0
    %1189 = vmatpush1.bf16.msra.mxu0 0
    %1190 = vmatprep.subr.bf16.mxu0 0
    %1191 = vmatpush1.bf16.msra.mxu0 0
    %1192 = vmatprep.subr.bf16.mxu0 0
    %1193 = vmatpush1.bf16.msra.mxu0 0
    %1194 = vmatprep.subr.bf16.mxu0 0
    %1195 = vmatpush1.bf16.msra.mxu0 0
    %1196 = vmatprep.subr.bf16.mxu0 0
    %1197 = vmatpush1.bf16.msra.mxu0 0
    %1198 = vmatprep.subr.bf16.mxu0 0
    %1199 = vmatpush1.bf16.msra.mxu0 0
    %1200 = vmatprep.mubr.bf16.mxu0 0
    %1201 = vmatmul.mubr.bf16.gmra.mrb[0].mxu0 %v1166
    %v1202 = vpop.f32.mrb[0].mxu0
    %v1203 = vadd.f32 0.0, %v1202
    %v1204 = vpop.f32.mrb[0].mxu0
    %v1205 = vpop.f32.mrb[0].mxu0
    %v1206 = vadd.f32 0.0, %v1205
    %v1207 = vpop.f32.mrb[0].mxu0
    %1208 = vdwg.mxu0
    %v1209 = vld [vmem:[%s7] sm:$0x1]
    %s1210 = scalar_lea.vmem %s7, 1
    %v1211 = vld [vmem:[%s1210] sm:$0x1]
    %s1212 = scalar_lea.vmem %s7, 2
    %v1213 = vld [vmem:[%s1212] sm:$0x1]
    %s1214 = scalar_lea.vmem %s7, 3
    %v1215 = vld [vmem:[%s1214] sm:$0x1]
    %s1216 = scalar_lea.vmem %s7, 4
    %v1217 = vld [vmem:[%s1216] sm:$0x1]
    %s1218 = scalar_lea.vmem %s7, 5
    %v1219 = vld [vmem:[%s1218] sm:$0x1]
    %v1220 = vadd.f32 %v96, %v1203
    %v1221 = vadd.f32 %v97, %v1206
    %v1223 = vlaneseq
    %v1224 = vshrl.u32 %v1223, 7
    %v1225 = vsub.s32 0, %v1224
    %v1226 = vrot.slane %v1209, %v1225
    %v1228 = vadd.f32 %v1220, %v1226
    %v1229 = vadd.f32 %v1221, %v1226
    %v1230 = vsel %vm54, %v1228, 0.0
    %1231 = vadd.xlane.f32.xlu0 %v1230
    %v1232 = vpop.xlane.xlu0 %1231
    %v1233 = vsel %vm54, %v1229, 0.0
    %1234 = vadd.xlane.f32.xlu0 %v1233
    %v1235 = vpop.xlane.xlu0 %1234
    %v1236 = vmul.f32 %v1232, %v61
    %v1237 = vmul.f32 %v1235, %v61
    %v1238 = vsub.f32 %v1228, %v1236
    %v1239 = vsub.f32 %v1229, %v1237
    %v1240 = vmul.f32 %v1238, %v1238
    %v1241 = vmul.f32 %v1239, %v1239
    %v1242 = vsel %vm54, %v1240, 0.0
    %1243 = vadd.xlane.f32.xlu0 %v1242
    %v1244 = vpop.xlane.xlu0 %1243
    %v1245 = vsel %vm54, %v1241, 0.0
    %1246 = vadd.xlane.f32.xlu0 %v1245
    %v1247 = vpop.xlane.xlu0 %1246
    %v1248 = vmul.f32 %v1244, %v61
    %v1249 = vmul.f32 %v1247, %v61
    %v1250 = vadd.f32 %v1248, 1e-05
    %v1251 = vadd.f32 %v1249, 1e-05
    %v1252 = vrsqrt.pop %v1250
    %v1253 = vrsqrt.pop %v1251
    %v1254 = vmul.f32 %v1238, %v1252
    %v1255 = vmul.f32 %v1239, %v1253
    %v1257 = vlaneseq
    %v1258 = vshrl.u32 %v1257, 7
    %v1259 = vsub.s32 0, %v1258
    %v1260 = vrot.slane %v1211, %v1259
    %v1262 = vmul.f32 %v1254, %v1260
    %v1263 = vmul.f32 %v1255, %v1260
    %v1265 = vlaneseq
    %v1266 = vshrl.u32 %v1265, 7
    %v1267 = vsub.s32 0, %v1266
    %v1268 = vrot.slane %v1213, %v1267
    %v1270 = vadd.f32 %v1262, %v1268
    %v1271 = vadd.f32 %v1263, %v1268
    %v1272 = vpack.c.bf16 %v1271, %v1270
    %v1273 = vld [vmem:[%s8] sm:$0xf]
    %v1274 = vld [vmem:[%s8 + $0x4] sm:$0xf]
    %v1275 = vld [vmem:[%s8 + $0x8] sm:$0xf]
    %v1276 = vld [vmem:[%s8 + $0xc] sm:$0xf]
    %v1277 = vld [vmem:[%s9] sm:$0x1]
    %v1279 = vlaneseq
    %v1280 = vshrl.u32 %v1279, 7
    %v1281 = vsub.s32 0, %v1280
    %v1282 = vrot.slane %v1277, %v1281
    %v1288 = vunpack.c.l.b16 %v1273
    %v1289 = vunpack.c.l.b16 %v1274
    %v1290 = vunpack.c.l.b16 %v1275
    %v1291 = vunpack.c.l.b16 %v1276
    %v1292 = vpack.c.b16 %v1289, %v1288
    %v1293 = vpack.c.b16 %v1291, %v1290
    %v1297 = vsel %vm54, %v1272, 0
    %1299 = vmatprep.subr.bf16.mxu0 0
    %1300 = vmatpush1.bf16.msra.mxu0 %v1292
    %1301 = vmatprep.subr.bf16.mxu0 0
    %1302 = vmatpush1.bf16.msra.mxu0 %v1293
    %1303 = vmatprep.subr.bf16.mxu0 0
    %1304 = vmatpush1.bf16.msra.mxu0 0
    %1305 = vmatprep.subr.bf16.mxu0 0
    %1306 = vmatpush1.bf16.msra.mxu0 0
    %1307 = vmatprep.subr.bf16.mxu0 0
    %1308 = vmatpush1.bf16.msra.mxu0 0
    %1309 = vmatprep.subr.bf16.mxu0 0
    %1310 = vmatpush1.bf16.msra.mxu0 0
    %1311 = vmatprep.subr.bf16.mxu0 0
    %1312 = vmatpush1.bf16.msra.mxu0 0
    %1313 = vmatprep.subr.bf16.mxu0 0
    %1314 = vmatpush1.bf16.msra.mxu0 0
    %1315 = vmatprep.subr.bf16.mxu0 0
    %1316 = vmatpush1.bf16.msra.mxu0 0
    %1317 = vmatprep.subr.bf16.mxu0 0
    %1318 = vmatpush1.bf16.msra.mxu0 0
    %1319 = vmatprep.subr.bf16.mxu0 0
    %1320 = vmatpush1.bf16.msra.mxu0 0
    %1321 = vmatprep.subr.bf16.mxu0 0
    %1322 = vmatpush1.bf16.msra.mxu0 0
    %1323 = vmatprep.subr.bf16.mxu0 0
    %1324 = vmatpush1.bf16.msra.mxu0 0
    %1325 = vmatprep.subr.bf16.mxu0 0
    %1326 = vmatpush1.bf16.msra.mxu0 0
    %1327 = vmatprep.subr.bf16.mxu0 0
    %1328 = vmatpush1.bf16.msra.mxu0 0
    %1329 = vmatprep.subr.bf16.mxu0 0
    %1330 = vmatpush1.bf16.msra.mxu0 0
    %1331 = vmatprep.mubr.bf16.mxu0 0
    %1332 = vmatmul.mubr.bf16.gmra.mrb[0].mxu0 %v1297
    %v1333 = vpop.f32.mrb[0].mxu0
    %v1334 = vadd.f32 %v1282, %v1333
    %v1335 = vpop.f32.mrb[0].mxu0
    %v1336 = vpop.f32.mrb[0].mxu0
    %v1337 = vadd.f32 %v1282, %v1336
    %v1338 = vpop.f32.mrb[0].mxu0
    %1339 = vdwg.mxu0
    %v1340 = vmul.f32 %v1334, %v1334
    %v1341 = vmul.f32 %v1337, %v1337
    %v1342 = vmul.f32 %v1334, %v1340
    %v1343 = vmul.f32 %v1337, %v1341
    %v1344 = vmul.f32 %v1342, 0.044715
    %v1345 = vmul.f32 %v1343, 0.044715
    %v1346 = vadd.f32 %v1334, %v1344
    %v1347 = vadd.f32 %v1337, %v1345
    %v1348 = vmul.f32 %v1346, 0.7978846
    %v1349 = vmul.f32 %v1347, 0.7978846
    %v1350 = vtanh.pop %v1348
    %v1351 = vtanh.pop %v1349
    %v1352 = vadd.f32 %v1350, 1.0
    %v1353 = vadd.f32 %v1351, 1.0
    %v1354 = vmul.f32 %v1352, 0.5
    %v1355 = vmul.f32 %v1353, 0.5
    %v1356 = vmul.f32 %v1334, %v1354
    %v1357 = vmul.f32 %v1337, %v1355
    %v1358 = vpack.c.bf16 %v1357, %v1356
    %v1359 = vld [vmem:[%s10] sm:$0xf]
    %v1360 = vld [vmem:[%s10 + $0x4] sm:$0xf]
    %v1361 = vld [vmem:[%s10 + $0x8] sm:$0xf]
    %v1362 = vld [vmem:[%s10 + $0xc] sm:$0xf]
    %v1363 = vld [vmem:[%s10 + $0x10] sm:$0xf]
    %v1364 = vld [vmem:[%s10 + $0x14] sm:$0xf]
    %v1365 = vld [vmem:[%s10 + $0x18] sm:$0xf]
    %v1366 = vld [vmem:[%s10 + $0x1c] sm:$0xf]
    %v1368 = vlaneseq
    %v1369 = vshrl.u32 %v1368, 7
    %v1370 = vsub.s32 0, %v1369
    %v1371 = vrot.slane %v1215, %v1370
    %v1381 = vunpack.c.l.b16 %v1359
    %v1382 = vunpack.c.l.b16 %v1360
    %v1383 = vunpack.c.l.b16 %v1361
    %v1384 = vunpack.c.l.b16 %v1362
    %v1385 = vunpack.c.l.b16 %v1363
    %v1386 = vunpack.c.l.b16 %v1364
    %v1387 = vunpack.c.l.b16 %v1365
    %v1388 = vunpack.c.l.b16 %v1366
    %v1389 = vpack.c.b16 %v1382, %v1381
    %v1390 = vpack.c.b16 %v1384, %v1383
    %v1391 = vpack.c.b16 %v1386, %v1385
    %v1392 = vpack.c.b16 %v1388, %v1387
    %vm1397 = vcmask 523264
    %v1399 = vsel %vm1397, %v1358, 0
    %1401 = vmatprep.subr.bf16.mxu0 0
    %1402 = vmatpush1.bf16.msra.mxu0 %v1389
    %1403 = vmatprep.subr.bf16.mxu0 0
    %1404 = vmatpush1.bf16.msra.mxu0 %v1390
    %1405 = vmatprep.subr.bf16.mxu0 0
    %1406 = vmatpush1.bf16.msra.mxu0 %v1391
    %1407 = vmatprep.subr.bf16.mxu0 0
    %1408 = vmatpush1.bf16.msra.mxu0 %v1392
    %1409 = vmatprep.subr.bf16.mxu0 0
    %1410 = vmatpush1.bf16.msra.mxu0 0
    %1411 = vmatprep.subr.bf16.mxu0 0
    %1412 = vmatpush1.bf16.msra.mxu0 0
    %1413 = vmatprep.subr.bf16.mxu0 0
    %1414 = vmatpush1.bf16.msra.mxu0 0
    %1415 = vmatprep.subr.bf16.mxu0 0
    %1416 = vmatpush1.bf16.msra.mxu0 0
    %1417 = vmatprep.subr.bf16.mxu0 0
    %1418 = vmatpush1.bf16.msra.mxu0 0
    %1419 = vmatprep.subr.bf16.mxu0 0
    %1420 = vmatpush1.bf16.msra.mxu0 0
    %1421 = vmatprep.subr.bf16.mxu0 0
    %1422 = vmatpush1.bf16.msra.mxu0 0
    %1423 = vmatprep.subr.bf16.mxu0 0
    %1424 = vmatpush1.bf16.msra.mxu0 0
    %1425 = vmatprep.subr.bf16.mxu0 0
    %1426 = vmatpush1.bf16.msra.mxu0 0
    %1427 = vmatprep.subr.bf16.mxu0 0
    %1428 = vmatpush1.bf16.msra.mxu0 0
    %1429 = vmatprep.subr.bf16.mxu0 0
    %1430 = vmatpush1.bf16.msra.mxu0 0
    %1431 = vmatprep.subr.bf16.mxu0 0
    %1432 = vmatpush1.bf16.msra.mxu0 0
    %1433 = vmatprep.mubr.bf16.mxu0 0
    %1434 = vmatmul.mubr.bf16.gmra.mrb[0].mxu0 %v1399
    %v1435 = vpop.f32.mrb[0].mxu0
    %v1436 = vadd.f32 %v1371, %v1435
    %v1437 = vpop.f32.mrb[0].mxu0
    %v1438 = vpop.f32.mrb[0].mxu0
    %v1439 = vadd.f32 %v1371, %v1438
    %v1440 = vpop.f32.mrb[0].mxu0
    %1441 = vdwg.mxu0
    %v1442 = vadd.f32 %v1270, %v1436
    %v1443 = vadd.f32 %v1271, %v1439
    %v1444 = vsel %vm54, %v1442, 0.0
    %1445 = vadd.xlane.f32.xlu0 %v1444
    %v1446 = vpop.xlane.xlu0 %1445
    %v1447 = vsel %vm54, %v1443, 0.0
    %1448 = vadd.xlane.f32.xlu0 %v1447
    %v1449 = vpop.xlane.xlu0 %1448
    %v1450 = vmul.f32 %v1446, %v61
    %v1451 = vmul.f32 %v1449, %v61
    %v1452 = vsub.f32 %v1442, %v1450
    %v1453 = vsub.f32 %v1443, %v1451
    %v1454 = vmul.f32 %v1452, %v1452
    %v1455 = vmul.f32 %v1453, %v1453
    %v1456 = vsel %vm54, %v1454, 0.0
    %1457 = vadd.xlane.f32.xlu0 %v1456
    %v1458 = vpop.xlane.xlu0 %1457
    %v1459 = vsel %vm54, %v1455, 0.0
    %1460 = vadd.xlane.f32.xlu0 %v1459
    %v1461 = vpop.xlane.xlu0 %1460
    %v1462 = vmul.f32 %v1458, %v61
    %v1463 = vmul.f32 %v1461, %v61
    %v1464 = vadd.f32 %v1462, 1e-05
    %v1465 = vadd.f32 %v1463, 1e-05
    %v1466 = vrsqrt.pop %v1464
    %v1467 = vrsqrt.pop %v1465
    %v1468 = vmul.f32 %v1452, %v1466
    %v1469 = vmul.f32 %v1453, %v1467
    %v1471 = vlaneseq
    %v1472 = vshrl.u32 %v1471, 7
    %v1473 = vsub.s32 0, %v1472
    %v1474 = vrot.slane %v1217, %v1473
    %v1476 = vmul.f32 %v1468, %v1474
    %v1477 = vmul.f32 %v1469, %v1474
    %v1479 = vlaneseq
    %v1480 = vshrl.u32 %v1479, 7
    %v1481 = vsub.s32 0, %v1480
    %v1482 = vrot.slane %v1219, %v1481
    %v1484 = vadd.f32 %v1476, %v1482
    %v1485 = vadd.f32 %v1477, %v1482
    %v1486 = vpack.c.bf16 %v1485, %v1484
    %s1487 = scalar_lea.vmem %s4, 16
    %v1488 = vld [vmem:[%s1487] sm:$0xf]
    %v1489 = vld [vmem:[%s1487 + $0x4] sm:$0xf]
    %v1490 = vld [vmem:[%s1487 + $0x8] sm:$0xf]
    %v1491 = vld [vmem:[%s1487 + $0xc] sm:$0xf]
    %s1492 = scalar_lea.vmem %s5, 1
    %v1493 = vld [vmem:[%s1492] sm:$0x1]
    %v1495 = vlaneseq
    %v1496 = vshrl.u32 %v1495, 7
    %v1497 = vsub.s32 0, %v1496
    %v1498 = vrot.slane %v1493, %v1497
    %v1504 = vunpack.c.l.b16 %v1488
    %v1505 = vunpack.c.l.b16 %v1489
    %v1506 = vunpack.c.l.b16 %v1490
    %v1507 = vunpack.c.l.b16 %v1491
    %v1508 = vpack.c.b16 %v1505, %v1504
    %v1509 = vpack.c.b16 %v1507, %v1506
    %v1513 = vsel %vm54, %v1486, 0
    %1515 = vmatprep.subr.bf16.mxu0 0
    %1516 = vmatpush1.bf16.msra.mxu0 %v1508
    %1517 = vmatprep.subr.bf16.mxu0 0
    %1518 = vmatpush1.bf16.msra.mxu0 %v1509
    %1519 = vmatprep.subr.bf16.mxu0 0
    %1520 = vmatpush1.bf16.msra.mxu0 0
    %1521 = vmatprep.subr.bf16.mxu0 0
    %1522 = vmatpush1.bf16.msra.mxu0 0
    %1523 = vmatprep.subr.bf16.mxu0 0
    %1524 = vmatpush1.bf16.msra.mxu0 0
    %1525 = vmatprep.subr.bf16.mxu0 0
    %1526 = vmatpush1.bf16.msra.mxu0 0
    %1527 = vmatprep.subr.bf16.mxu0 0
    %1528 = vmatpush1.bf16.msra.mxu0 0
    %1529 = vmatprep.subr.bf16.mxu0 0
    %1530 = vmatpush1.bf16.msra.mxu0 0
    %1531 = vmatprep.subr.bf16.mxu0 0
    %1532 = vmatpush1.bf16.msra.mxu0 0
    %1533 = vmatprep.subr.bf16.mxu0 0
    %1534 = vmatpush1.bf16.msra.mxu0 0
    %1535 = vmatprep.subr.bf16.mxu0 0
    %1536 = vmatpush1.bf16.msra.mxu0 0
    %1537 = vmatprep.subr.bf16.mxu0 0
    %1538 = vmatpush1.bf16.msra.mxu0 0
    %1539 = vmatprep.subr.bf16.mxu0 0
    %1540 = vmatpush1.bf16.msra.mxu0 0
    %1541 = vmatprep.subr.bf16.mxu0 0
    %1542 = vmatpush1.bf16.msra.mxu0 0
    %1543 = vmatprep.subr.bf16.mxu0 0
    %1544 = vmatpush1.bf16.msra.mxu0 0
    %1545 = vmatprep.subr.bf16.mxu0 0
    %1546 = vmatpush1.bf16.msra.mxu0 0
    %1547 = vmatprep.mubr.bf16.mxu0 0
    %1548 = vmatmul.mubr.bf16.gmra.mrb[0].mxu0 %v1513
    %v1549 = vpop.f32.mrb[0].mxu0
    %v1550 = vadd.f32 %v1498, %v1549
    %v1551 = vpop.f32.mrb[0].mxu0
    %v1552 = vpop.f32.mrb[0].mxu0
    %v1553 = vadd.f32 %v1498, %v1552
    %v1554 = vpop.f32.mrb[0].mxu0
    %1555 = vdwg.mxu0
    %1558 = vrot.lane.b32.xlu0 %v1550, 120
    %v1559 = vpop.permute.xlu0 %1558
    %1560 = vrot.lane.b32.xlu0 %v1553, 120
    %v1561 = vpop.permute.xlu0 %1560
    %1564 = vrot.lane.b32.xlu0 %v1550, 112
    %v1565 = vpop.permute.xlu0 %1564
    %1566 = vrot.lane.b32.xlu0 %v1553, 112
    %v1567 = vpop.permute.xlu0 %1566
    %1570 = vrot.lane.b32.xlu0 %v1550, 104
    %v1571 = vpop.permute.xlu0 %1570
    %1572 = vrot.lane.b32.xlu0 %v1553, 104
    %v1573 = vpop.permute.xlu0 %1572
    %v1576 = vpack.c.bf16 %v1550, %v1550
    %v1577 = vpack.c.bf16 %v1553, %v1553
    %v1578 = vpack.c.bf16 %v1559, %v1559
    %v1579 = vpack.c.bf16 %v1561, %v1561
    %v1580 = vpack.c.bf16 %v1565, %v1565
    %v1581 = vpack.c.bf16 %v1567, %v1567
    %v1582 = vpack.c.bf16 %v1571, %v1571
    %v1583 = vpack.c.bf16 %v1573, %v1573
    %1585 = vrot.lane.b32.xlu0 %v1576, 96
    %v1586 = vpop.permute.xlu0 %1585
    %v1588 = vsel %vm245, %v1576, 0
    %v1591 = vsel %vm245, %v1586, 0
    %1593 = vmatprep.subr.bf16.mxu0 0
    %1594 = vmatpush1.bf16.xpose.msra.mxu0 %v1591
    %1595 = vmatprep.subr.bf16.mxu0 0
    %1596 = vmatpush1.bf16.xpose.msra.mxu0 0
    %1597 = vmatprep.subr.bf16.mxu0 0
    %1598 = vmatpush1.bf16.xpose.msra.mxu0 0
    %1599 = vmatprep.subr.bf16.mxu0 0
    %1600 = vmatpush1.bf16.xpose.msra.mxu0 0
    %1601 = vmatprep.subr.bf16.mxu0 0
    %1602 = vmatpush1.bf16.xpose.msra.mxu0 0
    %1603 = vmatprep.subr.bf16.mxu0 0
    %1604 = vmatpush1.bf16.xpose.msra.mxu0 0
    %1605 = vmatprep.subr.bf16.mxu0 0
    %1606 = vmatpush1.bf16.xpose.msra.mxu0 0
    %1607 = vmatprep.subr.bf16.mxu0 0
    %1608 = vmatpush1.bf16.xpose.msra.mxu0 0
    %1609 = vmatprep.subr.bf16.mxu0 0
    %1610 = vmatpush1.bf16.xpose.msra.mxu0 0
    %1611 = vmatprep.subr.bf16.mxu0 0
    %1612 = vmatpush1.bf16.xpose.msra.mxu0 0
    %1613 = vmatprep.subr.bf16.mxu0 0
    %1614 = vmatpush1.bf16.xpose.msra.mxu0 0
    %1615 = vmatprep.subr.bf16.mxu0 0
    %1616 = vmatpush1.bf16.xpose.msra.mxu0 0
    %1617 = vmatprep.subr.bf16.mxu0 0
    %1618 = vmatpush1.bf16.xpose.msra.mxu0 0
    %1619 = vmatprep.subr.bf16.mxu0 0
    %1620 = vmatpush1.bf16.xpose.msra.mxu0 0
    %1621 = vmatprep.subr.bf16.mxu0 0
    %1622 = vmatpush1.bf16.xpose.msra.mxu0 0
    %1623 = vmatprep.subr.bf16.mxu0 0
    %1624 = vmatpush1.bf16.xpose.msra.mxu0 0
    %1625 = vmatprep.mubr.bf16.mxu0 0
    %1626 = vmatmul.mubr.bf16.gmra.mrb[0].mxu0 %v1588
    %v1627 = vpop.f32.mrb[0].mxu0
    %v1628 = vadd.f32 %v205, %v1627
    %v1629 = vpop.f32.mrb[0].mxu0
    %v1630 = vpop.f32.mrb[0].mxu0
    %v1631 = vpop.f32.mrb[0].mxu0
    %1632 = vdwg.mxu0
    %1634 = vrot.lane.b32.xlu0 %v1577, 96
    %v1635 = vpop.permute.xlu0 %1634
    %v1637 = vsel %vm245, %v1577, 0
    %v1640 = vsel %vm245, %v1635, 0
    %1642 = vmatprep.subr.bf16.mxu0 0
    %1643 = vmatpush1.bf16.xpose.msra.mxu0 %v1640
    %1644 = vmatprep.subr.bf16.mxu0 0
    %1645 = vmatpush1.bf16.xpose.msra.mxu0 0
    %1646 = vmatprep.subr.bf16.mxu0 0
    %1647 = vmatpush1.bf16.xpose.msra.mxu0 0
    %1648 = vmatprep.subr.bf16.mxu0 0
    %1649 = vmatpush1.bf16.xpose.msra.mxu0 0
    %1650 = vmatprep.subr.bf16.mxu0 0
    %1651 = vmatpush1.bf16.xpose.msra.mxu0 0
    %1652 = vmatprep.subr.bf16.mxu0 0
    %1653 = vmatpush1.bf16.xpose.msra.mxu0 0
    %1654 = vmatprep.subr.bf16.mxu0 0
    %1655 = vmatpush1.bf16.xpose.msra.mxu0 0
    %1656 = vmatprep.subr.bf16.mxu0 0
    %1657 = vmatpush1.bf16.xpose.msra.mxu0 0
    %1658 = vmatprep.subr.bf16.mxu0 0
    %1659 = vmatpush1.bf16.xpose.msra.mxu0 0
    %1660 = vmatprep.subr.bf16.mxu0 0
    %1661 = vmatpush1.bf16.xpose.msra.mxu0 0
    %1662 = vmatprep.subr.bf16.mxu0 0
    %1663 = vmatpush1.bf16.xpose.msra.mxu0 0
    %1664 = vmatprep.subr.bf16.mxu0 0
    %1665 = vmatpush1.bf16.xpose.msra.mxu0 0
    %1666 = vmatprep.subr.bf16.mxu0 0
    %1667 = vmatpush1.bf16.xpose.msra.mxu0 0
    %1668 = vmatprep.subr.bf16.mxu0 0
    %1669 = vmatpush1.bf16.xpose.msra.mxu0 0
    %1670 = vmatprep.subr.bf16.mxu0 0
    %1671 = vmatpush1.bf16.xpose.msra.mxu0 0
    %1672 = vmatprep.subr.bf16.mxu0 0
    %1673 = vmatpush1.bf16.xpose.msra.mxu0 0
    %1674 = vmatprep.mubr.bf16.mxu0 0
    %1675 = vmatmul.mubr.bf16.gmra.mrb[0].mxu0 %v1637
    %v1676 = vpop.f32.mrb[0].mxu0
    %v1677 = vadd.f32 %v209, %v1676
    %v1678 = vpop.f32.mrb[0].mxu0
    %v1679 = vpop.f32.mrb[0].mxu0
    %v1680 = vpop.f32.mrb[0].mxu0
    %1681 = vdwg.mxu0
    %1683 = vrot.lane.b32.xlu0 %v1578, 96
    %v1684 = vpop.permute.xlu0 %1683
    %v1686 = vsel %vm245, %v1578, 0
    %v1689 = vsel %vm245, %v1684, 0
    %1691 = vmatprep.subr.bf16.mxu0 0
    %1692 = vmatpush1.bf16.xpose.msra.mxu0 %v1689
    %1693 = vmatprep.subr.bf16.mxu0 0
    %1694 = vmatpush1.bf16.xpose.msra.mxu0 0
    %1695 = vmatprep.subr.bf16.mxu0 0
    %1696 = vmatpush1.bf16.xpose.msra.mxu0 0
    %1697 = vmatprep.subr.bf16.mxu0 0
    %1698 = vmatpush1.bf16.xpose.msra.mxu0 0
    %1699 = vmatprep.subr.bf16.mxu0 0
    %1700 = vmatpush1.bf16.xpose.msra.mxu0 0
    %1701 = vmatprep.subr.bf16.mxu0 0
    %1702 = vmatpush1.bf16.xpose.msra.mxu0 0
    %1703 = vmatprep.subr.bf16.mxu0 0
    %1704 = vmatpush1.bf16.xpose.msra.mxu0 0
    %1705 = vmatprep.subr.bf16.mxu0 0
    %1706 = vmatpush1.bf16.xpose.msra.mxu0 0
    %1707 = vmatprep.subr.bf16.mxu0 0
    %1708 = vmatpush1.bf16.xpose.msra.mxu0 0
    %1709 = vmatprep.subr.bf16.mxu0 0
    %1710 = vmatpush1.bf16.xpose.msra.mxu0 0
    %1711 = vmatprep.subr.bf16.mxu0 0
    %1712 = vmatpush1.bf16.xpose.msra.mxu0 0
    %1713 = vmatprep.subr.bf16.mxu0 0
    %1714 = vmatpush1.bf16.xpose.msra.mxu0 0
    %1715 = vmatprep.subr.bf16.mxu0 0
    %1716 = vmatpush1.bf16.xpose.msra.mxu0 0
    %1717 = vmatprep.subr.bf16.mxu0 0
    %1718 = vmatpush1.bf16.xpose.msra.mxu0 0
    %1719 = vmatprep.subr.bf16.mxu0 0
    %1720 = vmatpush1.bf16.xpose.msra.mxu0 0
    %1721 = vmatprep.subr.bf16.mxu0 0
    %1722 = vmatpush1.bf16.xpose.msra.mxu0 0
    %1723 = vmatprep.mubr.bf16.mxu0 0
    %1724 = vmatmul.mubr.bf16.gmra.mrb[0].mxu0 %v1686
    %v1725 = vpop.f32.mrb[0].mxu0
    %v1726 = vadd.f32 %v213, %v1725
    %v1727 = vpop.f32.mrb[0].mxu0
    %v1728 = vpop.f32.mrb[0].mxu0
    %v1729 = vpop.f32.mrb[0].mxu0
    %1730 = vdwg.mxu0
    %1732 = vrot.lane.b32.xlu0 %v1579, 96
    %v1733 = vpop.permute.xlu0 %1732
    %v1735 = vsel %vm245, %v1579, 0
    %v1738 = vsel %vm245, %v1733, 0
    %1740 = vmatprep.subr.bf16.mxu0 0
    %1741 = vmatpush1.bf16.xpose.msra.mxu0 %v1738
    %1742 = vmatprep.subr.bf16.mxu0 0
    %1743 = vmatpush1.bf16.xpose.msra.mxu0 0
    %1744 = vmatprep.subr.bf16.mxu0 0
    %1745 = vmatpush1.bf16.xpose.msra.mxu0 0
    %1746 = vmatprep.subr.bf16.mxu0 0
    %1747 = vmatpush1.bf16.xpose.msra.mxu0 0
    %1748 = vmatprep.subr.bf16.mxu0 0
    %1749 = vmatpush1.bf16.xpose.msra.mxu0 0
    %1750 = vmatprep.subr.bf16.mxu0 0
    %1751 = vmatpush1.bf16.xpose.msra.mxu0 0
    %1752 = vmatprep.subr.bf16.mxu0 0
    %1753 = vmatpush1.bf16.xpose.msra.mxu0 0
    %1754 = vmatprep.subr.bf16.mxu0 0
    %1755 = vmatpush1.bf16.xpose.msra.mxu0 0
    %1756 = vmatprep.subr.bf16.mxu0 0
    %1757 = vmatpush1.bf16.xpose.msra.mxu0 0
    %1758 = vmatprep.subr.bf16.mxu0 0
    %1759 = vmatpush1.bf16.xpose.msra.mxu0 0
    %1760 = vmatprep.subr.bf16.mxu0 0
    %1761 = vmatpush1.bf16.xpose.msra.mxu0 0
    %1762 = vmatprep.subr.bf16.mxu0 0
    %1763 = vmatpush1.bf16.xpose.msra.mxu0 0
    %1764 = vmatprep.subr.bf16.mxu0 0
    %1765 = vmatpush1.bf16.xpose.msra.mxu0 0
    %1766 = vmatprep.subr.bf16.mxu0 0
    %1767 = vmatpush1.bf16.xpose.msra.mxu0 0
    %1768 = vmatprep.subr.bf16.mxu0 0
    %1769 = vmatpush1.bf16.xpose.msra.mxu0 0
    %1770 = vmatprep.subr.bf16.mxu0 0
    %1771 = vmatpush1.bf16.xpose.msra.mxu0 0
    %1772 = vmatprep.mubr.bf16.mxu0 0
    %1773 = vmatmul.mubr.bf16.gmra.mrb[0].mxu0 %v1735
    %v1774 = vpop.f32.mrb[0].mxu0
    %v1775 = vadd.f32 %v217, %v1774
    %v1776 = vpop.f32.mrb[0].mxu0
    %v1777 = vpop.f32.mrb[0].mxu0
    %v1778 = vpop.f32.mrb[0].mxu0
    %1779 = vdwg.mxu0
    %1781 = vrot.lane.b32.xlu0 %v1580, 96
    %v1782 = vpop.permute.xlu0 %1781
    %v1784 = vsel %vm245, %v1580, 0
    %v1787 = vsel %vm245, %v1782, 0
    %1789 = vmatprep.subr.bf16.mxu0 0
    %1790 = vmatpush1.bf16.xpose.msra.mxu0 %v1787
    %1791 = vmatprep.subr.bf16.mxu0 0
    %1792 = vmatpush1.bf16.xpose.msra.mxu0 0
    %1793 = vmatprep.subr.bf16.mxu0 0
    %1794 = vmatpush1.bf16.xpose.msra.mxu0 0
    %1795 = vmatprep.subr.bf16.mxu0 0
    %1796 = vmatpush1.bf16.xpose.msra.mxu0 0
    %1797 = vmatprep.subr.bf16.mxu0 0
    %1798 = vmatpush1.bf16.xpose.msra.mxu0 0
    %1799 = vmatprep.subr.bf16.mxu0 0
    %1800 = vmatpush1.bf16.xpose.msra.mxu0 0
    %1801 = vmatprep.subr.bf16.mxu0 0
    %1802 = vmatpush1.bf16.xpose.msra.mxu0 0
    %1803 = vmatprep.subr.bf16.mxu0 0
    %1804 = vmatpush1.bf16.xpose.msra.mxu0 0
    %1805 = vmatprep.subr.bf16.mxu0 0
    %1806 = vmatpush1.bf16.xpose.msra.mxu0 0
    %1807 = vmatprep.subr.bf16.mxu0 0
    %1808 = vmatpush1.bf16.xpose.msra.mxu0 0
    %1809 = vmatprep.subr.bf16.mxu0 0
    %1810 = vmatpush1.bf16.xpose.msra.mxu0 0
    %1811 = vmatprep.subr.bf16.mxu0 0
    %1812 = vmatpush1.bf16.xpose.msra.mxu0 0
    %1813 = vmatprep.subr.bf16.mxu0 0
    %1814 = vmatpush1.bf16.xpose.msra.mxu0 0
    %1815 = vmatprep.subr.bf16.mxu0 0
    %1816 = vmatpush1.bf16.xpose.msra.mxu0 0
    %1817 = vmatprep.subr.bf16.mxu0 0
    %1818 = vmatpush1.bf16.xpose.msra.mxu0 0
    %1819 = vmatprep.subr.bf16.mxu0 0
    %1820 = vmatpush1.bf16.xpose.msra.mxu0 0
    %1821 = vmatprep.mubr.bf16.mxu0 0
    %1822 = vmatmul.mubr.bf16.gmra.mrb[0].mxu0 %v1784
    %v1823 = vpop.f32.mrb[0].mxu0
    %v1824 = vadd.f32 %v221, %v1823
    %v1825 = vpop.f32.mrb[0].mxu0
    %v1826 = vpop.f32.mrb[0].mxu0
    %v1827 = vpop.f32.mrb[0].mxu0
    %1828 = vdwg.mxu0
    %1830 = vrot.lane.b32.xlu0 %v1581, 96
    %v1831 = vpop.permute.xlu0 %1830
    %v1833 = vsel %vm245, %v1581, 0
    %v1836 = vsel %vm245, %v1831, 0
    %1838 = vmatprep.subr.bf16.mxu0 0
    %1839 = vmatpush1.bf16.xpose.msra.mxu0 %v1836
    %1840 = vmatprep.subr.bf16.mxu0 0
    %1841 = vmatpush1.bf16.xpose.msra.mxu0 0
    %1842 = vmatprep.subr.bf16.mxu0 0
    %1843 = vmatpush1.bf16.xpose.msra.mxu0 0
    %1844 = vmatprep.subr.bf16.mxu0 0
    %1845 = vmatpush1.bf16.xpose.msra.mxu0 0
    %1846 = vmatprep.subr.bf16.mxu0 0
    %1847 = vmatpush1.bf16.xpose.msra.mxu0 0
    %1848 = vmatprep.subr.bf16.mxu0 0
    %1849 = vmatpush1.bf16.xpose.msra.mxu0 0
    %1850 = vmatprep.subr.bf16.mxu0 0
    %1851 = vmatpush1.bf16.xpose.msra.mxu0 0
    %1852 = vmatprep.subr.bf16.mxu0 0
    %1853 = vmatpush1.bf16.xpose.msra.mxu0 0
    %1854 = vmatprep.subr.bf16.mxu0 0
    %1855 = vmatpush1.bf16.xpose.msra.mxu0 0
    %1856 = vmatprep.subr.bf16.mxu0 0
    %1857 = vmatpush1.bf16.xpose.msra.mxu0 0
    %1858 = vmatprep.subr.bf16.mxu0 0
    %1859 = vmatpush1.bf16.xpose.msra.mxu0 0
    %1860 = vmatprep.subr.bf16.mxu0 0
    %1861 = vmatpush1.bf16.xpose.msra.mxu0 0
    %1862 = vmatprep.subr.bf16.mxu0 0
    %1863 = vmatpush1.bf16.xpose.msra.mxu0 0
    %1864 = vmatprep.subr.bf16.mxu0 0
    %1865 = vmatpush1.bf16.xpose.msra.mxu0 0
    %1866 = vmatprep.subr.bf16.mxu0 0
    %1867 = vmatpush1.bf16.xpose.msra.mxu0 0
    %1868 = vmatprep.subr.bf16.mxu0 0
    %1869 = vmatpush1.bf16.xpose.msra.mxu0 0
    %1870 = vmatprep.mubr.bf16.mxu0 0
    %1871 = vmatmul.mubr.bf16.gmra.mrb[0].mxu0 %v1833
    %v1872 = vpop.f32.mrb[0].mxu0
    %v1873 = vadd.f32 %v225, %v1872
    %v1874 = vpop.f32.mrb[0].mxu0
    %v1875 = vpop.f32.mrb[0].mxu0
    %v1876 = vpop.f32.mrb[0].mxu0
    %1877 = vdwg.mxu0
    %1879 = vrot.lane.b32.xlu0 %v1582, 96
    %v1880 = vpop.permute.xlu0 %1879
    %v1882 = vsel %vm245, %v1582, 0
    %v1885 = vsel %vm245, %v1880, 0
    %1887 = vmatprep.subr.bf16.mxu0 0
    %1888 = vmatpush1.bf16.xpose.msra.mxu0 %v1885
    %1889 = vmatprep.subr.bf16.mxu0 0
    %1890 = vmatpush1.bf16.xpose.msra.mxu0 0
    %1891 = vmatprep.subr.bf16.mxu0 0
    %1892 = vmatpush1.bf16.xpose.msra.mxu0 0
    %1893 = vmatprep.subr.bf16.mxu0 0
    %1894 = vmatpush1.bf16.xpose.msra.mxu0 0
    %1895 = vmatprep.subr.bf16.mxu0 0
    %1896 = vmatpush1.bf16.xpose.msra.mxu0 0
    %1897 = vmatprep.subr.bf16.mxu0 0
    %1898 = vmatpush1.bf16.xpose.msra.mxu0 0
    %1899 = vmatprep.subr.bf16.mxu0 0
    %1900 = vmatpush1.bf16.xpose.msra.mxu0 0
    %1901 = vmatprep.subr.bf16.mxu0 0
    %1902 = vmatpush1.bf16.xpose.msra.mxu0 0
    %1903 = vmatprep.subr.bf16.mxu0 0
    %1904 = vmatpush1.bf16.xpose.msra.mxu0 0
    %1905 = vmatprep.subr.bf16.mxu0 0
    %1906 = vmatpush1.bf16.xpose.msra.mxu0 0
    %1907 = vmatprep.subr.bf16.mxu0 0
    %1908 = vmatpush1.bf16.xpose.msra.mxu0 0
    %1909 = vmatprep.subr.bf16.mxu0 0
    %1910 = vmatpush1.bf16.xpose.msra.mxu0 0
    %1911 = vmatprep.subr.bf16.mxu0 0
    %1912 = vmatpush1.bf16.xpose.msra.mxu0 0
    %1913 = vmatprep.subr.bf16.mxu0 0
    %1914 = vmatpush1.bf16.xpose.msra.mxu0 0
    %1915 = vmatprep.subr.bf16.mxu0 0
    %1916 = vmatpush1.bf16.xpose.msra.mxu0 0
    %1917 = vmatprep.subr.bf16.mxu0 0
    %1918 = vmatpush1.bf16.xpose.msra.mxu0 0
    %1919 = vmatprep.mubr.bf16.mxu0 0
    %1920 = vmatmul.mubr.bf16.gmra.mrb[0].mxu0 %v1882
    %v1921 = vpop.f32.mrb[0].mxu0
    %v1922 = vadd.f32 %v229, %v1921
    %v1923 = vpop.f32.mrb[0].mxu0
    %v1924 = vpop.f32.mrb[0].mxu0
    %v1925 = vpop.f32.mrb[0].mxu0
    %1926 = vdwg.mxu0
    %1928 = vrot.lane.b32.xlu0 %v1583, 96
    %v1929 = vpop.permute.xlu0 %1928
    %v1931 = vsel %vm245, %v1583, 0
    %v1934 = vsel %vm245, %v1929, 0
    %1936 = vmatprep.subr.bf16.mxu0 0
    %1937 = vmatpush1.bf16.xpose.msra.mxu0 %v1934
    %1938 = vmatprep.subr.bf16.mxu0 0
    %1939 = vmatpush1.bf16.xpose.msra.mxu0 0
    %1940 = vmatprep.subr.bf16.mxu0 0
    %1941 = vmatpush1.bf16.xpose.msra.mxu0 0
    %1942 = vmatprep.subr.bf16.mxu0 0
    %1943 = vmatpush1.bf16.xpose.msra.mxu0 0
    %1944 = vmatprep.subr.bf16.mxu0 0
    %1945 = vmatpush1.bf16.xpose.msra.mxu0 0
    %1946 = vmatprep.subr.bf16.mxu0 0
    %1947 = vmatpush1.bf16.xpose.msra.mxu0 0
    %1948 = vmatprep.subr.bf16.mxu0 0
    %1949 = vmatpush1.bf16.xpose.msra.mxu0 0
    %1950 = vmatprep.subr.bf16.mxu0 0
    %1951 = vmatpush1.bf16.xpose.msra.mxu0 0
    %1952 = vmatprep.subr.bf16.mxu0 0
    %1953 = vmatpush1.bf16.xpose.msra.mxu0 0
    %1954 = vmatprep.subr.bf16.mxu0 0
    %1955 = vmatpush1.bf16.xpose.msra.mxu0 0
    %1956 = vmatprep.subr.bf16.mxu0 0
    %1957 = vmatpush1.bf16.xpose.msra.mxu0 0
    %1958 = vmatprep.subr.bf16.mxu0 0
    %1959 = vmatpush1.bf16.xpose.msra.mxu0 0
    %1960 = vmatprep.subr.bf16.mxu0 0
    %1961 = vmatpush1.bf16.xpose.msra.mxu0 0
    %1962 = vmatprep.subr.bf16.mxu0 0
    %1963 = vmatpush1.bf16.xpose.msra.mxu0 0
    %1964 = vmatprep.subr.bf16.mxu0 0
    %1965 = vmatpush1.bf16.xpose.msra.mxu0 0
    %1966 = vmatprep.subr.bf16.mxu0 0
    %1967 = vmatpush1.bf16.xpose.msra.mxu0 0
    %1968 = vmatprep.mubr.bf16.mxu0 0
    %1969 = vmatmul.mubr.bf16.gmra.mrb[0].mxu0 %v1931
    %v1970 = vpop.f32.mrb[0].mxu0
    %v1971 = vadd.f32 %v233, %v1970
    %v1972 = vpop.f32.mrb[0].mxu0
    %v1973 = vpop.f32.mrb[0].mxu0
    %v1974 = vpop.f32.mrb[0].mxu0
    %1975 = vdwg.mxu0
    %v1976 = vsel %vm245, %v1628, -inf
    %1977 = vmax.xlane.f32.xlu0 %v1976
    %v1978 = vpop.xlane.xlu0 %1977
    %v1979 = vsel %vm245, %v1677, -inf
    %1980 = vmax.xlane.f32.xlu0 %v1979
    %v1981 = vpop.xlane.xlu0 %1980
    %v1982 = vsel %vm245, %v1726, -inf
    %1983 = vmax.xlane.f32.xlu0 %v1982
    %v1984 = vpop.xlane.xlu0 %1983
    %v1985 = vsel %vm245, %v1775, -inf
    %1986 = vmax.xlane.f32.xlu0 %v1985
    %v1987 = vpop.xlane.xlu0 %1986
    %v1988 = vsel %vm245, %v1824, -inf
    %1989 = vmax.xlane.f32.xlu0 %v1988
    %v1990 = vpop.xlane.xlu0 %1989
    %v1991 = vsel %vm245, %v1873, -inf
    %1992 = vmax.xlane.f32.xlu0 %v1991
    %v1993 = vpop.xlane.xlu0 %1992
    %v1994 = vsel %vm245, %v1922, -inf
    %1995 = vmax.xlane.f32.xlu0 %v1994
    %v1996 = vpop.xlane.xlu0 %1995
    %v1997 = vsel %vm245, %v1971, -inf
    %1998 = vmax.xlane.f32.xlu0 %v1997
    %v1999 = vpop.xlane.xlu0 %1998
    %v2000 = vsub.f32 %v1628, %v1978
    %v2001 = vsub.f32 %v1677, %v1981
    %v2002 = vsub.f32 %v1726, %v1984
    %v2003 = vsub.f32 %v1775, %v1987
    %v2004 = vsub.f32 %v1824, %v1990
    %v2005 = vsub.f32 %v1873, %v1993
    %v2006 = vsub.f32 %v1922, %v1996
    %v2007 = vsub.f32 %v1971, %v1999
    %v2008 = vmul.f32 %v2000, 1.442695
    %v2009 = vpow.pop %v2008
    %v2010 = vmul.f32 %v2001, 1.442695
    %v2011 = vpow.pop %v2010
    %v2012 = vmul.f32 %v2002, 1.442695
    %v2013 = vpow.pop %v2012
    %v2014 = vmul.f32 %v2003, 1.442695
    %v2015 = vpow.pop %v2014
    %v2016 = vmul.f32 %v2004, 1.442695
    %v2017 = vpow.pop %v2016
    %v2018 = vmul.f32 %v2005, 1.442695
    %v2019 = vpow.pop %v2018
    %v2020 = vmul.f32 %v2006, 1.442695
    %v2021 = vpow.pop %v2020
    %v2022 = vmul.f32 %v2007, 1.442695
    %v2023 = vpow.pop %v2022
    %v2024 = vsel %vm245, %v2009, 0.0
    %2025 = vadd.xlane.f32.xlu0 %v2024
    %v2026 = vpop.xlane.xlu0 %2025
    %v2027 = vsel %vm245, %v2011, 0.0
    %2028 = vadd.xlane.f32.xlu0 %v2027
    %v2029 = vpop.xlane.xlu0 %2028
    %v2030 = vsel %vm245, %v2013, 0.0
    %2031 = vadd.xlane.f32.xlu0 %v2030
    %v2032 = vpop.xlane.xlu0 %2031
    %v2033 = vsel %vm245, %v2015, 0.0
    %2034 = vadd.xlane.f32.xlu0 %v2033
    %v2035 = vpop.xlane.xlu0 %2034
    %v2036 = vsel %vm245, %v2017, 0.0
    %2037 = vadd.xlane.f32.xlu0 %v2036
    %v2038 = vpop.xlane.xlu0 %2037
    %v2039 = vsel %vm245, %v2019, 0.0
    %2040 = vadd.xlane.f32.xlu0 %v2039
    %v2041 = vpop.xlane.xlu0 %2040
    %v2042 = vsel %vm245, %v2021, 0.0
    %2043 = vadd.xlane.f32.xlu0 %v2042
    %v2044 = vpop.xlane.xlu0 %2043
    %v2045 = vsel %vm245, %v2023, 0.0
    %2046 = vadd.xlane.f32.xlu0 %v2045
    %v2047 = vpop.xlane.xlu0 %2046
    %v2048 = vrcp.pop %v2026
    %v2049 = vrcp.pop %v2029
    %v2050 = vrcp.pop %v2032
    %v2051 = vrcp.pop %v2035
    %v2052 = vrcp.pop %v2038
    %v2053 = vrcp.pop %v2041
    %v2054 = vrcp.pop %v2044
    %v2055 = vrcp.pop %v2047
    %v2056 = vmul.f32 %v2009, %v2048
    %v2057 = vmul.f32 %v2011, %v2049
    %v2058 = vmul.f32 %v2013, %v2050
    %v2059 = vmul.f32 %v2015, %v2051
    %v2060 = vmul.f32 %v2017, %v2052
    %v2061 = vmul.f32 %v2019, %v2053
    %v2062 = vmul.f32 %v2021, %v2054
    %v2063 = vmul.f32 %v2023, %v2055
    %v2064 = vpack.c.bf16 %v2056, %v2056
    %v2065 = vpack.c.bf16 %v2057, %v2057
    %v2066 = vpack.c.bf16 %v2058, %v2058
    %v2067 = vpack.c.bf16 %v2059, %v2059
    %v2068 = vpack.c.bf16 %v2060, %v2060
    %v2069 = vpack.c.bf16 %v2061, %v2061
    %v2070 = vpack.c.bf16 %v2062, %v2062
    %v2071 = vpack.c.bf16 %v2063, %v2063
    %2072 = vrot.lane.b32.xlu0 %v1576, 64
    %v2073 = vpop.permute.xlu0 %2072
    %v2075 = vsel %vm245, %v2064, 0
    %v2078 = vsel %vm736, %v2073, 0
    %2080 = vmatprep.subr.bf16.mxu0 0
    %2081 = vmatpush1.bf16.msra.mxu0 %v2078
    %2082 = vmatprep.subr.bf16.mxu0 0
    %2083 = vmatpush1.bf16.msra.mxu0 0
    %2084 = vmatprep.subr.bf16.mxu0 0
    %2085 = vmatpush1.bf16.msra.mxu0 0
    %2086 = vmatprep.subr.bf16.mxu0 0
    %2087 = vmatpush1.bf16.msra.mxu0 0
    %2088 = vmatprep.subr.bf16.mxu0 0
    %2089 = vmatpush1.bf16.msra.mxu0 0
    %2090 = vmatprep.subr.bf16.mxu0 0
    %2091 = vmatpush1.bf16.msra.mxu0 0
    %2092 = vmatprep.subr.bf16.mxu0 0
    %2093 = vmatpush1.bf16.msra.mxu0 0
    %2094 = vmatprep.subr.bf16.mxu0 0
    %2095 = vmatpush1.bf16.msra.mxu0 0
    %2096 = vmatprep.subr.bf16.mxu0 0
    %2097 = vmatpush1.bf16.msra.mxu0 0
    %2098 = vmatprep.subr.bf16.mxu0 0
    %2099 = vmatpush1.bf16.msra.mxu0 0
    %2100 = vmatprep.subr.bf16.mxu0 0
    %2101 = vmatpush1.bf16.msra.mxu0 0
    %2102 = vmatprep.subr.bf16.mxu0 0
    %2103 = vmatpush1.bf16.msra.mxu0 0
    %2104 = vmatprep.subr.bf16.mxu0 0
    %2105 = vmatpush1.bf16.msra.mxu0 0
    %2106 = vmatprep.subr.bf16.mxu0 0
    %2107 = vmatpush1.bf16.msra.mxu0 0
    %2108 = vmatprep.subr.bf16.mxu0 0
    %2109 = vmatpush1.bf16.msra.mxu0 0
    %2110 = vmatprep.subr.bf16.mxu0 0
    %2111 = vmatpush1.bf16.msra.mxu0 0
    %2112 = vmatprep.mubr.bf16.mxu0 0
    %2113 = vmatmul.mubr.bf16.gmra.mrb[0].mxu0 %v2075
    %v2114 = vpop.f32.mrb[0].mxu0
    %v2115 = vadd.f32 0.0, %v2114
    %v2116 = vpop.f32.mrb[0].mxu0
    %v2117 = vpop.f32.mrb[0].mxu0
    %v2118 = vpop.f32.mrb[0].mxu0
    %2119 = vdwg.mxu0
    %2120 = vrot.lane.b32.xlu0 %v1577, 64
    %v2121 = vpop.permute.xlu0 %2120
    %v2123 = vsel %vm245, %v2065, 0
    %v2126 = vsel %vm736, %v2121, 0
    %2128 = vmatprep.subr.bf16.mxu0 0
    %2129 = vmatpush1.bf16.msra.mxu0 %v2126
    %2130 = vmatprep.subr.bf16.mxu0 0
    %2131 = vmatpush1.bf16.msra.mxu0 0
    %2132 = vmatprep.subr.bf16.mxu0 0
    %2133 = vmatpush1.bf16.msra.mxu0 0
    %2134 = vmatprep.subr.bf16.mxu0 0
    %2135 = vmatpush1.bf16.msra.mxu0 0
    %2136 = vmatprep.subr.bf16.mxu0 0
    %2137 = vmatpush1.bf16.msra.mxu0 0
    %2138 = vmatprep.subr.bf16.mxu0 0
    %2139 = vmatpush1.bf16.msra.mxu0 0
    %2140 = vmatprep.subr.bf16.mxu0 0
    %2141 = vmatpush1.bf16.msra.mxu0 0
    %2142 = vmatprep.subr.bf16.mxu0 0
    %2143 = vmatpush1.bf16.msra.mxu0 0
    %2144 = vmatprep.subr.bf16.mxu0 0
    %2145 = vmatpush1.bf16.msra.mxu0 0
    %2146 = vmatprep.subr.bf16.mxu0 0
    %2147 = vmatpush1.bf16.msra.mxu0 0
    %2148 = vmatprep.subr.bf16.mxu0 0
    %2149 = vmatpush1.bf16.msra.mxu0 0
    %2150 = vmatprep.subr.bf16.mxu0 0
    %2151 = vmatpush1.bf16.msra.mxu0 0
    %2152 = vmatprep.subr.bf16.mxu0 0
    %2153 = vmatpush1.bf16.msra.mxu0 0
    %2154 = vmatprep.subr.bf16.mxu0 0
    %2155 = vmatpush1.bf16.msra.mxu0 0
    %2156 = vmatprep.subr.bf16.mxu0 0
    %2157 = vmatpush1.bf16.msra.mxu0 0
    %2158 = vmatprep.subr.bf16.mxu0 0
    %2159 = vmatpush1.bf16.msra.mxu0 0
    %2160 = vmatprep.mubr.bf16.mxu0 0
    %2161 = vmatmul.mubr.bf16.gmra.mrb[0].mxu0 %v2123
    %v2162 = vpop.f32.mrb[0].mxu0
    %v2163 = vadd.f32 0.0, %v2162
    %v2164 = vpop.f32.mrb[0].mxu0
    %v2165 = vpop.f32.mrb[0].mxu0
    %v2166 = vpop.f32.mrb[0].mxu0
    %2167 = vdwg.mxu0
    %2168 = vrot.lane.b32.xlu0 %v1578, 64
    %v2169 = vpop.permute.xlu0 %2168
    %v2171 = vsel %vm245, %v2066, 0
    %v2174 = vsel %vm736, %v2169, 0
    %2176 = vmatprep.subr.bf16.mxu0 0
    %2177 = vmatpush1.bf16.msra.mxu0 %v2174
    %2178 = vmatprep.subr.bf16.mxu0 0
    %2179 = vmatpush1.bf16.msra.mxu0 0
    %2180 = vmatprep.subr.bf16.mxu0 0
    %2181 = vmatpush1.bf16.msra.mxu0 0
    %2182 = vmatprep.subr.bf16.mxu0 0
    %2183 = vmatpush1.bf16.msra.mxu0 0
    %2184 = vmatprep.subr.bf16.mxu0 0
    %2185 = vmatpush1.bf16.msra.mxu0 0
    %2186 = vmatprep.subr.bf16.mxu0 0
    %2187 = vmatpush1.bf16.msra.mxu0 0
    %2188 = vmatprep.subr.bf16.mxu0 0
    %2189 = vmatpush1.bf16.msra.mxu0 0
    %2190 = vmatprep.subr.bf16.mxu0 0
    %2191 = vmatpush1.bf16.msra.mxu0 0
    %2192 = vmatprep.subr.bf16.mxu0 0
    %2193 = vmatpush1.bf16.msra.mxu0 0
    %2194 = vmatprep.subr.bf16.mxu0 0
    %2195 = vmatpush1.bf16.msra.mxu0 0
    %2196 = vmatprep.subr.bf16.mxu0 0
    %2197 = vmatpush1.bf16.msra.mxu0 0
    %2198 = vmatprep.subr.bf16.mxu0 0
    %2199 = vmatpush1.bf16.msra.mxu0 0
    %2200 = vmatprep.subr.bf16.mxu0 0
    %2201 = vmatpush1.bf16.msra.mxu0 0
    %2202 = vmatprep.subr.bf16.mxu0 0
    %2203 = vmatpush1.bf16.msra.mxu0 0
    %2204 = vmatprep.subr.bf16.mxu0 0
    %2205 = vmatpush1.bf16.msra.mxu0 0
    %2206 = vmatprep.subr.bf16.mxu0 0
    %2207 = vmatpush1.bf16.msra.mxu0 0
    %2208 = vmatprep.mubr.bf16.mxu0 0
    %2209 = vmatmul.mubr.bf16.gmra.mrb[0].mxu0 %v2171
    %v2210 = vpop.f32.mrb[0].mxu0
    %v2211 = vadd.f32 0.0, %v2210
    %v2212 = vpop.f32.mrb[0].mxu0
    %v2213 = vpop.f32.mrb[0].mxu0
    %v2214 = vpop.f32.mrb[0].mxu0
    %2215 = vdwg.mxu0
    %2216 = vrot.lane.b32.xlu0 %v1579, 64
    %v2217 = vpop.permute.xlu0 %2216
    %v2219 = vsel %vm245, %v2067, 0
    %v2222 = vsel %vm736, %v2217, 0
    %2224 = vmatprep.subr.bf16.mxu0 0
    %2225 = vmatpush1.bf16.msra.mxu0 %v2222
    %2226 = vmatprep.subr.bf16.mxu0 0
    %2227 = vmatpush1.bf16.msra.mxu0 0
    %2228 = vmatprep.subr.bf16.mxu0 0
    %2229 = vmatpush1.bf16.msra.mxu0 0
    %2230 = vmatprep.subr.bf16.mxu0 0
    %2231 = vmatpush1.bf16.msra.mxu0 0
    %2232 = vmatprep.subr.bf16.mxu0 0
    %2233 = vmatpush1.bf16.msra.mxu0 0
    %2234 = vmatprep.subr.bf16.mxu0 0
    %2235 = vmatpush1.bf16.msra.mxu0 0
    %2236 = vmatprep.subr.bf16.mxu0 0
    %2237 = vmatpush1.bf16.msra.mxu0 0
    %2238 = vmatprep.subr.bf16.mxu0 0
    %2239 = vmatpush1.bf16.msra.mxu0 0
    %2240 = vmatprep.subr.bf16.mxu0 0
    %2241 = vmatpush1.bf16.msra.mxu0 0
    %2242 = vmatprep.subr.bf16.mxu0 0
    %2243 = vmatpush1.bf16.msra.mxu0 0
    %2244 = vmatprep.subr.bf16.mxu0 0
    %2245 = vmatpush1.bf16.msra.mxu0 0
    %2246 = vmatprep.subr.bf16.mxu0 0
    %2247 = vmatpush1.bf16.msra.mxu0 0
    %2248 = vmatprep.subr.bf16.mxu0 0
    %2249 = vmatpush1.bf16.msra.mxu0 0
    %2250 = vmatprep.subr.bf16.mxu0 0
    %2251 = vmatpush1.bf16.msra.mxu0 0
    %2252 = vmatprep.subr.bf16.mxu0 0
    %2253 = vmatpush1.bf16.msra.mxu0 0
    %2254 = vmatprep.subr.bf16.mxu0 0
    %2255 = vmatpush1.bf16.msra.mxu0 0
    %2256 = vmatprep.mubr.bf16.mxu0 0
    %2257 = vmatmul.mubr.bf16.gmra.mrb[0].mxu0 %v2219
    %v2258 = vpop.f32.mrb[0].mxu0
    %v2259 = vadd.f32 0.0, %v2258
    %v2260 = vpop.f32.mrb[0].mxu0
    %v2261 = vpop.f32.mrb[0].mxu0
    %v2262 = vpop.f32.mrb[0].mxu0
    %2263 = vdwg.mxu0
    %2264 = vrot.lane.b32.xlu0 %v1580, 64
    %v2265 = vpop.permute.xlu0 %2264
    %v2267 = vsel %vm245, %v2068, 0
    %v2270 = vsel %vm736, %v2265, 0
    %2272 = vmatprep.subr.bf16.mxu0 0
    %2273 = vmatpush1.bf16.msra.mxu0 %v2270
    %2274 = vmatprep.subr.bf16.mxu0 0
    %2275 = vmatpush1.bf16.msra.mxu0 0
    %2276 = vmatprep.subr.bf16.mxu0 0
    %2277 = vmatpush1.bf16.msra.mxu0 0
    %2278 = vmatprep.subr.bf16.mxu0 0
    %2279 = vmatpush1.bf16.msra.mxu0 0
    %2280 = vmatprep.subr.bf16.mxu0 0
    %2281 = vmatpush1.bf16.msra.mxu0 0
    %2282 = vmatprep.subr.bf16.mxu0 0
    %2283 = vmatpush1.bf16.msra.mxu0 0
    %2284 = vmatprep.subr.bf16.mxu0 0
    %2285 = vmatpush1.bf16.msra.mxu0 0
    %2286 = vmatprep.subr.bf16.mxu0 0
    %2287 = vmatpush1.bf16.msra.mxu0 0
    %2288 = vmatprep.subr.bf16.mxu0 0
    %2289 = vmatpush1.bf16.msra.mxu0 0
    %2290 = vmatprep.subr.bf16.mxu0 0
    %2291 = vmatpush1.bf16.msra.mxu0 0
    %2292 = vmatprep.subr.bf16.mxu0 0
    %2293 = vmatpush1.bf16.msra.mxu0 0
    %2294 = vmatprep.subr.bf16.mxu0 0
    %2295 = vmatpush1.bf16.msra.mxu0 0
    %2296 = vmatprep.subr.bf16.mxu0 0
    %2297 = vmatpush1.bf16.msra.mxu0 0
    %2298 = vmatprep.subr.bf16.mxu0 0
    %2299 = vmatpush1.bf16.msra.mxu0 0
    %2300 = vmatprep.subr.bf16.mxu0 0
    %2301 = vmatpush1.bf16.msra.mxu0 0
    %2302 = vmatprep.subr.bf16.mxu0 0
    %2303 = vmatpush1.bf16.msra.mxu0 0
    %2304 = vmatprep.mubr.bf16.mxu0 0
    %2305 = vmatmul.mubr.bf16.gmra.mrb[0].mxu0 %v2267
    %v2306 = vpop.f32.mrb[0].mxu0
    %v2307 = vadd.f32 0.0, %v2306
    %v2308 = vpop.f32.mrb[0].mxu0
    %v2309 = vpop.f32.mrb[0].mxu0
    %v2310 = vpop.f32.mrb[0].mxu0
    %2311 = vdwg.mxu0
    %2312 = vrot.lane.b32.xlu0 %v1581, 64
    %v2313 = vpop.permute.xlu0 %2312
    %v2315 = vsel %vm245, %v2069, 0
    %v2318 = vsel %vm736, %v2313, 0
    %2320 = vmatprep.subr.bf16.mxu0 0
    %2321 = vmatpush1.bf16.msra.mxu0 %v2318
    %2322 = vmatprep.subr.bf16.mxu0 0
    %2323 = vmatpush1.bf16.msra.mxu0 0
    %2324 = vmatprep.subr.bf16.mxu0 0
    %2325 = vmatpush1.bf16.msra.mxu0 0
    %2326 = vmatprep.subr.bf16.mxu0 0
    %2327 = vmatpush1.bf16.msra.mxu0 0
    %2328 = vmatprep.subr.bf16.mxu0 0
    %2329 = vmatpush1.bf16.msra.mxu0 0
    %2330 = vmatprep.subr.bf16.mxu0 0
    %2331 = vmatpush1.bf16.msra.mxu0 0
    %2332 = vmatprep.subr.bf16.mxu0 0
    %2333 = vmatpush1.bf16.msra.mxu0 0
    %2334 = vmatprep.subr.bf16.mxu0 0
    %2335 = vmatpush1.bf16.msra.mxu0 0
    %2336 = vmatprep.subr.bf16.mxu0 0
    %2337 = vmatpush1.bf16.msra.mxu0 0
    %2338 = vmatprep.subr.bf16.mxu0 0
    %2339 = vmatpush1.bf16.msra.mxu0 0
    %2340 = vmatprep.subr.bf16.mxu0 0
    %2341 = vmatpush1.bf16.msra.mxu0 0
    %2342 = vmatprep.subr.bf16.mxu0 0
    %2343 = vmatpush1.bf16.msra.mxu0 0
    %2344 = vmatprep.subr.bf16.mxu0 0
    %2345 = vmatpush1.bf16.msra.mxu0 0
    %2346 = vmatprep.subr.bf16.mxu0 0
    %2347 = vmatpush1.bf16.msra.mxu0 0
    %2348 = vmatprep.subr.bf16.mxu0 0
    %2349 = vmatpush1.bf16.msra.mxu0 0
    %2350 = vmatprep.subr.bf16.mxu0 0
    %2351 = vmatpush1.bf16.msra.mxu0 0
    %2352 = vmatprep.mubr.bf16.mxu0 0
    %2353 = vmatmul.mubr.bf16.gmra.mrb[0].mxu0 %v2315
    %v2354 = vpop.f32.mrb[0].mxu0
    %v2355 = vadd.f32 0.0, %v2354
    %v2356 = vpop.f32.mrb[0].mxu0
    %v2357 = vpop.f32.mrb[0].mxu0
    %v2358 = vpop.f32.mrb[0].mxu0
    %2359 = vdwg.mxu0
    %2360 = vrot.lane.b32.xlu0 %v1582, 64
    %v2361 = vpop.permute.xlu0 %2360
    %v2363 = vsel %vm245, %v2070, 0
    %v2366 = vsel %vm736, %v2361, 0
    %2368 = vmatprep.subr.bf16.mxu0 0
    %2369 = vmatpush1.bf16.msra.mxu0 %v2366
    %2370 = vmatprep.subr.bf16.mxu0 0
    %2371 = vmatpush1.bf16.msra.mxu0 0
    %2372 = vmatprep.subr.bf16.mxu0 0
    %2373 = vmatpush1.bf16.msra.mxu0 0
    %2374 = vmatprep.subr.bf16.mxu0 0
    %2375 = vmatpush1.bf16.msra.mxu0 0
    %2376 = vmatprep.subr.bf16.mxu0 0
    %2377 = vmatpush1.bf16.msra.mxu0 0
    %2378 = vmatprep.subr.bf16.mxu0 0
    %2379 = vmatpush1.bf16.msra.mxu0 0
    %2380 = vmatprep.subr.bf16.mxu0 0
    %2381 = vmatpush1.bf16.msra.mxu0 0
    %2382 = vmatprep.subr.bf16.mxu0 0
    %2383 = vmatpush1.bf16.msra.mxu0 0
    %2384 = vmatprep.subr.bf16.mxu0 0
    %2385 = vmatpush1.bf16.msra.mxu0 0
    %2386 = vmatprep.subr.bf16.mxu0 0
    %2387 = vmatpush1.bf16.msra.mxu0 0
    %2388 = vmatprep.subr.bf16.mxu0 0
    %2389 = vmatpush1.bf16.msra.mxu0 0
    %2390 = vmatprep.subr.bf16.mxu0 0
    %2391 = vmatpush1.bf16.msra.mxu0 0
    %2392 = vmatprep.subr.bf16.mxu0 0
    %2393 = vmatpush1.bf16.msra.mxu0 0
    %2394 = vmatprep.subr.bf16.mxu0 0
    %2395 = vmatpush1.bf16.msra.mxu0 0
    %2396 = vmatprep.subr.bf16.mxu0 0
    %2397 = vmatpush1.bf16.msra.mxu0 0
    %2398 = vmatprep.subr.bf16.mxu0 0
    %2399 = vmatpush1.bf16.msra.mxu0 0
    %2400 = vmatprep.mubr.bf16.mxu0 0
    %2401 = vmatmul.mubr.bf16.gmra.mrb[0].mxu0 %v2363
    %v2402 = vpop.f32.mrb[0].mxu0
    %v2403 = vadd.f32 0.0, %v2402
    %v2404 = vpop.f32.mrb[0].mxu0
    %v2405 = vpop.f32.mrb[0].mxu0
    %v2406 = vpop.f32.mrb[0].mxu0
    %2407 = vdwg.mxu0
    %2408 = vrot.lane.b32.xlu0 %v1583, 64
    %v2409 = vpop.permute.xlu0 %2408
    %v2411 = vsel %vm245, %v2071, 0
    %v2414 = vsel %vm736, %v2409, 0
    %2416 = vmatprep.subr.bf16.mxu0 0
    %2417 = vmatpush1.bf16.msra.mxu0 %v2414
    %2418 = vmatprep.subr.bf16.mxu0 0
    %2419 = vmatpush1.bf16.msra.mxu0 0
    %2420 = vmatprep.subr.bf16.mxu0 0
    %2421 = vmatpush1.bf16.msra.mxu0 0
    %2422 = vmatprep.subr.bf16.mxu0 0
    %2423 = vmatpush1.bf16.msra.mxu0 0
    %2424 = vmatprep.subr.bf16.mxu0 0
    %2425 = vmatpush1.bf16.msra.mxu0 0
    %2426 = vmatprep.subr.bf16.mxu0 0
    %2427 = vmatpush1.bf16.msra.mxu0 0
    %2428 = vmatprep.subr.bf16.mxu0 0
    %2429 = vmatpush1.bf16.msra.mxu0 0
    %2430 = vmatprep.subr.bf16.mxu0 0
    %2431 = vmatpush1.bf16.msra.mxu0 0
    %2432 = vmatprep.subr.bf16.mxu0 0
    %2433 = vmatpush1.bf16.msra.mxu0 0
    %2434 = vmatprep.subr.bf16.mxu0 0
    %2435 = vmatpush1.bf16.msra.mxu0 0
    %2436 = vmatprep.subr.bf16.mxu0 0
    %2437 = vmatpush1.bf16.msra.mxu0 0
    %2438 = vmatprep.subr.bf16.mxu0 0
    %2439 = vmatpush1.bf16.msra.mxu0 0
    %2440 = vmatprep.subr.bf16.mxu0 0
    %2441 = vmatpush1.bf16.msra.mxu0 0
    %2442 = vmatprep.subr.bf16.mxu0 0
    %2443 = vmatpush1.bf16.msra.mxu0 0
    %2444 = vmatprep.subr.bf16.mxu0 0
    %2445 = vmatpush1.bf16.msra.mxu0 0
    %2446 = vmatprep.subr.bf16.mxu0 0
    %2447 = vmatpush1.bf16.msra.mxu0 0
    %2448 = vmatprep.mubr.bf16.mxu0 0
    %2449 = vmatmul.mubr.bf16.gmra.mrb[0].mxu0 %v2411
    %v2450 = vpop.f32.mrb[0].mxu0
    %v2451 = vadd.f32 0.0, %v2450
    %v2452 = vpop.f32.mrb[0].mxu0
    %v2453 = vpop.f32.mrb[0].mxu0
    %v2454 = vpop.f32.mrb[0].mxu0
    %2455 = vdwg.mxu0
    %2458 = vrot.lane.b32.xlu0 %v2211, 8
    %v2459 = vpop.permute.xlu0 %2458
    %2460 = vrot.lane.b32.xlu0 %v2259, 8
    %v2461 = vpop.permute.xlu0 %2460
    %2466 = vrot.lane.b32.xlu0 %v2307, 16
    %v2467 = vpop.permute.xlu0 %2466
    %2468 = vrot.lane.b32.xlu0 %v2355, 16
    %v2469 = vpop.permute.xlu0 %2468
    %2474 = vrot.lane.b32.xlu0 %v2403, 24
    %v2475 = vpop.permute.xlu0 %2474
    %2476 = vrot.lane.b32.xlu0 %v2451, 24
    %v2477 = vpop.permute.xlu0 %2476
    %v2480 = vsel %vm245, %v2115, %v2459
    %v2481 = vsel %vm245, %v2163, %v2461
    %v2482 = vsel %vm1142, %v2480, %v2467
    %v2483 = vsel %vm1142, %v2481, %v2469
    %v2484 = vsel %vm1145, %v2482, %v2475
    %v2485 = vsel %vm1145, %v2483, %v2477
    %v2486 = vpack.c.bf16 %v2485, %v2484
    %s2487 = scalar_lea.vmem %s6, 16
    %v2488 = vld [vmem:[%s2487] sm:$0xf]
    %v2489 = vld [vmem:[%s2487 + $0x4] sm:$0xf]
    %v2490 = vld [vmem:[%s2487 + $0x8] sm:$0xf]
    %v2491 = vld [vmem:[%s2487 + $0xc] sm:$0xf]
    %v2496 = vunpack.c.l.b16 %v2488
    %v2497 = vunpack.c.l.b16 %v2489
    %v2498 = vunpack.c.l.b16 %v2490
    %v2499 = vunpack.c.l.b16 %v2491
    %v2500 = vpack.c.b16 %v2497, %v2496
    %v2501 = vpack.c.b16 %v2499, %v2498
    %v2505 = vsel %vm54, %v2486, 0
    %2507 = vmatprep.subr.bf16.mxu0 0
    %2508 = vmatpush1.bf16.msra.mxu0 %v2500
    %2509 = vmatprep.subr.bf16.mxu0 0
    %2510 = vmatpush1.bf16.msra.mxu0 %v2501
    %2511 = vmatprep.subr.bf16.mxu0 0
    %2512 = vmatpush1.bf16.msra.mxu0 0
    %2513 = vmatprep.subr.bf16.mxu0 0
    %2514 = vmatpush1.bf16.msra.mxu0 0
    %2515 = vmatprep.subr.bf16.mxu0 0
    %2516 = vmatpush1.bf16.msra.mxu0 0
    %2517 = vmatprep.subr.bf16.mxu0 0
    %2518 = vmatpush1.bf16.msra.mxu0 0
    %2519 = vmatprep.subr.bf16.mxu0 0
    %2520 = vmatpush1.bf16.msra.mxu0 0
    %2521 = vmatprep.subr.bf16.mxu0 0
    %2522 = vmatpush1.bf16.msra.mxu0 0
    %2523 = vmatprep.subr.bf16.mxu0 0
    %2524 = vmatpush1.bf16.msra.mxu0 0
    %2525 = vmatprep.subr.bf16.mxu0 0
    %2526 = vmatpush1.bf16.msra.mxu0 0
    %2527 = vmatprep.subr.bf16.mxu0 0
    %2528 = vmatpush1.bf16.msra.mxu0 0
    %2529 = vmatprep.subr.bf16.mxu0 0
    %2530 = vmatpush1.bf16.msra.mxu0 0
    %2531 = vmatprep.subr.bf16.mxu0 0
    %2532 = vmatpush1.bf16.msra.mxu0 0
    %2533 = vmatprep.subr.bf16.mxu0 0
    %2534 = vmatpush1.bf16.msra.mxu0 0
    %2535 = vmatprep.subr.bf16.mxu0 0
    %2536 = vmatpush1.bf16.msra.mxu0 0
    %2537 = vmatprep.subr.bf16.mxu0 0
    %2538 = vmatpush1.bf16.msra.mxu0 0
    %2539 = vmatprep.mubr.bf16.mxu0 0
    %2540 = vmatmul.mubr.bf16.gmra.mrb[0].mxu0 %v2505
    %v2541 = vpop.f32.mrb[0].mxu0
    %v2542 = vadd.f32 0.0, %v2541
    %v2543 = vpop.f32.mrb[0].mxu0
    %v2544 = vpop.f32.mrb[0].mxu0
    %v2545 = vadd.f32 0.0, %v2544
    %v2546 = vpop.f32.mrb[0].mxu0
    %2547 = vdwg.mxu0
    %s2548 = scalar_lea.vmem %s7, 6
    %v2549 = vld [vmem:[%s2548] sm:$0x1]
    %s2550 = scalar_lea.vmem %s7, 7
    %v2551 = vld [vmem:[%s2550] sm:$0x1]
    %s2552 = scalar_lea.vmem %s7, 8
    %v2553 = vld [vmem:[%s2552] sm:$0x1]
    %s2554 = scalar_lea.vmem %s7, 9
    %v2555 = vld [vmem:[%s2554] sm:$0x1]
    %s2556 = scalar_lea.vmem %s7, 10
    %v2557 = vld [vmem:[%s2556] sm:$0x1]
    %s2558 = scalar_lea.vmem %s7, 11
    %v2559 = vld [vmem:[%s2558] sm:$0x1]
    %v2560 = vadd.f32 %v1484, %v2542
    %v2561 = vadd.f32 %v1485, %v2545
    %v2563 = vlaneseq
    %v2564 = vshrl.u32 %v2563, 7
    %v2565 = vsub.s32 0, %v2564
    %v2566 = vrot.slane %v2549, %v2565
    %v2568 = vadd.f32 %v2560, %v2566
    %v2569 = vadd.f32 %v2561, %v2566
    %v2570 = vsel %vm54, %v2568, 0.0
    %2571 = vadd.xlane.f32.xlu0 %v2570
    %v2572 = vpop.xlane.xlu0 %2571
    %v2573 = vsel %vm54, %v2569, 0.0
    %2574 = vadd.xlane.f32.xlu0 %v2573
    %v2575 = vpop.xlane.xlu0 %2574
    %v2576 = vmul.f32 %v2572, %v61
    %v2577 = vmul.f32 %v2575, %v61
    %v2578 = vsub.f32 %v2568, %v2576
    %v2579 = vsub.f32 %v2569, %v2577
    %v2580 = vmul.f32 %v2578, %v2578
    %v2581 = vmul.f32 %v2579, %v2579
    %v2582 = vsel %vm54, %v2580, 0.0
    %2583 = vadd.xlane.f32.xlu0 %v2582
    %v2584 = vpop.xlane.xlu0 %2583
    %v2585 = vsel %vm54, %v2581, 0.0
    %2586 = vadd.xlane.f32.xlu0 %v2585
    %v2587 = vpop.xlane.xlu0 %2586
    %v2588 = vmul.f32 %v2584, %v61
    %v2589 = vmul.f32 %v2587, %v61
    %v2590 = vadd.f32 %v2588, 1e-05
    %v2591 = vadd.f32 %v2589, 1e-05
    %v2592 = vrsqrt.pop %v2590
    %v2593 = vrsqrt.pop %v2591
    %v2594 = vmul.f32 %v2578, %v2592
    %v2595 = vmul.f32 %v2579, %v2593
    %v2597 = vlaneseq
    %v2598 = vshrl.u32 %v2597, 7
    %v2599 = vsub.s32 0, %v2598
    %v2600 = vrot.slane %v2551, %v2599
    %v2602 = vmul.f32 %v2594, %v2600
    %v2603 = vmul.f32 %v2595, %v2600
    %v2605 = vlaneseq
    %v2606 = vshrl.u32 %v2605, 7
    %v2607 = vsub.s32 0, %v2606
    %v2608 = vrot.slane %v2553, %v2607
    %v2610 = vadd.f32 %v2602, %v2608
    %v2611 = vadd.f32 %v2603, %v2608
    %v2612 = vpack.c.bf16 %v2611, %v2610
    %s2613 = scalar_lea.vmem %s8, 16
    %v2614 = vld [vmem:[%s2613] sm:$0xf]
    %v2615 = vld [vmem:[%s2613 + $0x4] sm:$0xf]
    %v2616 = vld [vmem:[%s2613 + $0x8] sm:$0xf]
    %v2617 = vld [vmem:[%s2613 + $0xc] sm:$0xf]
    %s2618 = scalar_lea.vmem %s9, 1
    %v2619 = vld [vmem:[%s2618] sm:$0x1]
    %v2621 = vlaneseq
    %v2622 = vshrl.u32 %v2621, 7
    %v2623 = vsub.s32 0, %v2622
    %v2624 = vrot.slane %v2619, %v2623
    %v2630 = vunpack.c.l.b16 %v2614
    %v2631 = vunpack.c.l.b16 %v2615
    %v2632 = vunpack.c.l.b16 %v2616
    %v2633 = vunpack.c.l.b16 %v2617
    %v2634 = vpack.c.b16 %v2631, %v2630
    %v2635 = vpack.c.b16 %v2633, %v2632
    %v2639 = vsel %vm54, %v2612, 0
    %2641 = vmatprep.subr.bf16.mxu0 0
    %2642 = vmatpush1.bf16.msra.mxu0 %v2634
    %2643 = vmatprep.subr.bf16.mxu0 0
    %2644 = vmatpush1.bf16.msra.mxu0 %v2635
    %2645 = vmatprep.subr.bf16.mxu0 0
    %2646 = vmatpush1.bf16.msra.mxu0 0
    %2647 = vmatprep.subr.bf16.mxu0 0
    %2648 = vmatpush1.bf16.msra.mxu0 0
    %2649 = vmatprep.subr.bf16.mxu0 0
    %2650 = vmatpush1.bf16.msra.mxu0 0
    %2651 = vmatprep.subr.bf16.mxu0 0
    %2652 = vmatpush1.bf16.msra.mxu0 0
    %2653 = vmatprep.subr.bf16.mxu0 0
    %2654 = vmatpush1.bf16.msra.mxu0 0
    %2655 = vmatprep.subr.bf16.mxu0 0
    %2656 = vmatpush1.bf16.msra.mxu0 0
    %2657 = vmatprep.subr.bf16.mxu0 0
    %2658 = vmatpush1.bf16.msra.mxu0 0
    %2659 = vmatprep.subr.bf16.mxu0 0
    %2660 = vmatpush1.bf16.msra.mxu0 0
    %2661 = vmatprep.subr.bf16.mxu0 0
    %2662 = vmatpush1.bf16.msra.mxu0 0
    %2663 = vmatprep.subr.bf16.mxu0 0
    %2664 = vmatpush1.bf16.msra.mxu0 0
    %2665 = vmatprep.subr.bf16.mxu0 0
    %2666 = vmatpush1.bf16.msra.mxu0 0
    %2667 = vmatprep.subr.bf16.mxu0 0
    %2668 = vmatpush1.bf16.msra.mxu0 0
    %2669 = vmatprep.subr.bf16.mxu0 0
    %2670 = vmatpush1.bf16.msra.mxu0 0
    %2671 = vmatprep.subr.bf16.mxu0 0
    %2672 = vmatpush1.bf16.msra.mxu0 0
    %2673 = vmatprep.mubr.bf16.mxu0 0
    %2674 = vmatmul.mubr.bf16.gmra.mrb[0].mxu0 %v2639
    %v2675 = vpop.f32.mrb[0].mxu0
    %v2676 = vadd.f32 %v2624, %v2675
    %v2677 = vpop.f32.mrb[0].mxu0
    %v2678 = vpop.f32.mrb[0].mxu0
    %v2679 = vadd.f32 %v2624, %v2678
    %v2680 = vpop.f32.mrb[0].mxu0
    %2681 = vdwg.mxu0
    %v2682 = vmul.f32 %v2676, %v2676
    %v2683 = vmul.f32 %v2679, %v2679
    %v2684 = vmul.f32 %v2676, %v2682
    %v2685 = vmul.f32 %v2679, %v2683
    %v2686 = vmul.f32 %v2684, 0.044715
    %v2687 = vmul.f32 %v2685, 0.044715
    %v2688 = vadd.f32 %v2676, %v2686
    %v2689 = vadd.f32 %v2679, %v2687
    %v2690 = vmul.f32 %v2688, 0.7978846
    %v2691 = vmul.f32 %v2689, 0.7978846
    %v2692 = vtanh.pop %v2690
    %v2693 = vtanh.pop %v2691
    %v2694 = vadd.f32 %v2692, 1.0
    %v2695 = vadd.f32 %v2693, 1.0
    %v2696 = vmul.f32 %v2694, 0.5
    %v2697 = vmul.f32 %v2695, 0.5
    %v2698 = vmul.f32 %v2676, %v2696
    %v2699 = vmul.f32 %v2679, %v2697
    %v2700 = vpack.c.bf16 %v2699, %v2698
    %s2701 = scalar_lea.vmem %s10, 32
    %v2702 = vld [vmem:[%s2701] sm:$0xf]
    %v2703 = vld [vmem:[%s2701 + $0x4] sm:$0xf]
    %v2704 = vld [vmem:[%s2701 + $0x8] sm:$0xf]
    %v2705 = vld [vmem:[%s2701 + $0xc] sm:$0xf]
    %v2706 = vld [vmem:[%s2701 + $0x10] sm:$0xf]
    %v2707 = vld [vmem:[%s2701 + $0x14] sm:$0xf]
    %v2708 = vld [vmem:[%s2701 + $0x18] sm:$0xf]
    %v2709 = vld [vmem:[%s2701 + $0x1c] sm:$0xf]
    %v2711 = vlaneseq
    %v2712 = vshrl.u32 %v2711, 7
    %v2713 = vsub.s32 0, %v2712
    %v2714 = vrot.slane %v2555, %v2713
    %v2724 = vunpack.c.l.b16 %v2702
    %v2725 = vunpack.c.l.b16 %v2703
    %v2726 = vunpack.c.l.b16 %v2704
    %v2727 = vunpack.c.l.b16 %v2705
    %v2728 = vunpack.c.l.b16 %v2706
    %v2729 = vunpack.c.l.b16 %v2707
    %v2730 = vunpack.c.l.b16 %v2708
    %v2731 = vunpack.c.l.b16 %v2709
    %v2732 = vpack.c.b16 %v2725, %v2724
    %v2733 = vpack.c.b16 %v2727, %v2726
    %v2734 = vpack.c.b16 %v2729, %v2728
    %v2735 = vpack.c.b16 %v2731, %v2730
    %v2741 = vsel %vm1397, %v2700, 0
    %2743 = vmatprep.subr.bf16.mxu0 0
    %2744 = vmatpush1.bf16.msra.mxu0 %v2732
    %2745 = vmatprep.subr.bf16.mxu0 0
    %2746 = vmatpush1.bf16.msra.mxu0 %v2733
    %2747 = vmatprep.subr.bf16.mxu0 0
    %2748 = vmatpush1.bf16.msra.mxu0 %v2734
    %2749 = vmatprep.subr.bf16.mxu0 0
    %2750 = vmatpush1.bf16.msra.mxu0 %v2735
    %2751 = vmatprep.subr.bf16.mxu0 0
    %2752 = vmatpush1.bf16.msra.mxu0 0
    %2753 = vmatprep.subr.bf16.mxu0 0
    %2754 = vmatpush1.bf16.msra.mxu0 0
    %2755 = vmatprep.subr.bf16.mxu0 0
    %2756 = vmatpush1.bf16.msra.mxu0 0
    %2757 = vmatprep.subr.bf16.mxu0 0
    %2758 = vmatpush1.bf16.msra.mxu0 0
    %2759 = vmatprep.subr.bf16.mxu0 0
    %2760 = vmatpush1.bf16.msra.mxu0 0
    %2761 = vmatprep.subr.bf16.mxu0 0
    %2762 = vmatpush1.bf16.msra.mxu0 0
    %2763 = vmatprep.subr.bf16.mxu0 0
    %2764 = vmatpush1.bf16.msra.mxu0 0
    %2765 = vmatprep.subr.bf16.mxu0 0
    %2766 = vmatpush1.bf16.msra.mxu0 0
    %2767 = vmatprep.subr.bf16.mxu0 0
    %2768 = vmatpush1.bf16.msra.mxu0 0
    %2769 = vmatprep.subr.bf16.mxu0 0
    %2770 = vmatpush1.bf16.msra.mxu0 0
    %2771 = vmatprep.subr.bf16.mxu0 0
    %2772 = vmatpush1.bf16.msra.mxu0 0
    %2773 = vmatprep.subr.bf16.mxu0 0
    %2774 = vmatpush1.bf16.msra.mxu0 0
    %2775 = vmatprep.mubr.bf16.mxu0 0
    %2776 = vmatmul.mubr.bf16.gmra.mrb[0].mxu0 %v2741
    %v2777 = vpop.f32.mrb[0].mxu0
    %v2778 = vadd.f32 %v2714, %v2777
    %v2779 = vpop.f32.mrb[0].mxu0
    %v2780 = vpop.f32.mrb[0].mxu0
    %v2781 = vadd.f32 %v2714, %v2780
    %v2782 = vpop.f32.mrb[0].mxu0
    %2783 = vdwg.mxu0
    %v2784 = vadd.f32 %v2610, %v2778
    %v2785 = vadd.f32 %v2611, %v2781
    %v2786 = vsel %vm54, %v2784, 0.0
    %2787 = vadd.xlane.f32.xlu0 %v2786
    %v2788 = vpop.xlane.xlu0 %2787
    %v2789 = vsel %vm54, %v2785, 0.0
    %2790 = vadd.xlane.f32.xlu0 %v2789
    %v2791 = vpop.xlane.xlu0 %2790
    %v2792 = vmul.f32 %v2788, %v61
    %v2793 = vmul.f32 %v2791, %v61
    %v2794 = vsub.f32 %v2784, %v2792
    %v2795 = vsub.f32 %v2785, %v2793
    %v2796 = vmul.f32 %v2794, %v2794
    %v2797 = vmul.f32 %v2795, %v2795
    %v2798 = vsel %vm54, %v2796, 0.0
    %2799 = vadd.xlane.f32.xlu0 %v2798
    %v2800 = vpop.xlane.xlu0 %2799
    %v2801 = vsel %vm54, %v2797, 0.0
    %2802 = vadd.xlane.f32.xlu0 %v2801
    %v2803 = vpop.xlane.xlu0 %2802
    %v2804 = vmul.f32 %v2800, %v61
    %v2805 = vmul.f32 %v2803, %v61
    %v2806 = vadd.f32 %v2804, 1e-05
    %v2807 = vadd.f32 %v2805, 1e-05
    %v2808 = vrsqrt.pop %v2806
    %v2809 = vrsqrt.pop %v2807
    %v2810 = vmul.f32 %v2794, %v2808
    %v2811 = vmul.f32 %v2795, %v2809
    %v2813 = vlaneseq
    %v2814 = vshrl.u32 %v2813, 7
    %v2815 = vsub.s32 0, %v2814
    %v2816 = vrot.slane %v2557, %v2815
    %v2818 = vmul.f32 %v2810, %v2816
    %v2819 = vmul.f32 %v2811, %v2816
    %v2821 = vlaneseq
    %v2822 = vshrl.u32 %v2821, 7
    %v2823 = vsub.s32 0, %v2822
    %v2824 = vrot.slane %v2559, %v2823
    %v2826 = vadd.f32 %v2818, %v2824
    %v2827 = vadd.f32 %v2819, %v2824
    %v2828 = vlaneseq
    %v2829 = vshrl.u32 %v2828, 7
    %v2830 = vsub.s32 0, %v2829
    %v2831 = vrot.slane %v42, %v2830
    %2833 = vbcast.lane.b32.xlu0 %v2831, 256
    %v2834 = vpop.permute.xlu0 %2833
    %v2835 = vlaneseq
    %v2836 = vshrl.u32 %v2835, 7
    %v2837 = vsub.s32 1, %v2836
    %v2838 = vrot.slane %v42, %v2837
    %2840 = vbcast.lane.b32.xlu0 %v2838, 256
    %v2841 = vpop.permute.xlu0 %2840
    %v2842 = vmul.f32 %v2826, %v2834
    %v2843 = vmul.f32 %v2827, %v2841
    %v2844 = vsel %vm54, %v2842, 0.0
    %v2845 = vrot.slane %v2844, 4
    %v2846 = vadd.f32 %v2844, %v2845
    %v2847 = vrot.slane %v2846, 2
    %v2848 = vadd.f32 %v2846, %v2847
    %v2849 = vrot.slane %v2848, 1
    %v2850 = vadd.f32 %v2848, %v2849
    %v2851 = vsel %vm54, %v2843, 0.0
    %v2852 = vrot.slane %v2851, 4
    %v2853 = vadd.f32 %v2851, %v2852
    %v2854 = vrot.slane %v2853, 2
    %v2855 = vadd.f32 %v2853, %v2854
    %v2856 = vrot.slane %v2855, 1
    %v2857 = vadd.f32 %v2855, %v2856
    %vm2858 = vcmask 58368
    %v2859 = vsel %vm2858, %v42, 0.0
    %2860 = vadd.xlane.f32.xlu0 %v2859
    %v2861 = vpop.xlane.xlu0 %2860
    %v2862 = vmax.f32 %v2861, 1e-09
    %v2864 = vrot.slane %v2862, 1
    %v2867 = vrcp.pop %v2862
    %v2868 = vmul.f32 %v2850, %v2867
    %v2869 = vrcp.pop %v2864
    %v2870 = vmul.f32 %v2857, %v2869
    %v2873 = vrot.slane %v2870, 7
    %vm2874 = vcmask 1041409
    %v2875 = vsel %vm2874, %v2873, %v2868
    %vm2877 = vcmask 254976
    %2878 = vst.msk [vmem:[#allocation2] sm:$0x3] %vm2877, %v2875
    // Predicated region
    $region46: #{kobart_encode_text.1} parent=1 // pred_check
      _
    $region47: #{kobart_encode_text.1} parent=1 // pred_check_branch
      %2880 = sbr.rel (0) target = $region49
    $region48: #{kobart_encode_text.1} parent=1 // pred_region
      %s2882 = ssub.s32 32, 32
      %2883 = vsyncadd [#allocation3], %s2882
      %s2885 = sshll.u32 [#allocation2], 4
      %s2886 = int_to_ptr.vmem [resolvable:$true] %s2885
      %2888 = dma.vmem_to_hbm [thread:$0]  %s2886, 32, %s11, [#allocation3]
    $region49: #{kobart_encode_text.1} parent=1 // pred_fallthru
      _
    // Predicated region
    $region50: #{kobart_encode_text.1} parent=1 // pred_check
      _
    $region51: #{kobart_encode_text.1} parent=1 // pred_check_branch
      %2890 = sbr.rel (0) target = $region53
    $region52: #{kobart_encode_text.1} parent=1 // pred_region
      %2891 = dma.done [#allocation3], 32
    $region53: #{kobart_encode_text.1} parent=1 // pred_fallthru
      _
    %2892 = vsyncpa [#allocation3], 1

</llo_original>
